<compile_context>
chip_gen: v5e
topology: v5e:2x2
jax: 0.10.0
libtpu: 0.0.40
codegen_flags: <defaults>
</compile_context>

<pallas_src>
import functools
import math

import jax
import jax.numpy as jnp
from jax.experimental import pallas as pl
from jax.experimental.pallas import tpu as pltpu


# ----------------------------- Pallas kernels ------------------------------


def _embed_ln_kernel(word_ref, pos_ref, tok_ref, g_ref, b_ref, o_ref, *, eps):
    """o = layernorm(word + pos + tok) -> bf16.  One batch element per step."""
    x = word_ref[0] + pos_ref[...] + tok_ref[...]            # (S, H) f32
    mean = jnp.mean(x, axis=-1, keepdims=True)
    var = jnp.mean((x - mean) * (x - mean), axis=-1, keepdims=True)
    y = (x - mean) * jax.lax.rsqrt(var + eps) * g_ref[...] + b_ref[...]
    o_ref[0] = y.astype(o_ref.dtype)


def _fused_attention_kernel(x_ref, m_ref, wq_ref, wk_ref, wv_ref,
                            bq_ref, bk_ref, bv_ref, wo_ref, bo_ref,
                            g_ref, be_ref, o_ref, *, num_heads, eps):
    """Whole BERT self-attention block for one batch element:

        o = layernorm( x + attn(x) @ Wo + bo )
        attn = softmax(Q K^T * 1/sqrt(Dh) + mask) V   (scale pre-folded into Q)

    Per-head weight slabs -> no lane-misaligned column slices and no head
    concatenate; each head's context is matmul'd against its own (Dh, H)
    output-projection slab and accumulated into a full-width f32 accumulator.
    """
    xb = x_ref[0]                                             # (S, H) bf16
    x_f32 = xb.astype(jnp.float32)                            # residual
    s_len, hidden = xb.shape
    # hoist the (1, S) -> (S, S) mask broadcast out of the per-head loop
    mask_full = jnp.broadcast_to(m_ref[0], (s_len, s_len))    # (S, S) f32

    acc = jnp.zeros((s_len, hidden), jnp.float32)
    for h in range(num_heads):
        q = jnp.dot(xb, wq_ref[h], preferred_element_type=jnp.float32) + bq_ref[h]
        k = jnp.dot(xb, wk_ref[h], preferred_element_type=jnp.float32) + bk_ref[h]
        v = jnp.dot(xb, wv_ref[h], preferred_element_type=jnp.float32) + bv_ref[h]
        s = jax.lax.dot_general(q.astype(jnp.bfloat16), k.astype(jnp.bfloat16),
                                (((1,), (1,)), ((), ())),
                                preferred_element_type=jnp.float32)       # (S, S)
        s = s + mask_full
        s = s - jnp.max(s, axis=-1, keepdims=True)
        p = jnp.exp(s)
        # approx reciprocal: small relative error in attn probs (inference ok)
        p = p * pl.reciprocal(jnp.sum(p, axis=-1, keepdims=True), approx=True)
        ctx = jnp.dot(p.astype(jnp.bfloat16), v.astype(jnp.bfloat16),
                      preferred_element_type=jnp.float32)                 # (S, Dh)
        acc = acc + jnp.dot(ctx.astype(jnp.bfloat16), wo_ref[h],
                            preferred_element_type=jnp.float32)           # (S, H)

    y = acc + bo_ref[...] + x_f32
    mean = jnp.mean(y, axis=-1, keepdims=True)
    var = jnp.mean((y - mean) * (y - mean), axis=-1, keepdims=True)
    y = (y - mean) * jax.lax.rsqrt(var + eps) * g_ref[...] + be_ref[...]
    o_ref[0] = y.astype(o_ref.dtype)


def _ffn_ln_kernel(x_ref, w1_ref, b1_ref, w2_ref, b2_ref, g_ref, be_ref, o_ref, *, eps):
    """o = layernorm(gelu(x @ W1 + b1) @ W2 + b2 + x) -> bf16 store."""
    x = x_ref[...]                                            # (bm, H) bf16
    h = jnp.dot(x, w1_ref[...], preferred_element_type=jnp.float32) + b1_ref[...]
    # TODO(synk): HF 'gelu' is erf-based; tanh-approx GELU used in-kernel
    # (element error ~1e-3) to stay on ops with guaranteed Mosaic lowerings.
    c = math.sqrt(2.0 / math.pi)
    h = 0.5 * h * (1.0 + jnp.tanh(c * (h + 0.044715 * h * h * h)))
    y = jnp.dot(h.astype(jnp.bfloat16), w2_ref[...],
                preferred_element_type=jnp.float32) + b2_ref[...]
    y = y + x.astype(jnp.float32)
    mean = jnp.mean(y, axis=-1, keepdims=True)
    var = jnp.mean((y - mean) * (y - mean), axis=-1, keepdims=True)
    y = (y - mean) * jax.lax.rsqrt(var + eps) * g_ref[...] + be_ref[...]
    o_ref[...] = y.astype(o_ref.dtype)


def _pooler_head_kernel(cls_ref, wp_ref, bp_ref, wo_ref, bo_ref, o_ref):
    """pooled = tanh(cls @ Wp + bp); logits_pad = pooled @ Wo_pad + bo_pad.

    Dropout(0.3) before the head is identity (eval).  Head weight is
    zero-padded to 128 output lanes so the store is a full unmasked vst.
    """
    x = cls_ref[...]                                          # (B, H) bf16
    pooled = jnp.tanh(jnp.dot(x, wp_ref[...],
                              preferred_element_type=jnp.float32) + bp_ref[...])
    o_ref[...] = jnp.dot(pooled, wo_ref[...],
                         preferred_element_type=jnp.float32) + bo_ref[...]


# ------------------------------- wrappers -----------------------------------


def _block_rows(m, target):
    """Largest row tile <= target that divides m and is a multiple of 8."""
    if m <= target:
        return m
    assert m % 8 == 0, "row dimension must be a multiple of 8 to tile"
    bm = target - (target % 8)
    while bm >= 8:
        if m % bm == 0:
            return bm
        bm -= 8
    return m


def _row_gridded_call(kernel, *, m, n_out, out_dtype, row_inputs, shared_inputs,
                      target_rows=512):
    """pallas_call gridded over rows (M = B*S).

    row_inputs stream as (bm, K_i) tiles (double-buffered by Pallas);
    shared_inputs (weights / biases / LN params) map to block (0, 0) every
    grid step and stay resident in VMEM.

    target_rows=512 is sized for v5e/v6e (~85% of HBM roofline); keep 256 on
    v7x (64 MiB VMEM).
    """
    bm = _block_rows(m, target_rows)
    grid = (m // bm,)
    in_specs = (
        [pl.BlockSpec((bm, a.shape[1]), lambda i: (i, 0)) for a in row_inputs]
        + [pl.BlockSpec(a.shape, lambda i: (0, 0)) for a in shared_inputs]
    )
    # TODO(synk): at real BERT shapes (H=768, FF=3072) single-buffer the
    # constant weight blocks (pipeline_mode=pl.Buffered(1)) and set
    # vmem_limit_bytes per generation (v5e's scoped default is 16 MiB).
    return pl.pallas_call(
        kernel,
        out_shape=jax.ShapeDtypeStruct((m, n_out), out_dtype),
        grid=grid,
        in_specs=in_specs,
        out_specs=pl.BlockSpec((bm, n_out), lambda i: (i, 0)),
        compiler_params=pltpu.CompilerParams(
            dimension_semantics=("parallel",)),
    )(*row_inputs, *shared_inputs)


def attention_block(x, mask_bias, lp, num_heads, eps):
    """Fused QKV + multi-head attention + out-proj + residual + LN.

    x: (B, S, H) bf16; mask_bias: (B, 1, S) f32 additive key-mask bias.
    TODO(synk): on v7x (2 TensorCores) grid over (B, q_tiles) for better
    parallel balance at small/odd B and long S.
    """
    b, s, h = x.shape

    def _resident(a):
        return pl.BlockSpec(a.shape, lambda i, _nd=a.ndim: (0,) * _nd)

    kern = functools.partial(_fused_attention_kernel, num_heads=num_heads, eps=eps)
    return pl.pallas_call(
        kern,
        out_shape=jax.ShapeDtypeStruct((b, s, h), jnp.bfloat16),
        grid=(b,),
        in_specs=[
            pl.BlockSpec((1, s, h), lambda i: (i, 0, 0)),
            pl.BlockSpec((1, 1, s), lambda i: (i, 0, 0)),
            _resident(lp["wq"]), _resident(lp["wk"]), _resident(lp["wv"]),
            _resident(lp["bq"]), _resident(lp["bk"]), _resident(lp["bv"]),
            _resident(lp["wo"]), _resident(lp["bo"]),
            _resident(lp["ln_g"]), _resident(lp["ln_b"]),
        ],
        out_specs=pl.BlockSpec((1, s, h), lambda i: (i, 0, 0)),
        compiler_params=pltpu.CompilerParams(dimension_semantics=("parallel",)),
    )(x, mask_bias, lp["wq"], lp["wk"], lp["wv"],
      lp["bq"], lp["bk"], lp["bv"], lp["wo"], lp["bo"],
      lp["ln_g"], lp["ln_b"])


# ------------------------------ model config --------------------------------

CFG = dict(
    vocab_size=512,
    hidden_size=128,
    num_hidden_layers=2,
    num_attention_heads=4,
    intermediate_size=256,
    max_position_embeddings=64,
    type_vocab_size=2,
    layer_norm_eps=1e-12,
    n_classes=3,
)


def init_params(key, cfg):
    std = 0.02
    h, ff = cfg["hidden_size"], cfg["intermediate_size"]
    nh = cfg["num_attention_heads"]
    dh = h // nh
    scale = 1.0 / math.sqrt(dh)
    assert cfg["n_classes"] <= 128

    n_keys = 5 + 6 * cfg["num_hidden_layers"]
    keys = iter(jax.random.split(key, n_keys))

    def dense(k, fi, fo, dtype=jnp.bfloat16):
        return (jax.random.normal(k, (fi, fo), jnp.float32) * std).astype(dtype)

    params = {
        "word_emb": jax.random.normal(next(keys), (cfg["vocab_size"], h), jnp.float32) * std,
        "pos_emb": jax.random.normal(next(keys), (cfg["max_position_embeddings"], h), jnp.float32) * std,
        "type_emb": jax.random.normal(next(keys), (cfg["type_vocab_size"], h), jnp.float32) * std,
        "emb_ln_g": jnp.ones((1, h), jnp.float32),
        "emb_ln_b": jnp.zeros((1, h), jnp.float32),
        "layers": [],
        "pooler_w": dense(next(keys), h, h),                       # bf16
        "pooler_b": jnp.zeros((1, h), jnp.float32),
    }
    # classifier head zero-padded to 128 output lanes (lane-dense store)
    out_w = jax.random.normal(next(keys), (h, cfg["n_classes"]), jnp.float32) * std
    params["out_w_pad"] = jnp.zeros((h, 128), jnp.float32).at[:, :cfg["n_classes"]].set(out_w)
    params["out_b_pad"] = jnp.zeros((1, 128), jnp.float32)

    for _ in range(cfg["num_hidden_layers"]):
        kq, kk, kv, ko, k1, k2 = (next(keys) for _ in range(6))
        wq = jax.random.normal(kq, (h, h), jnp.float32) * std
        wk = jax.random.normal(kk, (h, h), jnp.float32) * std
        wv = jax.random.normal(kv, (h, h), jnp.float32) * std
        wo = jax.random.normal(ko, (h, h), jnp.float32) * std
        layer = {
            # per-head slabs; 1/sqrt(Dh) folded into the Q weight AND Q bias
            "wq": (wq * scale).reshape(h, nh, dh).transpose(1, 0, 2).astype(jnp.bfloat16),
            "wk": wk.reshape(h, nh, dh).transpose(1, 0, 2).astype(jnp.bfloat16),
            "wv": wv.reshape(h, nh, dh).transpose(1, 0, 2).astype(jnp.bfloat16),
            "bq": jnp.zeros((nh, 1, dh), jnp.float32) * scale,     # scale fold (zeros here)
            "bk": jnp.zeros((nh, 1, dh), jnp.float32),
            "bv": jnp.zeros((nh, 1, dh), jnp.float32),
            "wo": wo.reshape(nh, dh, h).astype(jnp.bfloat16),
            "bo": jnp.zeros((1, h), jnp.float32),
            "ln_g": jnp.ones((1, h), jnp.float32),
            "ln_b": jnp.zeros((1, h), jnp.float32),
            "ffn_in_w": dense(k1, h, ff),
            "ffn_in_b": jnp.zeros((1, ff), jnp.float32),
            "ffn_out_w": dense(k2, ff, h),
            "ffn_out_b": jnp.zeros((1, h), jnp.float32),
            "ffn_ln_g": jnp.ones((1, h), jnp.float32),
            "ffn_ln_b": jnp.zeros((1, h), jnp.float32),
        }
        params["layers"].append(layer)
    return params


# ------------------------------ forward pass ---------------------------------


def sentiment_classifier_forward(params, input_ids, attention_mask, cfg=CFG):
    B, S = input_ids.shape
    H = cfg["hidden_size"]
    NH = cfg["num_attention_heads"]
    eps = cfg["layer_norm_eps"]

    # --- embeddings: gather (XLA glue) + fused add+layernorm Pallas kernel ---
    word = jnp.take(params["word_emb"], input_ids, axis=0)          # (B, S, H) f32
    pos = params["pos_emb"][:S]                                     # (S, H)
    tok = params["type_emb"][0].reshape(1, H)                       # (1, H)  token_type_ids == 0
    x = pl.pallas_call(
        functools.partial(_embed_ln_kernel, eps=eps),
        out_shape=jax.ShapeDtypeStruct((B, S, H), jnp.bfloat16),
        grid=(B,),
        in_specs=[
            pl.BlockSpec((1, S, H), lambda i: (i, 0, 0)),
            pl.BlockSpec((S, H), lambda i: (0, 0)),
            pl.BlockSpec((1, H), lambda i: (0, 0)),
            pl.BlockSpec((1, H), lambda i: (0, 0)),
            pl.BlockSpec((1, H), lambda i: (0, 0)),
        ],
        out_specs=pl.BlockSpec((1, S, H), lambda i: (i, 0, 0)),
        compiler_params=pltpu.CompilerParams(dimension_semantics=("parallel",)),
    )(word, pos, tok, params["emb_ln_g"], params["emb_ln_b"])
    # hidden dropout (p=0.1) -> identity in eval mode

    # extended attention mask: (1 - mask) * -10000 additive bias, f32
    mask_bias = ((1.0 - attention_mask.astype(jnp.float32)) * -10000.0).reshape(B, 1, S)

    # --- encoder layers: 2 Pallas kernels per layer ---
    for lp in params["layers"]:
        # 1) fused QKV + attention + out-proj + residual + LN  (bf16 out)
        x = attention_block(x, mask_bias, lp, NH, eps)              # (B, S, H)
        # 2) FFN (W1 -> gelu -> W2) + residual + LN              (bf16 out)
        x = _row_gridded_call(
            functools.partial(_ffn_ln_kernel, eps=eps),
            m=B * S, n_out=H, out_dtype=jnp.bfloat16,
            row_inputs=[x.reshape(B * S, H)],
            shared_inputs=[lp["ffn_in_w"], lp["ffn_in_b"],
                           lp["ffn_out_w"], lp["ffn_out_b"],
                           lp["ffn_ln_g"], lp["ffn_ln_b"]],
        ).reshape(B, S, H)

    # --- pooler (Linear + tanh on [CLS]) fused with Dropout(0.3)+Linear head ---
    cls = x[:, 0, :]                                                # (B, H) bf16
    logits_pad = pl.pallas_call(
        _pooler_head_kernel,
        out_shape=jax.ShapeDtypeStruct((B, 128), jnp.float32),
    )(cls, params["pooler_w"], params["pooler_b"],
      params["out_w_pad"], params["out_b_pad"])
    return logits_pad[:, :cfg["n_classes"]]                         # (B, n_classes)


# ---------------------------------- main -------------------------------------

if __name__ == "__main__":
    key = jax.random.PRNGKey(0)
    pkey, ikey, mkey = jax.random.split(key, 3)

    B, S = 2, 8
    params = init_params(pkey, CFG)
    input_ids = jax.random.randint(ikey, (B, S), 0, CFG["vocab_size"], dtype=jnp.int32)
    # mask: first few tokens valid, rest padding (deterministic pattern)
    attention_mask = (jnp.arange(S)[None, :] < jnp.array([[8], [5]])).astype(jnp.int32)

    logits = jax.jit(sentiment_classifier_forward)(params, input_ids, attention_mask)
    jax.block_until_ready(logits)
    assert logits.shape == (B, CFG["n_classes"])
    print("KERNEL_OK")
</pallas_src>

<mosaic_0001>
module attributes {stable_mosaic.version = 11 : i64} {
  func.func @_embed_ln_kernel(%arg0: i32, %arg1: memref<1x8x128xf32, #tpu.memory_space<vmem>>, %arg2: memref<8x128xf32, #tpu.memory_space<vmem>>, %arg3: memref<1x128xf32, #tpu.memory_space<vmem>>, %arg4: memref<1x128xf32, #tpu.memory_space<vmem>>, %arg5: memref<1x128xf32, #tpu.memory_space<vmem>>, %arg6: memref<1x8x128xbf16, #tpu.memory_space<vmem>>) attributes {dimension_semantics = [#tpu.dimension_semantics<parallel>], iteration_bounds = array<i64: 2>, scalar_prefetch = 0 : i64, scratch_operands = 0 : i64, tpu.core_type = #tpu.core_type<tc>, window_params = [{transform_indices = @transform_0, window_bounds = array<i64: 1, 8, 128>}, {pipeline_mode = #tpu.pipeline_mode<synchronous>, transform_indices = @transform_1, window_bounds = array<i64: 8, 128>}, {pipeline_mode = #tpu.pipeline_mode<synchronous>, transform_indices = @transform_2, window_bounds = array<i64: 1, 128>}, {pipeline_mode = #tpu.pipeline_mode<synchronous>, transform_indices = @transform_3, window_bounds = array<i64: 1, 128>}, {pipeline_mode = #tpu.pipeline_mode<synchronous>, transform_indices = @transform_4, window_bounds = array<i64: 1, 128>}, {transform_indices = @transform_5, window_bounds = array<i64: 1, 8, 128>}]} {
    %c0 = arith.constant 0 : index
    %c0_0 = arith.constant 0 : index
    %c0_1 = arith.constant 0 : index
    %0 = vector.load %arg1[%c0, %c0_0, %c0_1] : memref<1x8x128xf32, #tpu.memory_space<vmem>>, vector<1x8x128xf32>
    %1 = vector.shape_cast %0 : vector<1x8x128xf32> to vector<8x128xf32>
    %c0_2 = arith.constant 0 : index
    %c0_3 = arith.constant 0 : index
    %2 = vector.load %arg2[%c0_2, %c0_3] : memref<8x128xf32, #tpu.memory_space<vmem>>, vector<8x128xf32>
    %3 = arith.addf %1, %2 : vector<8x128xf32>
    %c0_4 = arith.constant 0 : index
    %c0_5 = arith.constant 0 : index
    %4 = vector.load %arg3[%c0_4, %c0_5] : memref<1x128xf32, #tpu.memory_space<vmem>>, vector<1x128xf32>
    %5 = vector.broadcast %4 : vector<1x128xf32> to vector<8x128xf32>
    %6 = arith.addf %3, %5 : vector<8x128xf32>
    %cst = arith.constant dense<0.000000e+00> : vector<8xf32>
    %7 = vector.multi_reduction <add>, %6, %cst [1] : vector<8x128xf32> to vector<8xf32>
    %8 = vector.shape_cast %7 : vector<8xf32> to vector<8x1xf32>
    %cst_6 = arith.constant 1.280000e+02 : f32
    %9 = vector.broadcast %cst_6 : f32 to vector<8x1xf32>
    %10 = arith.divf %8, %9 : vector<8x1xf32>
    %11 = vector.broadcast %10 : vector<8x1xf32> to vector<8x128xf32>
    %12 = arith.subf %6, %11 : vector<8x128xf32>
    %13 = vector.broadcast %10 : vector<8x1xf32> to vector<8x128xf32>
    %14 = arith.subf %6, %13 : vector<8x128xf32>
    %15 = arith.mulf %12, %14 : vector<8x128xf32>
    %cst_7 = arith.constant dense<0.000000e+00> : vector<8xf32>
    %16 = vector.multi_reduction <add>, %15, %cst_7 [1] : vector<8x128xf32> to vector<8xf32>
    %17 = vector.shape_cast %16 : vector<8xf32> to vector<8x1xf32>
    %cst_8 = arith.constant 1.280000e+02 : f32
    %18 = vector.broadcast %cst_8 : f32 to vector<8x1xf32>
    %19 = arith.divf %17, %18 : vector<8x1xf32>
    %20 = vector.broadcast %10 : vector<8x1xf32> to vector<8x128xf32>
    %21 = arith.subf %6, %20 : vector<8x128xf32>
    %cst_9 = arith.constant 9.99999996E-13 : f32
    %22 = vector.broadcast %cst_9 : f32 to vector<8x1xf32>
    %23 = arith.addf %19, %22 : vector<8x1xf32>
    %24 = math.rsqrt %23 : vector<8x1xf32>
    %25 = vector.broadcast %24 : vector<8x1xf32> to vector<8x128xf32>
    %26 = arith.mulf %21, %25 : vector<8x128xf32>
    %c0_10 = arith.constant 0 : index
    %c0_11 = arith.constant 0 : index
    %27 = vector.load %arg4[%c0_10, %c0_11] : memref<1x128xf32, #tpu.memory_space<vmem>>, vector<1x128xf32>
    %28 = vector.broadcast %27 : vector<1x128xf32> to vector<8x128xf32>
    %29 = arith.mulf %26, %28 : vector<8x128xf32>
    %c0_12 = arith.constant 0 : index
    %c0_13 = arith.constant 0 : index
    %30 = vector.load %arg5[%c0_12, %c0_13] : memref<1x128xf32, #tpu.memory_space<vmem>>, vector<1x128xf32>
    %31 = vector.broadcast %30 : vector<1x128xf32> to vector<8x128xf32>
    %32 = arith.addf %29, %31 : vector<8x128xf32>
    %33 = arith.truncf %32 : vector<8x128xf32> to vector<8x128xbf16>
    %c0_14 = arith.constant 0 : index
    %c0_15 = arith.constant 0 : index
    %c0_16 = arith.constant 0 : index
    %34 = vector.load %arg6[%c0_14, %c0_15, %c0_16] : memref<1x8x128xbf16, #tpu.memory_space<vmem>>, vector<1x8x128xbf16>
    %35 = vector.shape_cast %34 : vector<1x8x128xbf16> to vector<8x128xbf16>
    %36 = vector.shape_cast %33 : vector<8x128xbf16> to vector<1x8x128xbf16>
    tpu.vector_store %arg6[%c0_14, %c0_15, %c0_16], %36 {strides = array<i32>} : memref<1x8x128xbf16, #tpu.memory_space<vmem>>, vector<1x8x128xbf16>,
    return
  }
  func.func @transform_0(%arg0: i32) -> (i32, i32, i32) {
    %c0_i32 = arith.constant 0 : i32
    %c0_i32_0 = arith.constant 0 : i32
    %c0_i32_1 = arith.constant 0 : i32
    return %arg0, %c0_i32, %c0_i32_0 : i32, i32, i32
  }
  func.func @transform_1(%arg0: i32) -> (i32, i32) {
    %c0_i32 = arith.constant 0 : i32
    %c0_i32_0 = arith.constant 0 : i32
    %c0_i32_1 = arith.constant 0 : i32
    return %c0_i32, %c0_i32_0 : i32, i32
  }
  func.func @transform_2(%arg0: i32) -> (i32, i32) {
    %c0_i32 = arith.constant 0 : i32
    %c0_i32_0 = arith.constant 0 : i32
    %c0_i32_1 = arith.constant 0 : i32
    return %c0_i32, %c0_i32_0 : i32, i32
  }
  func.func @transform_3(%arg0: i32) -> (i32, i32) {
    %c0_i32 = arith.constant 0 : i32
    %c0_i32_0 = arith.constant 0 : i32
    %c0_i32_1 = arith.constant 0 : i32
    return %c0_i32, %c0_i32_0 : i32, i32
  }
  func.func @transform_4(%arg0: i32) -> (i32, i32) {
    %c0_i32 = arith.constant 0 : i32
    %c0_i32_0 = arith.constant 0 : i32
    %c0_i32_1 = arith.constant 0 : i32
    return %c0_i32, %c0_i32_0 : i32, i32
  }
  func.func @transform_5(%arg0: i32) -> (i32, i32, i32) {
    %c0_i32 = arith.constant 0 : i32
    %c0_i32_0 = arith.constant 0 : i32
    %c0_i32_1 = arith.constant 0 : i32
    return %arg0, %c0_i32, %c0_i32_0 : i32, i32, i32
  }
}

module attributes {stable_mosaic.version = 11 : i64} {
  func.func @_fused_attention_kernel(%arg0: i32, %arg1: memref<1x8x128xbf16, #tpu.memory_space<vmem>>, %arg2: memref<1x1x8xf32, #tpu.memory_space<vmem>>, %arg3: memref<4x128x32xbf16, #tpu.memory_space<vmem>>, %arg4: memref<4x128x32xbf16, #tpu.memory_space<vmem>>, %arg5: memref<4x128x32xbf16, #tpu.memory_space<vmem>>, %arg6: memref<4x1x32xf32, #tpu.memory_space<vmem>>, %arg7: memref<4x1x32xf32, #tpu.memory_space<vmem>>, %arg8: memref<4x1x32xf32, #tpu.memory_space<vmem>>, %arg9: memref<4x32x128xbf16, #tpu.memory_space<vmem>>, %arg10: memref<1x128xf32, #tpu.memory_space<vmem>>, %arg11: memref<1x128xf32, #tpu.memory_space<vmem>>, %arg12: memref<1x128xf32, #tpu.memory_space<vmem>>, %arg13: memref<1x8x128xbf16, #tpu.memory_space<vmem>>) attributes {dimension_semantics = [#tpu.dimension_semantics<parallel>], iteration_bounds = array<i64: 2>, scalar_prefetch = 0 : i64, scratch_operands = 0 : i64, tpu.core_type = #tpu.core_type<tc>, window_params = [{transform_indices = @transform_0, window_bounds = array<i64: 1, 8, 128>}, {transform_indices = @transform_1, window_bounds = array<i64: 1, 1, 8>}, {pipeline_mode = #tpu.pipeline_mode<synchronous>, transform_indices = @transform_2, window_bounds = array<i64: 4, 128, 32>}, {pipeline_mode = #tpu.pipeline_mode<synchronous>, transform_indices = @transform_3, window_bounds = array<i64: 4, 128, 32>}, {pipeline_mode = #tpu.pipeline_mode<synchronous>, transform_indices = @transform_4, window_bounds = array<i64: 4, 128, 32>}, {pipeline_mode = #tpu.pipeline_mode<synchronous>, transform_indices = @transform_5, window_bounds = array<i64: 4, 1, 32>}, {pipeline_mode = #tpu.pipeline_mode<synchronous>, transform_indices = @transform_6, window_bounds = array<i64: 4, 1, 32>}, {pipeline_mode = #tpu.pipeline_mode<synchronous>, transform_indices = @transform_7, window_bounds = array<i64: 4, 1, 32>}, {pipeline_mode = #tpu.pipeline_mode<synchronous>, transform_indices = @transform_8, window_bounds = array<i64: 4, 32, 128>}, {pipeline_mode = #tpu.pipeline_mode<synchronous>, transform_indices = @transform_9, window_bounds = array<i64: 1, 128>}, {pipeline_mode = #tpu.pipeline_mode<synchronous>, transform_indices = @transform_10, window_bounds = array<i64: 1, 128>}, {pipeline_mode = #tpu.pipeline_mode<synchronous>, transform_indices = @transform_11, window_bounds = array<i64: 1, 128>}, {transform_indices = @transform_12, window_bounds = array<i64: 1, 8, 128>}]} {
    %c0 = arith.constant 0 : index
    %c0_0 = arith.constant 0 : index
    %c0_1 = arith.constant 0 : index
    %0 = vector.load %arg1[%c0, %c0_0, %c0_1] : memref<1x8x128xbf16, #tpu.memory_space<vmem>>, vector<1x8x128xbf16>
    %1 = vector.shape_cast %0 : vector<1x8x128xbf16> to vector<8x128xbf16>
    %2 = arith.extf %1 : vector<8x128xbf16> to vector<8x128xf32>
    %c0_2 = arith.constant 0 : index
    %c0_3 = arith.constant 0 : index
    %c0_4 = arith.constant 0 : index
    %3 = vector.load %arg2[%c0_2, %c0_3, %c0_4] : memref<1x1x8xf32, #tpu.memory_space<vmem>>, vector<1x1x8xf32>
    %4 = vector.shape_cast %3 : vector<1x1x8xf32> to vector<1x8xf32>
    %5 = vector.shape_cast %4 : vector<1x8xf32> to vector<1x8xf32>
    %6 = vector.broadcast %5 : vector<1x8xf32> to vector<8x8xf32>
    %cst = arith.constant 0.000000e+00 : f32
    %7 = vector.broadcast %cst : f32 to vector<8x128xf32>
    %c0_5 = arith.constant 0 : index
    %c0_6 = arith.constant 0 : index
    %c0_7 = arith.constant 0 : index
    %8 = vector.load %arg3[%c0_5, %c0_6, %c0_7] : memref<4x128x32xbf16, #tpu.memory_space<vmem>>, vector<1x128x32xbf16>
    %9 = vector.shape_cast %8 : vector<1x128x32xbf16> to vector<128x32xbf16>
    %cst_8 = arith.constant dense<0.000000e+00> : vector<8x32xf32>
    %10 = tpu.matmul %1, %9, %cst_8 {dimension_numbers = #tpu.dot_dimension_numbers<[1], [0], [0], [1], [0, 0, 1, 1], [], []>} : vector<8x128xbf16>, vector<128x32xbf16>, vector<8x32xf32> -> vector<8x32xf32>
    %c0_9 = arith.constant 0 : index
    %c0_10 = arith.constant 0 : index
    %c0_11 = arith.constant 0 : index
    %11 = vector.load %arg6[%c0_9, %c0_10, %c0_11] : memref<4x1x32xf32, #tpu.memory_space<vmem>>, vector<1x1x32xf32>
    %12 = vector.shape_cast %11 : vector<1x1x32xf32> to vector<1x32xf32>
    %13 = vector.broadcast %12 : vector<1x32xf32> to vector<8x32xf32>
    %14 = arith.addf %10, %13 : vector<8x32xf32>
    %c0_12 = arith.constant 0 : index
    %c0_13 = arith.constant 0 : index
    %c0_14 = arith.constant 0 : index
    %15 = vector.load %arg4[%c0_12, %c0_13, %c0_14] : memref<4x128x32xbf16, #tpu.memory_space<vmem>>, vector<1x128x32xbf16>
    %16 = vector.shape_cast %15 : vector<1x128x32xbf16> to vector<128x32xbf16>
    %cst_15 = arith.constant dense<0.000000e+00> : vector<8x32xf32>
    %17 = tpu.matmul %1, %16, %cst_15 {dimension_numbers = #tpu.dot_dimension_numbers<[1], [0], [0], [1], [0, 0, 1, 1], [], []>} : vector<8x128xbf16>, vector<128x32xbf16>, vector<8x32xf32> -> vector<8x32xf32>
    %c0_16 = arith.constant 0 : index
    %c0_17 = arith.constant 0 : index
    %c0_18 = arith.constant 0 : index
    %18 = vector.load %arg7[%c0_16, %c0_17, %c0_18] : memref<4x1x32xf32, #tpu.memory_space<vmem>>, vector<1x1x32xf32>
    %19 = vector.shape_cast %18 : vector<1x1x32xf32> to vector<1x32xf32>
    %20 = vector.broadcast %19 : vector<1x32xf32> to vector<8x32xf32>
    %21 = arith.addf %17, %20 : vector<8x32xf32>
    %c0_19 = arith.constant 0 : index
    %c0_20 = arith.constant 0 : index
    %c0_21 = arith.constant 0 : index
    %22 = vector.load %arg5[%c0_19, %c0_20, %c0_21] : memref<4x128x32xbf16, #tpu.memory_space<vmem>>, vector<1x128x32xbf16>
    %23 = vector.shape_cast %22 : vector<1x128x32xbf16> to vector<128x32xbf16>
    %cst_22 = arith.constant dense<0.000000e+00> : vector<8x32xf32>
    %24 = tpu.matmul %1, %23, %cst_22 {dimension_numbers = #tpu.dot_dimension_numbers<[1], [0], [0], [1], [0, 0, 1, 1], [], []>} : vector<8x128xbf16>, vector<128x32xbf16>, vector<8x32xf32> -> vector<8x32xf32>
    %c0_23 = arith.constant 0 : index
    %c0_24 = arith.constant 0 : index
    %c0_25 = arith.constant 0 : index
    %25 = vector.load %arg8[%c0_23, %c0_24, %c0_25] : memref<4x1x32xf32, #tpu.memory_space<vmem>>, vector<1x1x32xf32>
    %26 = vector.shape_cast %25 : vector<1x1x32xf32> to vector<1x32xf32>
    %27 = vector.broadcast %26 : vector<1x32xf32> to vector<8x32xf32>
    %28 = arith.addf %24, %27 : vector<8x32xf32>
    %29 = arith.truncf %14 : vector<8x32xf32> to vector<8x32xbf16>
    %30 = arith.truncf %21 : vector<8x32xf32> to vector<8x32xbf16>
    %cst_26 = arith.constant dense<0.000000e+00> : vector<8x8xf32>
    %31 = tpu.matmul %29, %30, %cst_26 {dimension_numbers = #tpu.dot_dimension_numbers<[1], [1], [0], [0], [0, 0, 1, 0], [], []>} : vector<8x32xbf16>, vector<8x32xbf16>, vector<8x8xf32> -> vector<8x8xf32>
    %32 = arith.addf %31, %6 : vector<8x8xf32>
    %cst_27 = arith.constant dense<0xFF800000> : vector<8xf32>
    %33 = vector.multi_reduction <maximumf>, %32, %cst_27 [1] : vector<8x8xf32> to vector<8xf32>
    %34 = vector.shape_cast %33 : vector<8xf32> to vector<8x1xf32>
    %35 = vector.broadcast %34 : vector<8x1xf32> to vector<8x8xf32>
    %36 = arith.subf %32, %35 : vector<8x8xf32>
    %37 = math.exp %36 : vector<8x8xf32>
    %cst_28 = arith.constant dense<0.000000e+00> : vector<8xf32>
    %38 = vector.multi_reduction <add>, %37, %cst_28 [1] : vector<8x8xf32> to vector<8xf32>
    %39 = vector.shape_cast %38 : vector<8xf32> to vector<8x1xf32>
    %40 = tpu.reciprocal %39 {approx = true} : vector<8x1xf32> -> vector<8x1xf32>
    %41 = vector.broadcast %40 : vector<8x1xf32> to vector<8x8xf32>
    %42 = arith.mulf %37, %41 : vector<8x8xf32>
    %43 = arith.truncf %42 : vector<8x8xf32> to vector<8x8xbf16>
    %44 = arith.truncf %28 : vector<8x32xf32> to vector<8x32xbf16>
    %cst_29 = arith.constant dense<0.000000e+00> : vector<8x32xf32>
    %45 = tpu.matmul %43, %44, %cst_29 {dimension_numbers = #tpu.dot_dimension_numbers<[1], [0], [0], [1], [0, 0, 1, 1], [], []>} : vector<8x8xbf16>, vector<8x32xbf16>, vector<8x32xf32> -> vector<8x32xf32>
    %46 = arith.truncf %45 : vector<8x32xf32> to vector<8x32xbf16>
    %c0_30 = arith.constant 0 : index
    %c0_31 = arith.constant 0 : index
    %c0_32 = arith.constant 0 : index
    %47 = vector.load %arg9[%c0_30, %c0_31, %c0_32] : memref<4x32x128xbf16, #tpu.memory_space<vmem>>, vector<1x32x128xbf16>
    %48 = vector.shape_cast %47 : vector<1x32x128xbf16> to vector<32x128xbf16>
    %cst_33 = arith.constant dense<0.000000e+00> : vector<8x128xf32>
    %49 = tpu.matmul %46, %48, %cst_33 {dimension_numbers = #tpu.dot_dimension_numbers<[1], [0], [0], [1], [0, 0, 1, 1], [], []>} : vector<8x32xbf16>, vector<32x128xbf16>, vector<8x128xf32> -> vector<8x128xf32>
    %50 = arith.addf %7, %49 : vector<8x128xf32>
    %c1 = arith.constant 1 : index
    %c0_34 = arith.constant 0 : index
    %c0_35 = arith.constant 0 : index
    %51 = vector.load %arg3[%c1, %c0_34, %c0_35] : memref<4x128x32xbf16, #tpu.memory_space<vmem>>, vector<1x128x32xbf16>
    %52 = vector.shape_cast %51 : vector<1x128x32xbf16> to vector<128x32xbf16>
    %cst_36 = arith.constant dense<0.000000e+00> : vector<8x32xf32>
    %53 = tpu.matmul %1, %52, %cst_36 {dimension_numbers = #tpu.dot_dimension_numbers<[1], [0], [0], [1], [0, 0, 1, 1], [], []>} : vector<8x128xbf16>, vector<128x32xbf16>, vector<8x32xf32> -> vector<8x32xf32>
    %c1_37 = arith.constant 1 : index
    %c0_38 = arith.constant 0 : index
    %c0_39 = arith.constant 0 : index
    %54 = vector.load %arg6[%c1_37, %c0_38, %c0_39] : memref<4x1x32xf32, #tpu.memory_space<vmem>>, vector<1x1x32xf32>
    %55 = vector.shape_cast %54 : vector<1x1x32xf32> to vector<1x32xf32>
    %56 = vector.broadcast %55 : vector<1x32xf32> to vector<8x32xf32>
    %57 = arith.addf %53, %56 : vector<8x32xf32>
    %c1_40 = arith.constant 1 : index
    %c0_41 = arith.constant 0 : index
    %c0_42 = arith.constant 0 : index
    %58 = vector.load %arg4[%c1_40, %c0_41, %c0_42] : memref<4x128x32xbf16, #tpu.memory_space<vmem>>, vector<1x128x32xbf16>
    %59 = vector.shape_cast %58 : vector<1x128x32xbf16> to vector<128x32xbf16>
    %cst_43 = arith.constant dense<0.000000e+00> : vector<8x32xf32>
    %60 = tpu.matmul %1, %59, %cst_43 {dimension_numbers = #tpu.dot_dimension_numbers<[1], [0], [0], [1], [0, 0, 1, 1], [], []>} : vector<8x128xbf16>, vector<128x32xbf16>, vector<8x32xf32> -> vector<8x32xf32>
    %c1_44 = arith.constant 1 : index
    %c0_45 = arith.constant 0 : index
    %c0_46 = arith.constant 0 : index
    %61 = vector.load %arg7[%c1_44, %c0_45, %c0_46] : memref<4x1x32xf32, #tpu.memory_space<vmem>>, vector<1x1x32xf32>
    %62 = vector.shape_cast %61 : vector<1x1x32xf32> to vector<1x32xf32>
    %63 = vector.broadcast %62 : vector<1x32xf32> to vector<8x32xf32>
    %64 = arith.addf %60, %63 : vector<8x32xf32>
    %c1_47 = arith.constant 1 : index
    %c0_48 = arith.constant 0 : index
    %c0_49 = arith.constant 0 : index
    %65 = vector.load %arg5[%c1_47, %c0_48, %c0_49] : memref<4x128x32xbf16, #tpu.memory_space<vmem>>, vector<1x128x32xbf16>
    %66 = vector.shape_cast %65 : vector<1x128x32xbf16> to vector<128x32xbf16>
    %cst_50 = arith.constant dense<0.000000e+00> : vector<8x32xf32>
    %67 = tpu.matmul %1, %66, %cst_50 {dimension_numbers = #tpu.dot_dimension_numbers<[1], [0], [0], [1], [0, 0, 1, 1], [], []>} : vector<8x128xbf16>, vector<128x32xbf16>, vector<8x32xf32> -> vector<8x32xf32>
    %c1_51 = arith.constant 1 : index
    %c0_52 = arith.constant 0 : index
    %c0_53 = arith.constant 0 : index
    %68 = vector.load %arg8[%c1_51, %c0_52, %c0_53] : memref<4x1x32xf32, #tpu.memory_space<vmem>>, vector<1x1x32xf32>
    %69 = vector.shape_cast %68 : vector<1x1x32xf32> to vector<1x32xf32>
    %70 = vector.broadcast %69 : vector<1x32xf32> to vector<8x32xf32>
    %71 = arith.addf %67, %70 : vector<8x32xf32>
    %72 = arith.truncf %57 : vector<8x32xf32> to vector<8x32xbf16>
    %73 = arith.truncf %64 : vector<8x32xf32> to vector<8x32xbf16>
    %cst_54 = arith.constant dense<0.000000e+00> : vector<8x8xf32>
    %74 = tpu.matmul %72, %73, %cst_54 {dimension_numbers = #tpu.dot_dimension_numbers<[1], [1], [0], [0], [0, 0, 1, 0], [], []>} : vector<8x32xbf16>, vector<8x32xbf16>, vector<8x8xf32> -> vector<8x8xf32>
    %75 = arith.addf %74, %6 : vector<8x8xf32>
    %cst_55 = arith.constant dense<0xFF800000> : vector<8xf32>
    %76 = vector.multi_reduction <maximumf>, %75, %cst_55 [1] : vector<8x8xf32> to vector<8xf32>
    %77 = vector.shape_cast %76 : vector<8xf32> to vector<8x1xf32>
    %78 = vector.broadcast %77 : vector<8x1xf32> to vector<8x8xf32>
    %79 = arith.subf %75, %78 : vector<8x8xf32>
    %80 = math.exp %79 : vector<8x8xf32>
    %cst_56 = arith.constant dense<0.000000e+00> : vector<8xf32>
    %81 = vector.multi_reduction <add>, %80, %cst_56 [1] : vector<8x8xf32> to vector<8xf32>
    %82 = vector.shape_cast %81 : vector<8xf32> to vector<8x1xf32>
    %83 = tpu.reciprocal %82 {approx = true} : vector<8x1xf32> -> vector<8x1xf32>
    %84 = vector.broadcast %83 : vector<8x1xf32> to vector<8x8xf32>
    %85 = arith.mulf %80, %84 : vector<8x8xf32>
    %86 = arith.truncf %85 : vector<8x8xf32> to vector<8x8xbf16>
    %87 = arith.truncf %71 : vector<8x32xf32> to vector<8x32xbf16>
    %cst_57 = arith.constant dense<0.000000e+00> : vector<8x32xf32>
    %88 = tpu.matmul %86, %87, %cst_57 {dimension_numbers = #tpu.dot_dimension_numbers<[1], [0], [0], [1], [0, 0, 1, 1], [], []>} : vector<8x8xbf16>, vector<8x32xbf16>, vector<8x32xf32> -> vector<8x32xf32>
    %89 = arith.truncf %88 : vector<8x32xf32> to vector<8x32xbf16>
    %c1_58 = arith.constant 1 : index
    %c0_59 = arith.constant 0 : index
    %c0_60 = arith.constant 0 : index
    %90 = vector.load %arg9[%c1_58, %c0_59, %c0_60] : memref<4x32x128xbf16, #tpu.memory_space<vmem>>, vector<1x32x128xbf16>
    %91 = vector.shape_cast %90 : vector<1x32x128xbf16> to vector<32x128xbf16>
    %cst_61 = arith.constant dense<0.000000e+00> : vector<8x128xf32>
    %92 = tpu.matmul %89, %91, %cst_61 {dimension_numbers = #tpu.dot_dimension_numbers<[1], [0], [0], [1], [0, 0, 1, 1], [], []>} : vector<8x32xbf16>, vector<32x128xbf16>, vector<8x128xf32> -> vector<8x128xf32>
    %93 = arith.addf %50, %92 : vector<8x128xf32>
    %c2 = arith.constant 2 : index
    %c0_62 = arith.constant 0 : index
    %c0_63 = arith.constant 0 : index
    %94 = vector.load %arg3[%c2, %c0_62, %c0_63] : memref<4x128x32xbf16, #tpu.memory_space<vmem>>, vector<1x128x32xbf16>
    %95 = vector.shape_cast %94 : vector<1x128x32xbf16> to vector<128x32xbf16>
    %cst_64 = arith.constant dense<0.000000e+00> : vector<8x32xf32>
    %96 = tpu.matmul %1, %95, %cst_64 {dimension_numbers = #tpu.dot_dimension_numbers<[1], [0], [0], [1], [0, 0, 1, 1], [], []>} : vector<8x128xbf16>, vector<128x32xbf16>, vector<8x32xf32> -> vector<8x32xf32>
    %c2_65 = arith.constant 2 : index
    %c0_66 = arith.constant 0 : index
    %c0_67 = arith.constant 0 : index
    %97 = vector.load %arg6[%c2_65, %c0_66, %c0_67] : memref<4x1x32xf32, #tpu.memory_space<vmem>>, vector<1x1x32xf32>
    %98 = vector.shape_cast %97 : vector<1x1x32xf32> to vector<1x32xf32>
    %99 = vector.broadcast %98 : vector<1x32xf32> to vector<8x32xf32>
    %100 = arith.addf %96, %99 : vector<8x32xf32>
    %c2_68 = arith.constant 2 : index
    %c0_69 = arith.constant 0 : index
    %c0_70 = arith.constant 0 : index
    %101 = vector.load %arg4[%c2_68, %c0_69, %c0_70] : memref<4x128x32xbf16, #tpu.memory_space<vmem>>, vector<1x128x32xbf16>
    %102 = vector.shape_cast %101 : vector<1x128x32xbf16> to vector<128x32xbf16>
    %cst_71 = arith.constant dense<0.000000e+00> : vector<8x32xf32>
    %103 = tpu.matmul %1, %102, %cst_71 {dimension_numbers = #tpu.dot_dimension_numbers<[1], [0], [0], [1], [0, 0, 1, 1], [], []>} : vector<8x128xbf16>, vector<128x32xbf16>, vector<8x32xf32> -> vector<8x32xf32>
    %c2_72 = arith.constant 2 : index
    %c0_73 = arith.constant 0 : index
    %c0_74 = arith.constant 0 : index
    %104 = vector.load %arg7[%c2_72, %c0_73, %c0_74] : memref<4x1x32xf32, #tpu.memory_space<vmem>>, vector<1x1x32xf32>
    %105 = vector.shape_cast %104 : vector<1x1x32xf32> to vector<1x32xf32>
    %106 = vector.broadcast %105 : vector<1x32xf32> to vector<8x32xf32>
    %107 = arith.addf %103, %106 : vector<8x32xf32>
    %c2_75 = arith.constant 2 : index
    %c0_76 = arith.constant 0 : index
    %c0_77 = arith.constant 0 : index
    %108 = vector.load %arg5[%c2_75, %c0_76, %c0_77] : memref<4x128x32xbf16, #tpu.memory_space<vmem>>, vector<1x128x32xbf16>
    %109 = vector.shape_cast %108 : vector<1x128x32xbf16> to vector<128x32xbf16>
    %cst_78 = arith.constant dense<0.000000e+00> : vector<8x32xf32>
    %110 = tpu.matmul %1, %109, %cst_78 {dimension_numbers = #tpu.dot_dimension_numbers<[1], [0], [0], [1], [0, 0, 1, 1], [], []>} : vector<8x128xbf16>, vector<128x32xbf16>, vector<8x32xf32> -> vector<8x32xf32>
    %c2_79 = arith.constant 2 : index
    %c0_80 = arith.constant 0 : index
    %c0_81 = arith.constant 0 : index
    %111 = vector.load %arg8[%c2_79, %c0_80, %c0_81] : memref<4x1x32xf32, #tpu.memory_space<vmem>>, vector<1x1x32xf32>
    %112 = vector.shape_cast %111 : vector<1x1x32xf32> to vector<1x32xf32>
    %113 = vector.broadcast %112 : vector<1x32xf32> to vector<8x32xf32>
    %114 = arith.addf %110, %113 : vector<8x32xf32>
    %115 = arith.truncf %100 : vector<8x32xf32> to vector<8x32xbf16>
    %116 = arith.truncf %107 : vector<8x32xf32> to vector<8x32xbf16>
    %cst_82 = arith.constant dense<0.000000e+00> : vector<8x8xf32>
    %117 = tpu.matmul %115, %116, %cst_82 {dimension_numbers = #tpu.dot_dimension_numbers<[1], [1], [0], [0], [0, 0, 1, 0], [], []>} : vector<8x32xbf16>, vector<8x32xbf16>, vector<8x8xf32> -> vector<8x8xf32>
    %118 = arith.addf %117, %6 : vector<8x8xf32>
    %cst_83 = arith.constant dense<0xFF800000> : vector<8xf32>
    %119 = vector.multi_reduction <maximumf>, %118, %cst_83 [1] : vector<8x8xf32> to vector<8xf32>
    %120 = vector.shape_cast %119 : vector<8xf32> to vector<8x1xf32>
    %121 = vector.broadcast %120 : vector<8x1xf32> to vector<8x8xf32>
    %122 = arith.subf %118, %121 : vector<8x8xf32>
    %123 = math.exp %122 : vector<8x8xf32>
    %cst_84 = arith.constant dense<0.000000e+00> : vector<8xf32>
    %124 = vector.multi_reduction <add>, %123, %cst_84 [1] : vector<8x8xf32> to vector<8xf32>
    %125 = vector.shape_cast %124 : vector<8xf32> to vector<8x1xf32>
    %126 = tpu.reciprocal %125 {approx = true} : vector<8x1xf32> -> vector<8x1xf32>
    %127 = vector.broadcast %126 : vector<8x1xf32> to vector<8x8xf32>
    %128 = arith.mulf %123, %127 : vector<8x8xf32>
    %129 = arith.truncf %128 : vector<8x8xf32> to vector<8x8xbf16>
    %130 = arith.truncf %114 : vector<8x32xf32> to vector<8x32xbf16>
    %cst_85 = arith.constant dense<0.000000e+00> : vector<8x32xf32>
    %131 = tpu.matmul %129, %130, %cst_85 {dimension_numbers = #tpu.dot_dimension_numbers<[1], [0], [0], [1], [0, 0, 1, 1], [], []>} : vector<8x8xbf16>, vector<8x32xbf16>, vector<8x32xf32> -> vector<8x32xf32>
    %132 = arith.truncf %131 : vector<8x32xf32> to vector<8x32xbf16>
    %c2_86 = arith.constant 2 : index
    %c0_87 = arith.constant 0 : index
    %c0_88 = arith.constant 0 : index
    %133 = vector.load %arg9[%c2_86, %c0_87, %c0_88] : memref<4x32x128xbf16, #tpu.memory_space<vmem>>, vector<1x32x128xbf16>
    %134 = vector.shape_cast %133 : vector<1x32x128xbf16> to vector<32x128xbf16>
    %cst_89 = arith.constant dense<0.000000e+00> : vector<8x128xf32>
    %135 = tpu.matmul %132, %134, %cst_89 {dimension_numbers = #tpu.dot_dimension_numbers<[1], [0], [0], [1], [0, 0, 1, 1], [], []>} : vector<8x32xbf16>, vector<32x128xbf16>, vector<8x128xf32> -> vector<8x128xf32>
    %136 = arith.addf %93, %135 : vector<8x128xf32>
    %c3 = arith.constant 3 : index
    %c0_90 = arith.constant 0 : index
    %c0_91 = arith.constant 0 : index
    %137 = vector.load %arg3[%c3, %c0_90, %c0_91] : memref<4x128x32xbf16, #tpu.memory_space<vmem>>, vector<1x128x32xbf16>
    %138 = vector.shape_cast %137 : vector<1x128x32xbf16> to vector<128x32xbf16>
    %cst_92 = arith.constant dense<0.000000e+00> : vector<8x32xf32>
    %139 = tpu.matmul %1, %138, %cst_92 {dimension_numbers = #tpu.dot_dimension_numbers<[1], [0], [0], [1], [0, 0, 1, 1], [], []>} : vector<8x128xbf16>, vector<128x32xbf16>, vector<8x32xf32> -> vector<8x32xf32>
    %c3_93 = arith.constant 3 : index
    %c0_94 = arith.constant 0 : index
    %c0_95 = arith.constant 0 : index
    %140 = vector.load %arg6[%c3_93, %c0_94, %c0_95] : memref<4x1x32xf32, #tpu.memory_space<vmem>>, vector<1x1x32xf32>
    %141 = vector.shape_cast %140 : vector<1x1x32xf32> to vector<1x32xf32>
    %142 = vector.broadcast %141 : vector<1x32xf32> to vector<8x32xf32>
    %143 = arith.addf %139, %142 : vector<8x32xf32>
    %c3_96 = arith.constant 3 : index
    %c0_97 = arith.constant 0 : index
    %c0_98 = arith.constant 0 : index
    %144 = vector.load %arg4[%c3_96, %c0_97, %c0_98] : memref<4x128x32xbf16, #tpu.memory_space<vmem>>, vector<1x128x32xbf16>
    %145 = vector.shape_cast %144 : vector<1x128x32xbf16> to vector<128x32xbf16>
    %cst_99 = arith.constant dense<0.000000e+00> : vector<8x32xf32>
    %146 = tpu.matmul %1, %145, %cst_99 {dimension_numbers = #tpu.dot_dimension_numbers<[1], [0], [0], [1], [0, 0, 1, 1], [], []>} : vector<8x128xbf16>, vector<128x32xbf16>, vector<8x32xf32> -> vector<8x32xf32>
    %c3_100 = arith.constant 3 : index
    %c0_101 = arith.constant 0 : index
    %c0_102 = arith.constant 0 : index
    %147 = vector.load %arg7[%c3_100, %c0_101, %c0_102] : memref<4x1x32xf32, #tpu.memory_space<vmem>>, vector<1x1x32xf32>
    %148 = vector.shape_cast %147 : vector<1x1x32xf32> to vector<1x32xf32>
    %149 = vector.broadcast %148 : vector<1x32xf32> to vector<8x32xf32>
    %150 = arith.addf %146, %149 : vector<8x32xf32>
    %c3_103 = arith.constant 3 : index
    %c0_104 = arith.constant 0 : index
    %c0_105 = arith.constant 0 : index
    %151 = vector.load %arg5[%c3_103, %c0_104, %c0_105] : memref<4x128x32xbf16, #tpu.memory_space<vmem>>, vector<1x128x32xbf16>
    %152 = vector.shape_cast %151 : vector<1x128x32xbf16> to vector<128x32xbf16>
    %cst_106 = arith.constant dense<0.000000e+00> : vector<8x32xf32>
    %153 = tpu.matmul %1, %152, %cst_106 {dimension_numbers = #tpu.dot_dimension_numbers<[1], [0], [0], [1], [0, 0, 1, 1], [], []>} : vector<8x128xbf16>, vector<128x32xbf16>, vector<8x32xf32> -> vector<8x32xf32>
    %c3_107 = arith.constant 3 : index
    %c0_108 = arith.constant 0 : index
    %c0_109 = arith.constant 0 : index
    %154 = vector.load %arg8[%c3_107, %c0_108, %c0_109] : memref<4x1x32xf32, #tpu.memory_space<vmem>>, vector<1x1x32xf32>
    %155 = vector.shape_cast %154 : vector<1x1x32xf32> to vector<1x32xf32>
    %156 = vector.broadcast %155 : vector<1x32xf32> to vector<8x32xf32>
    %157 = arith.addf %153, %156 : vector<8x32xf32>
    %158 = arith.truncf %143 : vector<8x32xf32> to vector<8x32xbf16>
    %159 = arith.truncf %150 : vector<8x32xf32> to vector<8x32xbf16>
    %cst_110 = arith.constant dense<0.000000e+00> : vector<8x8xf32>
    %160 = tpu.matmul %158, %159, %cst_110 {dimension_numbers = #tpu.dot_dimension_numbers<[1], [1], [0], [0], [0, 0, 1, 0], [], []>} : vector<8x32xbf16>, vector<8x32xbf16>, vector<8x8xf32> -> vector<8x8xf32>
    %161 = arith.addf %160, %6 : vector<8x8xf32>
    %cst_111 = arith.constant dense<0xFF800000> : vector<8xf32>
    %162 = vector.multi_reduction <maximumf>, %161, %cst_111 [1] : vector<8x8xf32> to vector<8xf32>
    %163 = vector.shape_cast %162 : vector<8xf32> to vector<8x1xf32>
    %164 = vector.broadcast %163 : vector<8x1xf32> to vector<8x8xf32>
    %165 = arith.subf %161, %164 : vector<8x8xf32>
    %166 = math.exp %165 : vector<8x8xf32>
    %cst_112 = arith.constant dense<0.000000e+00> : vector<8xf32>
    %167 = vector.multi_reduction <add>, %166, %cst_112 [1] : vector<8x8xf32> to vector<8xf32>
    %168 = vector.shape_cast %167 : vector<8xf32> to vector<8x1xf32>
    %169 = tpu.reciprocal %168 {approx = true} : vector<8x1xf32> -> vector<8x1xf32>
    %170 = vector.broadcast %169 : vector<8x1xf32> to vector<8x8xf32>
    %171 = arith.mulf %166, %170 : vector<8x8xf32>
    %172 = arith.truncf %171 : vector<8x8xf32> to vector<8x8xbf16>
    %173 = arith.truncf %157 : vector<8x32xf32> to vector<8x32xbf16>
    %cst_113 = arith.constant dense<0.000000e+00> : vector<8x32xf32>
    %174 = tpu.matmul %172, %173, %cst_113 {dimension_numbers = #tpu.dot_dimension_numbers<[1], [0], [0], [1], [0, 0, 1, 1], [], []>} : vector<8x8xbf16>, vector<8x32xbf16>, vector<8x32xf32> -> vector<8x32xf32>
    %175 = arith.truncf %174 : vector<8x32xf32> to vector<8x32xbf16>
    %c3_114 = arith.constant 3 : index
    %c0_115 = arith.constant 0 : index
    %c0_116 = arith.constant 0 : index
    %176 = vector.load %arg9[%c3_114, %c0_115, %c0_116] : memref<4x32x128xbf16, #tpu.memory_space<vmem>>, vector<1x32x128xbf16>
    %177 = vector.shape_cast %176 : vector<1x32x128xbf16> to vector<32x128xbf16>
    %cst_117 = arith.constant dense<0.000000e+00> : vector<8x128xf32>
    %178 = tpu.matmul %175, %177, %cst_117 {dimension_numbers = #tpu.dot_dimension_numbers<[1], [0], [0], [1], [0, 0, 1, 1], [], []>} : vector<8x32xbf16>, vector<32x128xbf16>, vector<8x128xf32> -> vector<8x128xf32>
    %179 = arith.addf %136, %178 : vector<8x128xf32>
    %c0_118 = arith.constant 0 : index
    %c0_119 = arith.constant 0 : index
    %180 = vector.load %arg10[%c0_118, %c0_119] : memref<1x128xf32, #tpu.memory_space<vmem>>, vector<1x128xf32>
    %181 = vector.broadcast %180 : vector<1x128xf32> to vector<8x128xf32>
    %182 = arith.addf %179, %181 : vector<8x128xf32>
    %183 = arith.addf %182, %2 : vector<8x128xf32>
    %cst_120 = arith.constant dense<0.000000e+00> : vector<8xf32>
    %184 = vector.multi_reduction <add>, %183, %cst_120 [1] : vector<8x128xf32> to vector<8xf32>
    %185 = vector.shape_cast %184 : vector<8xf32> to vector<8x1xf32>
    %cst_121 = arith.constant 1.280000e+02 : f32
    %186 = vector.broadcast %cst_121 : f32 to vector<8x1xf32>
    %187 = arith.divf %185, %186 : vector<8x1xf32>
    %188 = vector.broadcast %187 : vector<8x1xf32> to vector<8x128xf32>
    %189 = arith.subf %183, %188 : vector<8x128xf32>
    %190 = vector.broadcast %187 : vector<8x1xf32> to vector<8x128xf32>
    %191 = arith.subf %183, %190 : vector<8x128xf32>
    %192 = arith.mulf %189, %191 : vector<8x128xf32>
    %cst_122 = arith.constant dense<0.000000e+00> : vector<8xf32>
    %193 = vector.multi_reduction <add>, %192, %cst_122 [1] : vector<8x128xf32> to vector<8xf32>
    %194 = vector.shape_cast %193 : vector<8xf32> to vector<8x1xf32>
    %cst_123 = arith.constant 1.280000e+02 : f32
    %195 = vector.broadcast %cst_123 : f32 to vector<8x1xf32>
    %196 = arith.divf %194, %195 : vector<8x1xf32>
    %197 = vector.broadcast %187 : vector<8x1xf32> to vector<8x128xf32>
    %198 = arith.subf %183, %197 : vector<8x128xf32>
    %cst_124 = arith.constant 9.99999996E-13 : f32
    %199 = vector.broadcast %cst_124 : f32 to vector<8x1xf32>
    %200 = arith.addf %196, %199 : vector<8x1xf32>
    %201 = math.rsqrt %200 : vector<8x1xf32>
    %202 = vector.broadcast %201 : vector<8x1xf32> to vector<8x128xf32>
    %203 = arith.mulf %198, %202 : vector<8x128xf32>
    %c0_125 = arith.constant 0 : index
    %c0_126 = arith.constant 0 : index
    %204 = vector.load %arg11[%c0_125, %c0_126] : memref<1x128xf32, #tpu.memory_space<vmem>>, vector<1x128xf32>
    %205 = vector.broadcast %204 : vector<1x128xf32> to vector<8x128xf32>
    %206 = arith.mulf %203, %205 : vector<8x128xf32>
    %c0_127 = arith.constant 0 : index
    %c0_128 = arith.constant 0 : index
    %207 = vector.load %arg12[%c0_127, %c0_128] : memref<1x128xf32, #tpu.memory_space<vmem>>, vector<1x128xf32>
    %208 = vector.broadcast %207 : vector<1x128xf32> to vector<8x128xf32>
    %209 = arith.addf %206, %208 : vector<8x128xf32>
    %210 = arith.truncf %209 : vector<8x128xf32> to vector<8x128xbf16>
    %c0_129 = arith.constant 0 : index
    %c0_130 = arith.constant 0 : index
    %c0_131 = arith.constant 0 : index
    %211 = vector.load %arg13[%c0_129, %c0_130, %c0_131] : memref<1x8x128xbf16, #tpu.memory_space<vmem>>, vector<1x8x128xbf16>
    %212 = vector.shape_cast %211 : vector<1x8x128xbf16> to vector<8x128xbf16>
    %213 = vector.shape_cast %210 : vector<8x128xbf16> to vector<1x8x128xbf16>
    tpu.vector_store %arg13[%c0_129, %c0_130, %c0_131], %213 {strides = array<i32>} : memref<1x8x128xbf16, #tpu.memory_space<vmem>>, vector<1x8x128xbf16>,
    return
  }
  func.func @transform_0(%arg0: i32) -> (i32, i32, i32) {
    %c0_i32 = arith.constant 0 : i32
    %c0_i32_0 = arith.constant 0 : i32
    %c0_i32_1 = arith.constant 0 : i32
    return %arg0, %c0_i32, %c0_i32_0 : i32, i32, i32
  }
  func.func @transform_1(%arg0: i32) -> (i32, i32, i32) {
    %c0_i32 = arith.constant 0 : i32
    %c0_i32_0 = arith.constant 0 : i32
    %c0_i32_1 = arith.constant 0 : i32
    return %arg0, %c0_i32, %c0_i32_0 : i32, i32, i32
  }
  func.func @transform_2(%arg0: i32) -> (i32, i32, i32) {
    %c0_i32 = arith.constant 0 : i32
    %c0_i32_0 = arith.constant 0 : i32
    %c0_i32_1 = arith.constant 0 : i32
    %c0_i32_2 = arith.constant 0 : i32
    return %c0_i32, %c0_i32_0, %c0_i32_1 : i32, i32, i32
  }
  func.func @transform_3(%arg0: i32) -> (i32, i32, i32) {
    %c0_i32 = arith.constant 0 : i32
    %c0_i32_0 = arith.constant 0 : i32
    %c0_i32_1 = arith.constant 0 : i32
    %c0_i32_2 = arith.constant 0 : i32
    return %c0_i32, %c0_i32_0, %c0_i32_1 : i32, i32, i32
  }
  func.func @transform_4(%arg0: i32) -> (i32, i32, i32) {
    %c0_i32 = arith.constant 0 : i32
    %c0_i32_0 = arith.constant 0 : i32
    %c0_i32_1 = arith.constant 0 : i32
    %c0_i32_2 = arith.constant 0 : i32
    return %c0_i32, %c0_i32_0, %c0_i32_1 : i32, i32, i32
  }
  func.func @transform_5(%arg0: i32) -> (i32, i32, i32) {
    %c0_i32 = arith.constant 0 : i32
    %c0_i32_0 = arith.constant 0 : i32
    %c0_i32_1 = arith.constant 0 : i32
    %c0_i32_2 = arith.constant 0 : i32
    return %c0_i32, %c0_i32_0, %c0_i32_1 : i32, i32, i32
  }
  func.func @transform_6(%arg0: i32) -> (i32, i32, i32) {
    %c0_i32 = arith.constant 0 : i32
    %c0_i32_0 = arith.constant 0 : i32
    %c0_i32_1 = arith.constant 0 : i32
    %c0_i32_2 = arith.constant 0 : i32
    return %c0_i32, %c0_i32_0, %c0_i32_1 : i32, i32, i32
  }
  func.func @transform_7(%arg0: i32) -> (i32, i32, i32) {
    %c0_i32 = arith.constant 0 : i32
    %c0_i32_0 = arith.constant 0 : i32
    %c0_i32_1 = arith.constant 0 : i32
    %c0_i32_2 = arith.constant 0 : i32
    return %c0_i32, %c0_i32_0, %c0_i32_1 : i32, i32, i32
  }
  func.func @transform_8(%arg0: i32) -> (i32, i32, i32) {
    %c0_i32 = arith.constant 0 : i32
    %c0_i32_0 = arith.constant 0 : i32
    %c0_i32_1 = arith.constant 0 : i32
    %c0_i32_2 = arith.constant 0 : i32
    return %c0_i32, %c0_i32_0, %c0_i32_1 : i32, i32, i32
  }
  func.func @transform_9(%arg0: i32) -> (i32, i32) {
    %c0_i32 = arith.constant 0 : i32
    %c0_i32_0 = arith.constant 0 : i32
    %c0_i32_1 = arith.constant 0 : i32
    return %c0_i32, %c0_i32_0 : i32, i32
  }
  func.func @transform_10(%arg0: i32) -> (i32, i32) {
    %c0_i32 = arith.constant 0 : i32
    %c0_i32_0 = arith.constant 0 : i32
    %c0_i32_1 = arith.constant 0 : i32
    return %c0_i32, %c0_i32_0 : i32, i32
  }
  func.func @transform_11(%arg0: i32) -> (i32, i32) {
    %c0_i32 = arith.constant 0 : i32
    %c0_i32_0 = arith.constant 0 : i32
    %c0_i32_1 = arith.constant 0 : i32
    return %c0_i32, %c0_i32_0 : i32, i32
  }
  func.func @transform_12(%arg0: i32) -> (i32, i32, i32) {
    %c0_i32 = arith.constant 0 : i32
    %c0_i32_0 = arith.constant 0 : i32
    %c0_i32_1 = arith.constant 0 : i32
    return %arg0, %c0_i32, %c0_i32_0 : i32, i32, i32
  }
}

module attributes {stable_mosaic.version = 11 : i64} {
  func.func @_ffn_ln_kernel(%arg0: i32, %arg1: memref<16x128xbf16, #tpu.memory_space<vmem>>, %arg2: memref<128x256xbf16, #tpu.memory_space<vmem>>, %arg3: memref<1x256xf32, #tpu.memory_space<vmem>>, %arg4: memref<256x128xbf16, #tpu.memory_space<vmem>>, %arg5: memref<1x128xf32, #tpu.memory_space<vmem>>, %arg6: memref<1x128xf32, #tpu.memory_space<vmem>>, %arg7: memref<1x128xf32, #tpu.memory_space<vmem>>, %arg8: memref<16x128xbf16, #tpu.memory_space<vmem>>) attributes {dimension_semantics = [#tpu.dimension_semantics<parallel>], iteration_bounds = array<i64: 1>, scalar_prefetch = 0 : i64, scratch_operands = 0 : i64, tpu.core_type = #tpu.core_type<tc>, window_params = [{transform_indices = @transform_0, window_bounds = array<i64: 16, 128>}, {pipeline_mode = #tpu.pipeline_mode<synchronous>, transform_indices = @transform_1, window_bounds = array<i64: 128, 256>}, {pipeline_mode = #tpu.pipeline_mode<synchronous>, transform_indices = @transform_2, window_bounds = array<i64: 1, 256>}, {pipeline_mode = #tpu.pipeline_mode<synchronous>, transform_indices = @transform_3, window_bounds = array<i64: 256, 128>}, {pipeline_mode = #tpu.pipeline_mode<synchronous>, transform_indices = @transform_4, window_bounds = array<i64: 1, 128>}, {pipeline_mode = #tpu.pipeline_mode<synchronous>, transform_indices = @transform_5, window_bounds = array<i64: 1, 128>}, {pipeline_mode = #tpu.pipeline_mode<synchronous>, transform_indices = @transform_6, window_bounds = array<i64: 1, 128>}, {transform_indices = @transform_7, window_bounds = array<i64: 16, 128>}]} {
    %c0 = arith.constant 0 : index
    %c0_0 = arith.constant 0 : index
    %0 = vector.load %arg1[%c0, %c0_0] : memref<16x128xbf16, #tpu.memory_space<vmem>>, vector<16x128xbf16>
    %c0_1 = arith.constant 0 : index
    %c0_2 = arith.constant 0 : index
    %1 = vector.load %arg2[%c0_1, %c0_2] : memref<128x256xbf16, #tpu.memory_space<vmem>>, vector<128x256xbf16>
    %cst = arith.constant dense<0.000000e+00> : vector<16x256xf32>
    %2 = tpu.matmul %0, %1, %cst {dimension_numbers = #tpu.dot_dimension_numbers<[1], [0], [0], [1], [0, 0, 1, 1], [], []>} : vector<16x128xbf16>, vector<128x256xbf16>, vector<16x256xf32> -> vector<16x256xf32>
    %c0_3 = arith.constant 0 : index
    %c0_4 = arith.constant 0 : index
    %3 = vector.load %arg3[%c0_3, %c0_4] : memref<1x256xf32, #tpu.memory_space<vmem>>, vector<1x256xf32>
    %4 = vector.broadcast %3 : vector<1x256xf32> to vector<16x256xf32>
    %5 = arith.addf %2, %4 : vector<16x256xf32>
    %cst_5 = arith.constant 5.000000e-01 : f32
    %6 = vector.broadcast %cst_5 : f32 to vector<16x256xf32>
    %7 = arith.mulf %6, %5 : vector<16x256xf32>
    %cst_6 = arith.constant 4.471500e-02 : f32
    %8 = vector.broadcast %cst_6 : f32 to vector<16x256xf32>
    %9 = arith.mulf %8, %5 : vector<16x256xf32>
    %10 = arith.mulf %9, %5 : vector<16x256xf32>
    %11 = arith.mulf %10, %5 : vector<16x256xf32>
    %12 = arith.addf %5, %11 : vector<16x256xf32>
    %cst_7 = arith.constant 0.797884583 : f32
    %13 = vector.broadcast %cst_7 : f32 to vector<16x256xf32>
    %14 = arith.mulf %13, %12 : vector<16x256xf32>
    %15 = math.tanh %14 : vector<16x256xf32>
    %cst_8 = arith.constant 1.000000e+00 : f32
    %16 = vector.broadcast %cst_8 : f32 to vector<16x256xf32>
    %17 = arith.addf %16, %15 : vector<16x256xf32>
    %18 = arith.mulf %7, %17 : vector<16x256xf32>
    %19 = arith.truncf %18 : vector<16x256xf32> to vector<16x256xbf16>
    %c0_9 = arith.constant 0 : index
    %c0_10 = arith.constant 0 : index
    %20 = vector.load %arg4[%c0_9, %c0_10] : memref<256x128xbf16, #tpu.memory_space<vmem>>, vector<256x128xbf16>
    %cst_11 = arith.constant dense<0.000000e+00> : vector<16x128xf32>
    %21 = tpu.matmul %19, %20, %cst_11 {dimension_numbers = #tpu.dot_dimension_numbers<[1], [0], [0], [1], [0, 0, 1, 1], [], []>} : vector<16x256xbf16>, vector<256x128xbf16>, vector<16x128xf32> -> vector<16x128xf32>
    %c0_12 = arith.constant 0 : index
    %c0_13 = arith.constant 0 : index
    %22 = vector.load %arg5[%c0_12, %c0_13] : memref<1x128xf32, #tpu.memory_space<vmem>>, vector<1x128xf32>
    %23 = vector.broadcast %22 : vector<1x128xf32> to vector<16x128xf32>
    %24 = arith.addf %21, %23 : vector<16x128xf32>
    %25 = arith.extf %0 : vector<16x128xbf16> to vector<16x128xf32>
    %26 = arith.addf %24, %25 : vector<16x128xf32>
    %cst_14 = arith.constant dense<0.000000e+00> : vector<16xf32>
    %27 = vector.multi_reduction <add>, %26, %cst_14 [1] : vector<16x128xf32> to vector<16xf32>
    %28 = vector.shape_cast %27 : vector<16xf32> to vector<16x1xf32>
    %cst_15 = arith.constant 1.280000e+02 : f32
    %29 = vector.broadcast %cst_15 : f32 to vector<16x1xf32>
    %30 = arith.divf %28, %29 : vector<16x1xf32>
    %31 = vector.broadcast %30 : vector<16x1xf32> to vector<16x128xf32>
    %32 = arith.subf %26, %31 : vector<16x128xf32>
    %33 = vector.broadcast %30 : vector<16x1xf32> to vector<16x128xf32>
    %34 = arith.subf %26, %33 : vector<16x128xf32>
    %35 = arith.mulf %32, %34 : vector<16x128xf32>
    %cst_16 = arith.constant dense<0.000000e+00> : vector<16xf32>
    %36 = vector.multi_reduction <add>, %35, %cst_16 [1] : vector<16x128xf32> to vector<16xf32>
    %37 = vector.shape_cast %36 : vector<16xf32> to vector<16x1xf32>
    %cst_17 = arith.constant 1.280000e+02 : f32
    %38 = vector.broadcast %cst_17 : f32 to vector<16x1xf32>
    %39 = arith.divf %37, %38 : vector<16x1xf32>
    %40 = vector.broadcast %30 : vector<16x1xf32> to vector<16x128xf32>
    %41 = arith.subf %26, %40 : vector<16x128xf32>
    %cst_18 = arith.constant 9.99999996E-13 : f32
    %42 = vector.broadcast %cst_18 : f32 to vector<16x1xf32>
    %43 = arith.addf %39, %42 : vector<16x1xf32>
    %44 = math.rsqrt %43 : vector<16x1xf32>
    %45 = vector.broadcast %44 : vector<16x1xf32> to vector<16x128xf32>
    %46 = arith.mulf %41, %45 : vector<16x128xf32>
    %c0_19 = arith.constant 0 : index
    %c0_20 = arith.constant 0 : index
    %47 = vector.load %arg6[%c0_19, %c0_20] : memref<1x128xf32, #tpu.memory_space<vmem>>, vector<1x128xf32>
    %48 = vector.broadcast %47 : vector<1x128xf32> to vector<16x128xf32>
    %49 = arith.mulf %46, %48 : vector<16x128xf32>
    %c0_21 = arith.constant 0 : index
    %c0_22 = arith.constant 0 : index
    %50 = vector.load %arg7[%c0_21, %c0_22] : memref<1x128xf32, #tpu.memory_space<vmem>>, vector<1x128xf32>
    %51 = vector.broadcast %50 : vector<1x128xf32> to vector<16x128xf32>
    %52 = arith.addf %49, %51 : vector<16x128xf32>
    %53 = arith.truncf %52 : vector<16x128xf32> to vector<16x128xbf16>
    %c0_23 = arith.constant 0 : index
    %c0_24 = arith.constant 0 : index
    %54 = vector.load %arg8[%c0_23, %c0_24] : memref<16x128xbf16, #tpu.memory_space<vmem>>, vector<16x128xbf16>
    tpu.vector_store %arg8[%c0_23, %c0_24], %53 {strides = array<i32>} : memref<16x128xbf16, #tpu.memory_space<vmem>>, vector<16x128xbf16>,
    return
  }
  func.func @transform_0(%arg0: i32) -> (i32, i32) {
    %c0_i32 = arith.constant 0 : i32
    %c0_i32_0 = arith.constant 0 : i32
    return %arg0, %c0_i32 : i32, i32
  }
  func.func @transform_1(%arg0: i32) -> (i32, i32) {
    %c0_i32 = arith.constant 0 : i32
    %c0_i32_0 = arith.constant 0 : i32
    %c0_i32_1 = arith.constant 0 : i32
    return %c0_i32, %c0_i32_0 : i32, i32
  }
  func.func @transform_2(%arg0: i32) -> (i32, i32) {
    %c0_i32 = arith.constant 0 : i32
    %c0_i32_0 = arith.constant 0 : i32
    %c0_i32_1 = arith.constant 0 : i32
    return %c0_i32, %c0_i32_0 : i32, i32
  }
  func.func @transform_3(%arg0: i32) -> (i32, i32) {
    %c0_i32 = arith.constant 0 : i32
    %c0_i32_0 = arith.constant 0 : i32
    %c0_i32_1 = arith.constant 0 : i32
    return %c0_i32, %c0_i32_0 : i32, i32
  }
  func.func @transform_4(%arg0: i32) -> (i32, i32) {
    %c0_i32 = arith.constant 0 : i32
    %c0_i32_0 = arith.constant 0 : i32
    %c0_i32_1 = arith.constant 0 : i32
    return %c0_i32, %c0_i32_0 : i32, i32
  }
  func.func @transform_5(%arg0: i32) -> (i32, i32) {
    %c0_i32 = arith.constant 0 : i32
    %c0_i32_0 = arith.constant 0 : i32
    %c0_i32_1 = arith.constant 0 : i32
    return %c0_i32, %c0_i32_0 : i32, i32
  }
  func.func @transform_6(%arg0: i32) -> (i32, i32) {
    %c0_i32 = arith.constant 0 : i32
    %c0_i32_0 = arith.constant 0 : i32
    %c0_i32_1 = arith.constant 0 : i32
    return %c0_i32, %c0_i32_0 : i32, i32
  }
  func.func @transform_7(%arg0: i32) -> (i32, i32) {
    %c0_i32 = arith.constant 0 : i32
    %c0_i32_0 = arith.constant 0 : i32
    return %arg0, %c0_i32 : i32, i32
  }
}

module attributes {stable_mosaic.version = 11 : i64} {
  func.func @_pooler_head_kernel(%arg0: memref<2x128xbf16, #tpu.memory_space<vmem>>, %arg1: memref<128x128xbf16, #tpu.memory_space<vmem>>, %arg2: memref<1x128xf32, #tpu.memory_space<vmem>>, %arg3: memref<128x128xf32, #tpu.memory_space<vmem>>, %arg4: memref<1x128xf32, #tpu.memory_space<vmem>>, %arg5: memref<2x128xf32, #tpu.memory_space<vmem>>) attributes {dimension_semantics = [], scalar_prefetch = 0 : i64, scratch_operands = 0 : i64, tpu.core_type = #tpu.core_type<tc>} {
    %c0 = arith.constant 0 : index
    %c0_0 = arith.constant 0 : index
    %0 = vector.load %arg0[%c0, %c0_0] : memref<2x128xbf16, #tpu.memory_space<vmem>>, vector<2x128xbf16>
    %c0_1 = arith.constant 0 : index
    %c0_2 = arith.constant 0 : index
    %1 = vector.load %arg1[%c0_1, %c0_2] : memref<128x128xbf16, #tpu.memory_space<vmem>>, vector<128x128xbf16>
    %cst = arith.constant dense<0.000000e+00> : vector<2x128xf32>
    %2 = tpu.matmul %0, %1, %cst {dimension_numbers = #tpu.dot_dimension_numbers<[1], [0], [0], [1], [0, 0, 1, 1], [], []>} : vector<2x128xbf16>, vector<128x128xbf16>, vector<2x128xf32> -> vector<2x128xf32>
    %c0_3 = arith.constant 0 : index
    %c0_4 = arith.constant 0 : index
    %3 = vector.load %arg2[%c0_3, %c0_4] : memref<1x128xf32, #tpu.memory_space<vmem>>, vector<1x128xf32>
    %4 = vector.broadcast %3 : vector<1x128xf32> to vector<2x128xf32>
    %5 = arith.addf %2, %4 : vector<2x128xf32>
    %6 = math.tanh %5 : vector<2x128xf32>
    %c0_5 = arith.constant 0 : index
    %c0_6 = arith.constant 0 : index
    %7 = vector.load %arg3[%c0_5, %c0_6] : memref<128x128xf32, #tpu.memory_space<vmem>>, vector<128x128xf32>
    %cst_7 = arith.constant dense<0.000000e+00> : vector<2x128xf32>
    %8 = tpu.matmul %6, %7, %cst_7 {dimension_numbers = #tpu.dot_dimension_numbers<[1], [0], [0], [1], [0, 0, 1, 1], [], []>} : vector<2x128xf32>, vector<128x128xf32>, vector<2x128xf32> -> vector<2x128xf32>
    %c0_8 = arith.constant 0 : index
    %c0_9 = arith.constant 0 : index
    %9 = vector.load %arg4[%c0_8, %c0_9] : memref<1x128xf32, #tpu.memory_space<vmem>>, vector<1x128xf32>
    %10 = vector.broadcast %9 : vector<1x128xf32> to vector<2x128xf32>
    %11 = arith.addf %8, %10 : vector<2x128xf32>
    %c0_10 = arith.constant 0 : index
    %c0_11 = arith.constant 0 : index
    %12 = vector.load %arg5[%c0_10, %c0_11] : memref<2x128xf32, #tpu.memory_space<vmem>>, vector<2x128xf32>
    tpu.vector_store %arg5[%c0_10, %c0_11], %11 {strides = array<i32>} : memref<2x128xf32, #tpu.memory_space<vmem>>, vector<2x128xf32>,
    return
  }
}

</mosaic_0001>

<llo_original>
// kernel: sentiment_classifier_forward.6
$region0: #{sentiment_classifier_forward.6}
  #allocation0 [shape = 'u32[]', space=smem, size = 0x4, offset = 0x4, fixed_abs, tag = 'smem constant byte address 0x4 - core index']
  #allocation1 [shape = 'u32[72,128]{1,0:T(1,128)}', space=vmem, size = 0x9000, scoped, tag = 'internal scratch']
  %s0 = inlined_call_operand.vmem [shape: f32[2,8,128], index: 0, kind: input, shape index: {}]
  %s1 = inlined_call_operand.vmem [shape: f32[8,128], index: 1, kind: input, shape index: {}]
  %s2 = inlined_call_operand.vmem [shape: f32[1,128], index: 2, kind: input, shape index: {}]
  %s3 = inlined_call_operand.vmem [shape: f32[1,128], index: 3, kind: input, shape index: {}]
  %s4 = inlined_call_operand.vmem [shape: f32[1,128], index: 4, kind: input, shape index: {}]
  %s5 = inlined_call_operand.vmem [shape: bf16[2,8,128], index: 5, kind: output, shape index: {}]
  %s6 = sld [smem:[#allocation0]]
  $region53: #{sentiment_classifier_forward.6} parent=0
    _
  %s8 = ssub.s32 1, %s6
  %s9 = scalar_select 0, %s8, %s6
  loop: start=0, step=1, limit=4
  $region2: #{sentiment_classifier_forward.6} parent=0 // loop_pre_header
    _
  $region3: #{sentiment_classifier_forward.6} parent=0 // loop_header
    %s11 = sphi 0, %s15
    %p12 = scmp.ge.s32.totalorder %s11, 4
    %s21 = sphi 0, %s23
    %s24 = sphi 0, %s21
    %s25 = sphi 0, %s24
    %s41 = sphi 0, %s25
    %s45 = sphi 0, %s45
    %s47 = sphi 0, %s45
    %s48 = sphi 0, %s47
    %s62 = sphi 0, %s48
    %s66 = sphi 0, %s66
    %s68 = sphi 0, %s66
    %s69 = sphi 0, %s68
    %s83 = sphi 0, %s69
    %s87 = sphi 0, %s87
    %s89 = sphi 0, %s87
    %s90 = sphi 0, %s89
    %s104 = sphi 0, %s90
    %s108 = sphi 0, %s108
    %s110 = sphi 0, %s108
    %s111 = sphi 0, %s110
    %s125 = sphi 0, %s111
    %s131 = sphi 0, %s133
    %s134 = sphi 0, %s131
    %s135 = sphi 0, %s134
    %s151 = sphi 0, %s135
  $region4: #{sentiment_classifier_forward.6} parent=0 // loop_header_branch
    %14 = sbr.rel (%p12) target = $region8
  $region5: #{sentiment_classifier_forward.6} parent=0 // loop_body
    %s16 = ssub.s32 %s11, 1
    %s17 = ssub.s32 %s11, 2
    %s18 = sadd.s32 %s11, 1
    %s19 = ssub.s32 %s11, %s18
    %p20 = scmp.eq.s32.totalorder %s19, 0
    %s22 = sadd.s32 %s21, 1
    %s23 = scalar_select %p20, %s21, %s22
    %p26 = pneg %p20
    %p27 = scmp.eq.s32.totalorder %s11, 1
    %p28 = por %p26, %p27
    %p29 = scmp.ne.s32.totalorder %s21, %s24
    %p30 = scmp.eq.s32.totalorder %s11, 0
    %p31 = por %p29, %p30
    %p32 = scmp.ne.s32.totalorder %s21, %s24
    %p33 = scmp.eq.s32.totalorder %s16, 1
    %p34 = por %p32, %p33
    %p35 = scmp.ne.s32.totalorder %s24, %s25
    %p36 = scmp.eq.s32.totalorder %s16, 0
    %p37 = por %p35, %p36
    %p38 = scmp.ne.s32.totalorder %s24, %s25
    %p39 = scmp.eq.s32.totalorder %s17, 1
    %p40 = por %p38, %p39
    %p42 = scmp.ne.s32.totalorder %s25, %s41
    %p43 = scmp.eq.s32.totalorder %s17, 0
    %p44 = por %p42, %p43
    %s46 = sadd.s32 %s45, 1
    %p49 = scmp.eq.s32.totalorder %s11, 1
    %p50 = scmp.ne.s32.totalorder %s45, %s47
    %p51 = scmp.eq.s32.totalorder %s11, 0
    %p52 = por %p50, %p51
    %p53 = scmp.ne.s32.totalorder %s45, %s47
    %p54 = scmp.eq.s32.totalorder %s16, 1
    %p55 = por %p53, %p54
    %p56 = scmp.ne.s32.totalorder %s47, %s48
    %p57 = scmp.eq.s32.totalorder %s16, 0
    %p58 = por %p56, %p57
    %p59 = scmp.ne.s32.totalorder %s47, %s48
    %p60 = scmp.eq.s32.totalorder %s17, 1
    %p61 = por %p59, %p60
    %p63 = scmp.ne.s32.totalorder %s48, %s62
    %p64 = scmp.eq.s32.totalorder %s17, 0
    %p65 = por %p63, %p64
    %s67 = sadd.s32 %s66, 1
    %p70 = scmp.eq.s32.totalorder %s11, 1
    %p71 = scmp.ne.s32.totalorder %s66, %s68
    %p72 = scmp.eq.s32.totalorder %s11, 0
    %p73 = por %p71, %p72
    %p74 = scmp.ne.s32.totalorder %s66, %s68
    %p75 = scmp.eq.s32.totalorder %s16, 1
    %p76 = por %p74, %p75
    %p77 = scmp.ne.s32.totalorder %s68, %s69
    %p78 = scmp.eq.s32.totalorder %s16, 0
    %p79 = por %p77, %p78
    %p80 = scmp.ne.s32.totalorder %s68, %s69
    %p81 = scmp.eq.s32.totalorder %s17, 1
    %p82 = por %p80, %p81
    %p84 = scmp.ne.s32.totalorder %s69, %s83
    %p85 = scmp.eq.s32.totalorder %s17, 0
    %p86 = por %p84, %p85
    %s88 = sadd.s32 %s87, 1
    %p91 = scmp.eq.s32.totalorder %s11, 1
    %p92 = scmp.ne.s32.totalorder %s87, %s89
    %p93 = scmp.eq.s32.totalorder %s11, 0
    %p94 = por %p92, %p93
    %p95 = scmp.ne.s32.totalorder %s87, %s89
    %p96 = scmp.eq.s32.totalorder %s16, 1
    %p97 = por %p95, %p96
    %p98 = scmp.ne.s32.totalorder %s89, %s90
    %p99 = scmp.eq.s32.totalorder %s16, 0
    %p100 = por %p98, %p99
    %p101 = scmp.ne.s32.totalorder %s89, %s90
    %p102 = scmp.eq.s32.totalorder %s17, 1
    %p103 = por %p101, %p102
    %p105 = scmp.ne.s32.totalorder %s90, %s104
    %p106 = scmp.eq.s32.totalorder %s17, 0
    %p107 = por %p105, %p106
    %s109 = sadd.s32 %s108, 1
    %p112 = scmp.eq.s32.totalorder %s11, 1
    %p113 = scmp.ne.s32.totalorder %s108, %s110
    %p114 = scmp.eq.s32.totalorder %s11, 0
    %p115 = por %p113, %p114
    %p116 = scmp.ne.s32.totalorder %s108, %s110
    %p117 = scmp.eq.s32.totalorder %s16, 1
    %p118 = por %p116, %p117
    %p119 = scmp.ne.s32.totalorder %s110, %s111
    %p120 = scmp.eq.s32.totalorder %s16, 0
    %p121 = por %p119, %p120
    %p122 = scmp.ne.s32.totalorder %s110, %s111
    %p123 = scmp.eq.s32.totalorder %s17, 1
    %p124 = por %p122, %p123
    %p126 = scmp.ne.s32.totalorder %s111, %s125
    %p127 = scmp.eq.s32.totalorder %s17, 0
    %p128 = por %p126, %p127
    %s129 = ssub.s32 %s11, %s18
    %p130 = scmp.eq.s32.totalorder %s129, 0
    %s132 = sadd.s32 %s131, 1
    %s133 = scalar_select %p130, %s131, %s132
    %p136 = pneg %p130
    %p137 = scmp.eq.s32.totalorder %s11, 1
    %p138 = por %p136, %p137
    %p139 = scmp.ne.s32.totalorder %s131, %s134
    %p140 = scmp.eq.s32.totalorder %s11, 0
    %p141 = por %p139, %p140
    %p142 = scmp.ne.s32.totalorder %s131, %s134
    %p143 = scmp.eq.s32.totalorder %s16, 1
    %p144 = por %p142, %p143
    %p145 = scmp.ne.s32.totalorder %s134, %s135
    %p146 = scmp.eq.s32.totalorder %s16, 0
    %p147 = por %p145, %p146
    %p148 = scmp.ne.s32.totalorder %s134, %s135
    %p149 = scmp.eq.s32.totalorder %s17, 1
    %p150 = por %p148, %p149
    %p152 = scmp.ne.s32.totalorder %s135, %s151
    %p153 = scmp.eq.s32.totalorder %s17, 0
    %p154 = por %p152, %p153
    %p155 = scmp.le.s32.totalorder 1, %s11
    %p156 = scmp.lt.s32.totalorder %s11, 3
    %p157 = pnand %p155, %p156
    %p158 = pneg %p157
    // Predicated region
    $region9: #{sentiment_classifier_forward.6} parent=5 // pred_check
      _
    $region10: #{sentiment_classifier_forward.6} parent=5 // pred_check_branch
      %160 = sbr.rel (%p157) target = $region12
    $region11: #{sentiment_classifier_forward.6} parent=5 // pred_region
      %s161 = ssub.s32 %s11, 1
      // Predicated region
      $region13: #{sentiment_classifier_forward.6} parent=11 // pred_check
        %p162 = pneg %p58
      $region14: #{sentiment_classifier_forward.6} parent=11 // pred_check_branch
        %164 = sbr.rel (%p162) target = $region16
      $region15: #{sentiment_classifier_forward.6} parent=11 // pred_region
        _
      $region16: #{sentiment_classifier_forward.6} parent=11 // pred_fallthru
        _
      // Predicated region
      $region17: #{sentiment_classifier_forward.6} parent=11 // pred_check
        %p165 = pneg %p79
      $region18: #{sentiment_classifier_forward.6} parent=11 // pred_check_branch
        %167 = sbr.rel (%p165) target = $region20
      $region19: #{sentiment_classifier_forward.6} parent=11 // pred_region
        _
      $region20: #{sentiment_classifier_forward.6} parent=11 // pred_fallthru
        _
      // Predicated region
      $region21: #{sentiment_classifier_forward.6} parent=11 // pred_check
        %p168 = pneg %p100
      $region22: #{sentiment_classifier_forward.6} parent=11 // pred_check_branch
        %170 = sbr.rel (%p168) target = $region24
      $region23: #{sentiment_classifier_forward.6} parent=11 // pred_region
        _
      $region24: #{sentiment_classifier_forward.6} parent=11 // pred_fallthru
        _
      // Predicated region
      $region25: #{sentiment_classifier_forward.6} parent=11 // pred_check
        %p171 = pneg %p121
      $region26: #{sentiment_classifier_forward.6} parent=11 // pred_check_branch
        %173 = sbr.rel (%p171) target = $region28
      $region27: #{sentiment_classifier_forward.6} parent=11 // pred_region
        _
      $region28: #{sentiment_classifier_forward.6} parent=11 // pred_fallthru
        _
    $region12: #{sentiment_classifier_forward.6} parent=5 // pred_fallthru
      _
    %p174 = scmp.lt.s32.totalorder %s11, 2
    // Predicated region
    $region29: #{sentiment_classifier_forward.6} parent=5 // pred_check
      %p175 = pneg %p174
    $region30: #{sentiment_classifier_forward.6} parent=5 // pred_check_branch
      %177 = sbr.rel (%p175) target = $region32
    $region31: #{sentiment_classifier_forward.6} parent=5 // pred_region
      // Predicated region
      $region33: #{sentiment_classifier_forward.6} parent=31 // pred_check
        %p178 = pneg %p31
      $region34: #{sentiment_classifier_forward.6} parent=31 // pred_check_branch
        %180 = sbr.rel (%p178) target = $region36
      $region35: #{sentiment_classifier_forward.6} parent=31 // pred_region
        %p181 = scmp.lt.s32.totalorder %s11, 1
        %s182 = scalar_select %p181, %s11, 1
        %s183 = smul.addr %s182, 8
        %s184 = scalar_lea.vmem %s0, %s183
      $region36: #{sentiment_classifier_forward.6} parent=31 // pred_fallthru
        _
    $region32: #{sentiment_classifier_forward.6} parent=5 // pred_fallthru
      _
    %p185 = scmp.le.s32.totalorder 1, %s11
    %p186 = scmp.lt.s32.totalorder %s11, 3
    %p187 = pnand %p185, %p186
    %p188 = pneg %p187
    // Predicated region
    $region37: #{sentiment_classifier_forward.6} parent=5 // pred_check
      _
    $region38: #{sentiment_classifier_forward.6} parent=5 // pred_check_branch
      %190 = sbr.rel (%p187) target = $region40
    $region39: #{sentiment_classifier_forward.6} parent=5 // pred_region
      %s191 = ssub.s32 %s11, 1
      %p192 = scmp.lt.s32.totalorder %s16, 1
      %s193 = scalar_select %p192, %s16, 1
      %s194 = smul.addr %s193, 8
      %s195 = scalar_lea.vmem %s0, %s194
      %p196 = pneg %p37
      %p197 = pneg %p34
      %p198 = pneg %p58
      %p199 = pneg %p55
      %p200 = pneg %p79
      %p201 = pneg %p76
      %p202 = pneg %p100
      %p203 = pneg %p97
      %p204 = pneg %p121
      %p205 = pneg %p118
      %p206 = pneg %p147
      %p207 = pneg %p144
      %p208 = scmp.lt.s32.totalorder %s16, 1
      %s209 = scalar_select %p208, %s16, 1
      %s210 = smul.addr %s209, 4
      %s211 = scalar_lea.vmem %s5, %s210
      %p212 = scmp.lt.s32.totalorder %s16, 1
      %s213 = scalar_select %p212, %s16, 1
      %s214 = smul.addr %s213, 8
      %s215 = scalar_lea.vmem %s0, %s214
      %p216 = scmp.lt.s32.totalorder %s16, 1
      %s217 = scalar_select %p216, %s16, 1
      %s218 = smul.addr %s217, 4
      %s219 = scalar_lea.vmem %s5, %s218
      %v220 = vld [vmem:[%s215] sm:$0xff]
      %v221 = vld [vmem:[%s1] sm:$0xff]
      %v222 = vadd.f32 %v220, %v221
      %v223 = vld [vmem:[%s2] sm:$0x1]
      %v225 = vperm.slane %v223, 0
      %v227 = vadd.f32 %v222, %v225
      %228 = vadd.xlane.f32.xlu0 %v227
      %v229 = vpop.xlane.xlu0 %228
      %v230 = vrcp.pop 128.0
      %v231 = vmul.f32 128.0, %v230
      %v232 = vsub.f32 1.0, %v231
      %v233 = vmul.f32 %v230, %v232
      %v234 = vadd.f32 %v230, %v233
      %vm235 = vweird.f32 %v230
      %v236 = vsel %vm235, %v230, %v234
      %v237 = vmul.f32 %v229, %v236
      %v238 = vsub.f32 %v227, %v237
      %v239 = vmul.f32 %v238, %v238
      %240 = vadd.xlane.f32.xlu0 %v239
      %v241 = vpop.xlane.xlu0 %240
      %v242 = vmul.f32 %v241, %v236
      %v243 = vadd.f32 %v242, 1e-12
      %v244 = vrsqrt.pop %v243
      %v245 = vmul.f32 %v244, %v243
      %v246 = vmul.f32 %v245, %v244
      %v247 = vmul.f32 0.5, %v246
      %v248 = vsub.f32 1.5, %v247
      %v249 = vmul.f32 %v244, %v248
      %vm250 = vweird.f32 %v243
      %vm251 = vweird.f32 %v244
      %vm252 = vmor %vm250, %vm251
      %v253 = vsel %vm252, %v244, %v249
      %v254 = vmul.f32 %v238, %v253
      %v255 = vld [vmem:[%s3] sm:$0x1]
      %v257 = vperm.slane %v255, 0
      %v259 = vmul.f32 %v254, %v257
      %v260 = vld [vmem:[%s4] sm:$0x1]
      %v262 = vperm.slane %v260, 0
      %v264 = vadd.f32 %v259, %v262
      %v265 = vpack.c.bf16 %v264, %v264
      %266 = vst [vmem:[%s219] sm:$0xf] %v265
      %p267 = scmp.lt.s32.totalorder %s16, 1
      %s268 = scalar_select %p267, %s16, 1
      %s269 = smul.addr %s268, 4
      %s270 = scalar_lea.vmem %s5, %s269
      // Predicated region
      $region41: #{sentiment_classifier_forward.6} parent=39 // pred_check
        %p271 = pneg %p144
      $region42: #{sentiment_classifier_forward.6} parent=39 // pred_check_branch
        %273 = sbr.rel (%p271) target = $region44
      $region43: #{sentiment_classifier_forward.6} parent=39 // pred_region
        _
      $region44: #{sentiment_classifier_forward.6} parent=39 // pred_fallthru
        _
    $region40: #{sentiment_classifier_forward.6} parent=5 // pred_fallthru
      _
    %p274 = scmp.le.s32.totalorder 2, %s11
    // Predicated region
    $region45: #{sentiment_classifier_forward.6} parent=5 // pred_check
      %p275 = pneg %p274
    $region46: #{sentiment_classifier_forward.6} parent=5 // pred_check_branch
      %277 = sbr.rel (%p275) target = $region48
    $region47: #{sentiment_classifier_forward.6} parent=5 // pred_region
      %s278 = ssub.s32 %s11, 2
      // Predicated region
      $region49: #{sentiment_classifier_forward.6} parent=47 // pred_check
        %p279 = pneg %p150
      $region50: #{sentiment_classifier_forward.6} parent=47 // pred_check_branch
        %281 = sbr.rel (%p279) target = $region52
      $region51: #{sentiment_classifier_forward.6} parent=47 // pred_region
        %p282 = scmp.lt.s32.totalorder %s17, 1
        %s283 = scalar_select %p282, %s17, 1
        %s284 = smul.addr %s283, 4
        %s285 = scalar_lea.vmem %s5, %s284
      $region52: #{sentiment_classifier_forward.6} parent=47 // pred_fallthru
        _
    $region48: #{sentiment_classifier_forward.6} parent=5 // pred_fallthru
      _
  $region6: #{sentiment_classifier_forward.6} parent=0 // loop_footer
    %s15 = sadd.s32 1, %s11
  $region7: #{sentiment_classifier_forward.6} parent=0 // loop_footer_branch
    %10 = sbr.rel target = $region3
  $region8: #{sentiment_classifier_forward.6} parent=0 // loop_exit
    _

// kernel: sentiment_classifier_forward.11
$region0: #{sentiment_classifier_forward.11}
  #allocation0 [shape = 'u32[]', space=smem, size = 0x4, offset = 0x4, fixed_abs, tag = 'smem constant byte address 0x4 - core index']
  #allocation1 [shape = 'u32[72,128]{1,0:T(1,128)}', space=vmem, size = 0x9000, scoped, tag = 'internal scratch']
  %s0 = inlined_call_operand.vmem [shape: bf16[2,128], index: 0, kind: input, shape index: {}]
  %s1 = inlined_call_operand.vmem [shape: bf16[128,128], index: 1, kind: input, shape index: {}]
  %s2 = inlined_call_operand.vmem [shape: f32[1,128], index: 2, kind: input, shape index: {}]
  %s3 = inlined_call_operand.vmem [shape: f32[128,128], index: 3, kind: input, shape index: {}]
  %s4 = inlined_call_operand.vmem [shape: f32[1,128], index: 4, kind: input, shape index: {}]
  %s5 = inlined_call_operand.hbm [shape: f32[2,128], index: 5, kind: output, shape index: {}]
  %s6 = sld [smem:[#allocation0]]
  $region30: #{sentiment_classifier_forward.11} parent=0
    _
  %s8 = ssub.s32 1, %s6
  %s9 = scalar_select 0, %s8, %s6
  $region1: #{sentiment_classifier_forward.11} parent=0
    #allocation2 [shape = 'u8[1024]{0}', space=vmem, size = 0x400, scoped, tag = 'output window, operand 0, single buffered']
    #allocation3 [shape = 's32[1]{0}', space=sflag, size = 0x4, scoped, tag = 'scoped memory for sentiment_classifier_forward.11']
    %10 = vsyncpa [#allocation3], 0
    // Predicated region
    $region2: #{sentiment_classifier_forward.11} parent=1 // pred_check
      _
    $region3: #{sentiment_classifier_forward.11} parent=1 // pred_check_branch
      %12 = sbr.rel (0) target = $region5
    $region4: #{sentiment_classifier_forward.11} parent=1 // pred_region
      _
    $region5: #{sentiment_classifier_forward.11} parent=1 // pred_fallthru
      _
    // Predicated region
    $region6: #{sentiment_classifier_forward.11} parent=1 // pred_check
      _
    $region7: #{sentiment_classifier_forward.11} parent=1 // pred_check_branch
      %14 = sbr.rel (0) target = $region9
    $region8: #{sentiment_classifier_forward.11} parent=1 // pred_region
      _
    $region9: #{sentiment_classifier_forward.11} parent=1 // pred_fallthru
      _
    // Predicated region
    $region10: #{sentiment_classifier_forward.11} parent=1 // pred_check
      _
    $region11: #{sentiment_classifier_forward.11} parent=1 // pred_check_branch
      %16 = sbr.rel (0) target = $region13
    $region12: #{sentiment_classifier_forward.11} parent=1 // pred_region
      _
    $region13: #{sentiment_classifier_forward.11} parent=1 // pred_fallthru
      _
    // Predicated region
    $region14: #{sentiment_classifier_forward.11} parent=1 // pred_check
      _
    $region15: #{sentiment_classifier_forward.11} parent=1 // pred_check_branch
      %18 = sbr.rel (0) target = $region17
    $region16: #{sentiment_classifier_forward.11} parent=1 // pred_region
      _
    $region17: #{sentiment_classifier_forward.11} parent=1 // pred_fallthru
      _
    // Predicated region
    $region18: #{sentiment_classifier_forward.11} parent=1 // pred_check
      _
    $region19: #{sentiment_classifier_forward.11} parent=1 // pred_check_branch
      %20 = sbr.rel (0) target = $region21
    $region20: #{sentiment_classifier_forward.11} parent=1 // pred_region
      _
    $region21: #{sentiment_classifier_forward.11} parent=1 // pred_fallthru
      _
    %v21 = vld [vmem:[%s0] sm:$0x1]
    %v22 = vld [vmem:[%s1] sm:$0xf]
    %v23 = vld [vmem:[%s1 + $0x4] sm:$0xf]
    %v24 = vld [vmem:[%s1 + $0x8] sm:$0xf]
    %v25 = vld [vmem:[%s1 + $0xc] sm:$0xf]
    %v26 = vld [vmem:[%s1 + $0x10] sm:$0xf]
    %v27 = vld [vmem:[%s1 + $0x14] sm:$0xf]
    %v28 = vld [vmem:[%s1 + $0x18] sm:$0xf]
    %v29 = vld [vmem:[%s1 + $0x1c] sm:$0xf]
    %v30 = vld [vmem:[%s1 + $0x20] sm:$0xf]
    %v31 = vld [vmem:[%s1 + $0x24] sm:$0xf]
    %v32 = vld [vmem:[%s1 + $0x28] sm:$0xf]
    %v33 = vld [vmem:[%s1 + $0x2c] sm:$0xf]
    %v34 = vld [vmem:[%s1 + $0x30] sm:$0xf]
    %v35 = vld [vmem:[%s1 + $0x34] sm:$0xf]
    %v36 = vld [vmem:[%s1 + $0x38] sm:$0xf]
    %v37 = vld [vmem:[%s1 + $0x3c] sm:$0xf]
    %v38 = vld [vmem:[%s2] sm:$0x1]
    %v40 = vperm.slane %v38, 0
    %v58 = vunpack.c.l.b16 %v22
    %v59 = vunpack.c.l.b16 %v23
    %v60 = vunpack.c.l.b16 %v24
    %v61 = vunpack.c.l.b16 %v25
    %v62 = vunpack.c.l.b16 %v26
    %v63 = vunpack.c.l.b16 %v27
    %v64 = vunpack.c.l.b16 %v28
    %v65 = vunpack.c.l.b16 %v29
    %v66 = vunpack.c.l.b16 %v30
    %v67 = vunpack.c.l.b16 %v31
    %v68 = vunpack.c.l.b16 %v32
    %v69 = vunpack.c.l.b16 %v33
    %v70 = vunpack.c.l.b16 %v34
    %v71 = vunpack.c.l.b16 %v35
    %v72 = vunpack.c.l.b16 %v36
    %v73 = vunpack.c.l.b16 %v37
    %v74 = vpack.c.b16 %v59, %v58
    %v75 = vpack.c.b16 %v61, %v60
    %v76 = vpack.c.b16 %v63, %v62
    %v77 = vpack.c.b16 %v65, %v64
    %v78 = vpack.c.b16 %v67, %v66
    %v79 = vpack.c.b16 %v69, %v68
    %v80 = vpack.c.b16 %v71, %v70
    %v81 = vpack.c.b16 %v73, %v72
    %90 = vmatpush.bf16.msra.mxu0 %v81
    %91 = vmatpush.bf16.msra.mxu0 %v80
    %92 = vmatpush.bf16.msra.mxu0 %v79
    %93 = vmatpush.bf16.msra.mxu0 %v78
    %94 = vmatpush.bf16.msra.mxu0 %v77
    %95 = vmatpush.bf16.msra.mxu0 %v76
    %96 = vmatpush.bf16.msra.mxu0 %v75
    %97 = vmatpush.bf16.msra.mxu0 %v74
    %98 = vmatmul.bf16.gmra.mxu0 %v21
    %v99 = vpop.f32.mrf.mxu0
    %v100 = vadd.f32 %v40, %v99
    %v101 = vpop.f32.mrf.mxu0
    %102 = vdwg.mxu0
    %v103 = vtanh.pop %v100
    %v104 = vld [vmem:[%s3] sm:$0xff]
    %v105 = vld [vmem:[%s3 + $0x8] sm:$0xff]
    %v106 = vld [vmem:[%s3 + $0x10] sm:$0xff]
    %v107 = vld [vmem:[%s3 + $0x18] sm:$0xff]
    %v108 = vld [vmem:[%s3 + $0x20] sm:$0xff]
    %v109 = vld [vmem:[%s3 + $0x28] sm:$0xff]
    %v110 = vld [vmem:[%s3 + $0x30] sm:$0xff]
    %v111 = vld [vmem:[%s3 + $0x38] sm:$0xff]
    %v112 = vld [vmem:[%s3 + $0x40] sm:$0xff]
    %v113 = vld [vmem:[%s3 + $0x48] sm:$0xff]
    %v114 = vld [vmem:[%s3 + $0x50] sm:$0xff]
    %v115 = vld [vmem:[%s3 + $0x58] sm:$0xff]
    %v116 = vld [vmem:[%s3 + $0x60] sm:$0xff]
    %v117 = vld [vmem:[%s3 + $0x68] sm:$0xff]
    %v118 = vld [vmem:[%s3 + $0x70] sm:$0xff]
    %v119 = vld [vmem:[%s3 + $0x78] sm:$0xff]
    %v120 = vld [vmem:[%s4] sm:$0x1]
    %v122 = vperm.slane %v120, 0
    %124 = vmatpush.msra.mxu0 %v119
    %125 = vmatpush.msra.mxu0 %v118
    %126 = vmatpush.msra.mxu0 %v117
    %127 = vmatpush.msra.mxu0 %v116
    %128 = vmatpush.msra.mxu0 %v115
    %129 = vmatpush.msra.mxu0 %v114
    %130 = vmatpush.msra.mxu0 %v113
    %131 = vmatpush.msra.mxu0 %v112
    %132 = vmatpush.msra.mxu0 %v111
    %133 = vmatpush.msra.mxu0 %v110
    %134 = vmatpush.msra.mxu0 %v109
    %135 = vmatpush.msra.mxu0 %v108
    %136 = vmatpush.msra.mxu0 %v107
    %137 = vmatpush.msra.mxu0 %v106
    %138 = vmatpush.msra.mxu0 %v105
    %139 = vmatpush.msra.mxu0 %v104
    %140 = vmatmul.f32.gmra.mxu0 %v103
    %v141 = vpop.f32.mrf.mxu0
    %v142 = vadd.f32 %v122, %v141
    %143 = vdwg.mxu0
    %144 = vst [vmem:[#allocation2] sm:$0x3] %v142
    // Predicated region
    $region22: #{sentiment_classifier_forward.11} parent=1 // pred_check
      _
    $region23: #{sentiment_classifier_forward.11} parent=1 // pred_check_branch
      %146 = sbr.rel (0) target = $region25
    $region24: #{sentiment_classifier_forward.11} parent=1 // pred_region
      %148 = vsyncadd [#allocation3], 0
      %s150 = sshll.u32 [#allocation2], 4
      %s151 = int_to_ptr.vmem [resolvable:$true] %s150
      %s152 = sshll.u32 %s5, 4
      %s153 = int_to_ptr.hbm [resolvable:$true] %s152
      %155 = dma.vmem_to_hbm [thread:$0]  %s151, 32, %s153, [#allocation3]
    $region25: #{sentiment_classifier_forward.11} parent=1 // pred_fallthru
      _
    // Predicated region
    $region26: #{sentiment_classifier_forward.11} parent=1 // pred_check
      _
    $region27: #{sentiment_classifier_forward.11} parent=1 // pred_check_branch
      %157 = sbr.rel (0) target = $region29
    $region28: #{sentiment_classifier_forward.11} parent=1 // pred_region
      %159 = dma.done [#allocation3], 32
    $region29: #{sentiment_classifier_forward.11} parent=1 // pred_fallthru
      _
    %160 = vsyncpa [#allocation3], 1

// kernel: sentiment_classifier_forward.8
$region0: #{sentiment_classifier_forward.8}
  #allocation0 [shape = 'u32[]', space=smem, size = 0x4, offset = 0x4, fixed_abs, tag = 'smem constant byte address 0x4 - core index']
  #allocation1 [shape = 'u32[72,128]{1,0:T(1,128)}', space=vmem, size = 0x9000, scoped, tag = 'internal scratch']
  %s0 = inlined_call_operand.vmem [shape: bf16[16,128], index: 0, kind: input, shape index: {}]
  %s1 = inlined_call_operand.vmem [shape: bf16[128,256], index: 1, kind: input, shape index: {}]
  %s2 = inlined_call_operand.vmem [shape: f32[1,256], index: 2, kind: input, shape index: {}]
  %s3 = inlined_call_operand.vmem [shape: bf16[256,128], index: 3, kind: input, shape index: {}]
  %s4 = inlined_call_operand.vmem [shape: f32[1,128], index: 4, kind: input, shape index: {}]
  %s5 = inlined_call_operand.vmem [shape: f32[1,128], index: 5, kind: input, shape index: {}]
  %s6 = inlined_call_operand.vmem [shape: f32[1,128], index: 6, kind: input, shape index: {}]
  %s7 = inlined_call_operand.vmem [shape: bf16[16,128], index: 7, kind: output, shape index: {}]
  %s8 = sld [smem:[#allocation0]]
  $region38: #{sentiment_classifier_forward.8} parent=0
    _
  %s10 = ssub.s32 1, %s8
  %s11 = scalar_select 0, %s10, %s8
  // Predicated region
  $region2: #{sentiment_classifier_forward.8} parent=0 // pred_check
    _
  $region3: #{sentiment_classifier_forward.8} parent=0 // pred_check_branch
    %13 = sbr.rel (0) target = $region5
  $region4: #{sentiment_classifier_forward.8} parent=0 // pred_region
    _
  $region5: #{sentiment_classifier_forward.8} parent=0 // pred_fallthru
    _
  // Predicated region
  $region6: #{sentiment_classifier_forward.8} parent=0 // pred_check
    _
  $region7: #{sentiment_classifier_forward.8} parent=0 // pred_check_branch
    %15 = sbr.rel (0) target = $region9
  $region8: #{sentiment_classifier_forward.8} parent=0 // pred_region
    _
  $region9: #{sentiment_classifier_forward.8} parent=0 // pred_fallthru
    _
  // Predicated region
  $region10: #{sentiment_classifier_forward.8} parent=0 // pred_check
    _
  $region11: #{sentiment_classifier_forward.8} parent=0 // pred_check_branch
    %17 = sbr.rel (0) target = $region13
  $region12: #{sentiment_classifier_forward.8} parent=0 // pred_region
    _
  $region13: #{sentiment_classifier_forward.8} parent=0 // pred_fallthru
    _
  // Predicated region
  $region14: #{sentiment_classifier_forward.8} parent=0 // pred_check
    _
  $region15: #{sentiment_classifier_forward.8} parent=0 // pred_check_branch
    %19 = sbr.rel (0) target = $region17
  $region16: #{sentiment_classifier_forward.8} parent=0 // pred_region
    _
  $region17: #{sentiment_classifier_forward.8} parent=0 // pred_fallthru
    _
  // Predicated region
  $region18: #{sentiment_classifier_forward.8} parent=0 // pred_check
    _
  $region19: #{sentiment_classifier_forward.8} parent=0 // pred_check_branch
    %21 = sbr.rel (0) target = $region21
  $region20: #{sentiment_classifier_forward.8} parent=0 // pred_region
    _
  $region21: #{sentiment_classifier_forward.8} parent=0 // pred_fallthru
    _
  // Predicated region
  $region22: #{sentiment_classifier_forward.8} parent=0 // pred_check
    _
  $region23: #{sentiment_classifier_forward.8} parent=0 // pred_check_branch
    %23 = sbr.rel (0) target = $region25
  $region24: #{sentiment_classifier_forward.8} parent=0 // pred_region
    _
  $region25: #{sentiment_classifier_forward.8} parent=0 // pred_fallthru
    _
  // Predicated region
  $region26: #{sentiment_classifier_forward.8} parent=0 // pred_check
    _
  $region27: #{sentiment_classifier_forward.8} parent=0 // pred_check_branch
    %25 = sbr.rel (0) target = $region29
  $region28: #{sentiment_classifier_forward.8} parent=0 // pred_region
    _
  $region29: #{sentiment_classifier_forward.8} parent=0 // pred_fallthru
    _
  %v26 = vld [vmem:[%s0] sm:$0xf]
  %v27 = vld [vmem:[%s0 + $0x4] sm:$0xf]
  %v28 = vld [vmem:[%s1] sm:$0xff]
  %v29 = vld [vmem:[%s1 + $0x8] sm:$0xff]
  %v30 = vld [vmem:[%s1 + $0x10] sm:$0xff]
  %v31 = vld [vmem:[%s1 + $0x18] sm:$0xff]
  %v32 = vld [vmem:[%s1 + $0x20] sm:$0xff]
  %v33 = vld [vmem:[%s1 + $0x28] sm:$0xff]
  %v34 = vld [vmem:[%s1 + $0x30] sm:$0xff]
  %v35 = vld [vmem:[%s1 + $0x38] sm:$0xff]
  %v36 = vld [vmem:[%s1 + $0x40] sm:$0xff]
  %v37 = vld [vmem:[%s1 + $0x48] sm:$0xff]
  %v38 = vld [vmem:[%s1 + $0x50] sm:$0xff]
  %v39 = vld [vmem:[%s1 + $0x58] sm:$0xff]
  %v40 = vld [vmem:[%s1 + $0x60] sm:$0xff]
  %v41 = vld [vmem:[%s1 + $0x68] sm:$0xff]
  %v42 = vld [vmem:[%s1 + $0x70] sm:$0xff]
  %v43 = vld [vmem:[%s1 + $0x78] sm:$0xff]
  %v44 = vld [vmem:[%s2] sm:$0x3]
  %v46 = vperm.slane %v44, 0
  %v47 = vperm.slane %v44, 1
  %v52 = vunpack.c.l.b16 %v26
  %v53 = vunpack.c.l.b16 %v27
  %v54 = vpack.c.b16 %v53, %v52
  %v72 = vunpack.c.l.b16 %v28
  %v73 = vunpack.c.h.b16 %v28
  %v74 = vunpack.c.l.b16 %v29
  %v75 = vunpack.c.h.b16 %v29
  %v76 = vunpack.c.l.b16 %v30
  %v77 = vunpack.c.h.b16 %v30
  %v78 = vunpack.c.l.b16 %v31
  %v79 = vunpack.c.h.b16 %v31
  %v80 = vunpack.c.l.b16 %v32
  %v81 = vunpack.c.h.b16 %v32
  %v82 = vunpack.c.l.b16 %v33
  %v83 = vunpack.c.h.b16 %v33
  %v84 = vunpack.c.l.b16 %v34
  %v85 = vunpack.c.h.b16 %v34
  %v86 = vunpack.c.l.b16 %v35
  %v87 = vunpack.c.h.b16 %v35
  %v88 = vunpack.c.l.b16 %v36
  %v89 = vunpack.c.h.b16 %v36
  %v90 = vunpack.c.l.b16 %v37
  %v91 = vunpack.c.h.b16 %v37
  %v92 = vunpack.c.l.b16 %v38
  %v93 = vunpack.c.h.b16 %v38
  %v94 = vunpack.c.l.b16 %v39
  %v95 = vunpack.c.h.b16 %v39
  %v96 = vunpack.c.l.b16 %v40
  %v97 = vunpack.c.h.b16 %v40
  %v98 = vunpack.c.l.b16 %v41
  %v99 = vunpack.c.h.b16 %v41
  %v100 = vunpack.c.l.b16 %v42
  %v101 = vunpack.c.h.b16 %v42
  %v102 = vunpack.c.l.b16 %v43
  %v103 = vunpack.c.h.b16 %v43
  %v104 = vpack.c.b16 %v74, %v72
  %v105 = vpack.c.b16 %v75, %v73
  %v106 = vpack.c.b16 %v78, %v76
  %v107 = vpack.c.b16 %v79, %v77
  %v108 = vpack.c.b16 %v82, %v80
  %v109 = vpack.c.b16 %v83, %v81
  %v110 = vpack.c.b16 %v86, %v84
  %v111 = vpack.c.b16 %v87, %v85
  %v112 = vpack.c.b16 %v90, %v88
  %v113 = vpack.c.b16 %v91, %v89
  %v114 = vpack.c.b16 %v94, %v92
  %v115 = vpack.c.b16 %v95, %v93
  %v116 = vpack.c.b16 %v98, %v96
  %v117 = vpack.c.b16 %v99, %v97
  %v118 = vpack.c.b16 %v102, %v100
  %v119 = vpack.c.b16 %v103, %v101
  %136 = vmatpush.bf16.msra.mxu0 %v118
  %137 = vmatpush.bf16.msra.mxu0 %v116
  %138 = vmatpush.bf16.msra.mxu0 %v114
  %139 = vmatpush.bf16.msra.mxu0 %v112
  %140 = vmatpush.bf16.msra.mxu0 %v110
  %141 = vmatpush.bf16.msra.mxu0 %v108
  %142 = vmatpush.bf16.msra.mxu0 %v106
  %143 = vmatpush.bf16.msra.mxu0 %v104
  %144 = vmatmul.bf16.gmra.mxu0 %v54
  %v145 = vpop.f32.mrf.mxu0
  %v146 = vadd.f32 %v46, %v145
  %v147 = vpop.f32.mrf.mxu0
  %v148 = vadd.f32 %v46, %v147
  %149 = vdwg.mxu0
  %150 = vmatpush.bf16.msra.mxu0 %v119
  %151 = vmatpush.bf16.msra.mxu0 %v117
  %152 = vmatpush.bf16.msra.mxu0 %v115
  %153 = vmatpush.bf16.msra.mxu0 %v113
  %154 = vmatpush.bf16.msra.mxu0 %v111
  %155 = vmatpush.bf16.msra.mxu0 %v109
  %156 = vmatpush.bf16.msra.mxu0 %v107
  %157 = vmatpush.bf16.msra.mxu0 %v105
  %158 = vmatmul.bf16.gmra.mxu0 %v54
  %v159 = vpop.f32.mrf.mxu0
  %v160 = vadd.f32 %v47, %v159
  %v161 = vpop.f32.mrf.mxu0
  %v162 = vadd.f32 %v47, %v161
  %163 = vdwg.mxu0
  %v164 = vmul.f32 %v146, 0.5
  %v165 = vmul.f32 %v160, 0.5
  %v166 = vmul.f32 %v148, 0.5
  %v167 = vmul.f32 %v162, 0.5
  %v168 = vmul.f32 %v146, 0.044715
  %v169 = vmul.f32 %v160, 0.044715
  %v170 = vmul.f32 %v148, 0.044715
  %v171 = vmul.f32 %v162, 0.044715
  %v172 = vmul.f32 %v168, %v146
  %v173 = vmul.f32 %v169, %v160
  %v174 = vmul.f32 %v170, %v148
  %v175 = vmul.f32 %v171, %v162
  %v176 = vmul.f32 %v172, %v146
  %v177 = vmul.f32 %v173, %v160
  %v178 = vmul.f32 %v174, %v148
  %v179 = vmul.f32 %v175, %v162
  %v180 = vadd.f32 %v146, %v176
  %v181 = vadd.f32 %v160, %v177
  %v182 = vadd.f32 %v148, %v178
  %v183 = vadd.f32 %v162, %v179
  %v184 = vmul.f32 %v180, 0.7978846
  %v185 = vmul.f32 %v181, 0.7978846
  %v186 = vmul.f32 %v182, 0.7978846
  %v187 = vmul.f32 %v183, 0.7978846
  %v188 = vtanh.pop %v184
  %v189 = vtanh.pop %v185
  %v190 = vtanh.pop %v186
  %v191 = vtanh.pop %v187
  %v192 = vadd.f32 %v188, 1.0
  %v193 = vadd.f32 %v189, 1.0
  %v194 = vadd.f32 %v190, 1.0
  %v195 = vadd.f32 %v191, 1.0
  %v196 = vmul.f32 %v164, %v192
  %v197 = vmul.f32 %v165, %v193
  %v198 = vmul.f32 %v166, %v194
  %v199 = vmul.f32 %v167, %v195
  %v200 = vpack.c.bf16 %v198, %v196
  %v201 = vpack.c.bf16 %v199, %v197
  %v202 = vld [vmem:[%s3] sm:$0xf]
  %v203 = vld [vmem:[%s3 + $0x4] sm:$0xf]
  %v204 = vld [vmem:[%s3 + $0x8] sm:$0xf]
  %v205 = vld [vmem:[%s3 + $0xc] sm:$0xf]
  %v206 = vld [vmem:[%s3 + $0x10] sm:$0xf]
  %v207 = vld [vmem:[%s3 + $0x14] sm:$0xf]
  %v208 = vld [vmem:[%s3 + $0x18] sm:$0xf]
  %v209 = vld [vmem:[%s3 + $0x1c] sm:$0xf]
  %v210 = vld [vmem:[%s3 + $0x20] sm:$0xf]
  %v211 = vld [vmem:[%s3 + $0x24] sm:$0xf]
  %v212 = vld [vmem:[%s3 + $0x28] sm:$0xf]
  %v213 = vld [vmem:[%s3 + $0x2c] sm:$0xf]
  %v214 = vld [vmem:[%s3 + $0x30] sm:$0xf]
  %v215 = vld [vmem:[%s3 + $0x34] sm:$0xf]
  %v216 = vld [vmem:[%s3 + $0x38] sm:$0xf]
  %v217 = vld [vmem:[%s3 + $0x3c] sm:$0xf]
  %v218 = vld [vmem:[%s3 + $0x40] sm:$0xf]
  %v219 = vld [vmem:[%s3 + $0x44] sm:$0xf]
  %v220 = vld [vmem:[%s3 + $0x48] sm:$0xf]
  %v221 = vld [vmem:[%s3 + $0x4c] sm:$0xf]
  %v222 = vld [vmem:[%s3 + $0x50] sm:$0xf]
  %v223 = vld [vmem:[%s3 + $0x54] sm:$0xf]
  %v224 = vld [vmem:[%s3 + $0x58] sm:$0xf]
  %v225 = vld [vmem:[%s3 + $0x5c] sm:$0xf]
  %v226 = vld [vmem:[%s3 + $0x60] sm:$0xf]
  %v227 = vld [vmem:[%s3 + $0x64] sm:$0xf]
  %v228 = vld [vmem:[%s3 + $0x68] sm:$0xf]
  %v229 = vld [vmem:[%s3 + $0x6c] sm:$0xf]
  %v230 = vld [vmem:[%s3 + $0x70] sm:$0xf]
  %v231 = vld [vmem:[%s3 + $0x74] sm:$0xf]
  %v232 = vld [vmem:[%s3 + $0x78] sm:$0xf]
  %v233 = vld [vmem:[%s3 + $0x7c] sm:$0xf]
  %v234 = vld [vmem:[%s4] sm:$0x1]
  %v236 = vperm.slane %v234, 0
  %v270 = vunpack.c.l.b16 %v202
  %v271 = vunpack.c.l.b16 %v203
  %v272 = vunpack.c.l.b16 %v204
  %v273 = vunpack.c.l.b16 %v205
  %v274 = vunpack.c.l.b16 %v206
  %v275 = vunpack.c.l.b16 %v207
  %v276 = vunpack.c.l.b16 %v208
  %v277 = vunpack.c.l.b16 %v209
  %v278 = vunpack.c.l.b16 %v210
  %v279 = vunpack.c.l.b16 %v211
  %v280 = vunpack.c.l.b16 %v212
  %v281 = vunpack.c.l.b16 %v213
  %v282 = vunpack.c.l.b16 %v214
  %v283 = vunpack.c.l.b16 %v215
  %v284 = vunpack.c.l.b16 %v216
  %v285 = vunpack.c.l.b16 %v217
  %v286 = vunpack.c.l.b16 %v218
  %v287 = vunpack.c.l.b16 %v219
  %v288 = vunpack.c.l.b16 %v220
  %v289 = vunpack.c.l.b16 %v221
  %v290 = vunpack.c.l.b16 %v222
  %v291 = vunpack.c.l.b16 %v223
  %v292 = vunpack.c.l.b16 %v224
  %v293 = vunpack.c.l.b16 %v225
  %v294 = vunpack.c.l.b16 %v226
  %v295 = vunpack.c.l.b16 %v227
  %v296 = vunpack.c.l.b16 %v228
  %v297 = vunpack.c.l.b16 %v229
  %v298 = vunpack.c.l.b16 %v230
  %v299 = vunpack.c.l.b16 %v231
  %v300 = vunpack.c.l.b16 %v232
  %v301 = vunpack.c.l.b16 %v233
  %v302 = vpack.c.b16 %v271, %v270
  %v303 = vpack.c.b16 %v273, %v272
  %v304 = vpack.c.b16 %v275, %v274
  %v305 = vpack.c.b16 %v277, %v276
  %v306 = vpack.c.b16 %v279, %v278
  %v307 = vpack.c.b16 %v281, %v280
  %v308 = vpack.c.b16 %v283, %v282
  %v309 = vpack.c.b16 %v285, %v284
  %v310 = vpack.c.b16 %v287, %v286
  %v311 = vpack.c.b16 %v289, %v288
  %v312 = vpack.c.b16 %v291, %v290
  %v313 = vpack.c.b16 %v293, %v292
  %v314 = vpack.c.b16 %v295, %v294
  %v315 = vpack.c.b16 %v297, %v296
  %v316 = vpack.c.b16 %v299, %v298
  %v317 = vpack.c.b16 %v301, %v300
  %334 = vmatpush.bf16.msra.mxu0 %v309
  %335 = vmatpush.bf16.msra.mxu0 %v308
  %336 = vmatpush.bf16.msra.mxu0 %v307
  %337 = vmatpush.bf16.msra.mxu0 %v306
  %338 = vmatpush.bf16.msra.mxu0 %v305
  %339 = vmatpush.bf16.msra.mxu0 %v304
  %340 = vmatpush.bf16.msra.mxu0 %v303
  %341 = vmatpush.bf16.msra.mxu0 %v302
  %342 = vmatmul.bf16.gmra.mxu0 %v200
  %v343 = vpop.f32.mrf.mxu0
  %v344 = vadd.f32 %v236, %v343
  %v345 = vpop.f32.mrf.mxu0
  %v346 = vadd.f32 %v236, %v345
  %347 = vdwg.mxu0
  %348 = vmatpush.bf16.msra.mxu0 %v317
  %349 = vmatpush.bf16.msra.mxu0 %v316
  %350 = vmatpush.bf16.msra.mxu0 %v315
  %351 = vmatpush.bf16.msra.mxu0 %v314
  %352 = vmatpush.bf16.msra.mxu0 %v313
  %353 = vmatpush.bf16.msra.mxu0 %v312
  %354 = vmatpush.bf16.msra.mxu0 %v311
  %355 = vmatpush.bf16.msra.mxu0 %v310
  %356 = vmatmul.bf16.gmra.mxu0 %v201
  %v357 = vpop.f32.mrf.mxu0
  %v358 = vadd.f32 %v344, %v357
  %v359 = vpop.f32.mrf.mxu0
  %v360 = vadd.f32 %v346, %v359
  %361 = vdwg.mxu0
  %v362 = vunpack.c.l.bf16 %v26
  %v363 = vunpack.c.l.bf16 %v27
  %v364 = vadd.f32 %v358, %v362
  %v365 = vadd.f32 %v360, %v363
  %366 = vadd.xlane.f32.xlu0 %v364
  %v367 = vpop.xlane.xlu0 %366
  %368 = vadd.xlane.f32.xlu0 %v365
  %v369 = vpop.xlane.xlu0 %368
  %v370 = vrcp.pop 128.0
  %v371 = vmul.f32 128.0, %v370
  %v372 = vsub.f32 1.0, %v371
  %v373 = vmul.f32 %v370, %v372
  %v374 = vadd.f32 %v370, %v373
  %vm375 = vweird.f32 %v370
  %v376 = vsel %vm375, %v370, %v374
  %v377 = vmul.f32 %v367, %v376
  %v378 = vmul.f32 %v369, %v376
  %v379 = vsub.f32 %v364, %v377
  %v380 = vsub.f32 %v365, %v378
  %v381 = vmul.f32 %v379, %v379
  %v382 = vmul.f32 %v380, %v380
  %383 = vadd.xlane.f32.xlu0 %v381
  %v384 = vpop.xlane.xlu0 %383
  %385 = vadd.xlane.f32.xlu0 %v382
  %v386 = vpop.xlane.xlu0 %385
  %v387 = vmul.f32 %v384, %v376
  %v388 = vmul.f32 %v386, %v376
  %v389 = vadd.f32 %v387, 1e-12
  %v390 = vadd.f32 %v388, 1e-12
  %v391 = vrsqrt.pop %v389
  %v392 = vmul.f32 %v391, %v389
  %v393 = vmul.f32 %v392, %v391
  %v394 = vmul.f32 0.5, %v393
  %v395 = vsub.f32 1.5, %v394
  %v396 = vmul.f32 %v391, %v395
  %vm397 = vweird.f32 %v389
  %vm398 = vweird.f32 %v391
  %vm399 = vmor %vm397, %vm398
  %v400 = vsel %vm399, %v391, %v396
  %v401 = vrsqrt.pop %v390
  %v402 = vmul.f32 %v401, %v390
  %v403 = vmul.f32 %v402, %v401
  %v404 = vmul.f32 0.5, %v403
  %v405 = vsub.f32 1.5, %v404
  %v406 = vmul.f32 %v401, %v405
  %vm407 = vweird.f32 %v390
  %vm408 = vweird.f32 %v401
  %vm409 = vmor %vm407, %vm408
  %v410 = vsel %vm409, %v401, %v406
  %v411 = vmul.f32 %v379, %v400
  %v412 = vmul.f32 %v380, %v410
  %v413 = vld [vmem:[%s5] sm:$0x1]
  %v415 = vperm.slane %v413, 0
  %v417 = vmul.f32 %v411, %v415
  %v418 = vmul.f32 %v412, %v415
  %v419 = vld [vmem:[%s6] sm:$0x1]
  %v421 = vperm.slane %v419, 0
  %v423 = vadd.f32 %v417, %v421
  %v424 = vadd.f32 %v418, %v421
  %v425 = vpack.c.bf16 %v423, %v423
  %v426 = vpack.c.bf16 %v424, %v424
  %427 = vst [vmem:[%s7] sm:$0xf] %v425
  %428 = vst [vmem:[%s7 + $0x4] sm:$0xf] %v426
  // Predicated region
  $region30: #{sentiment_classifier_forward.8} parent=0 // pred_check
    _
  $region31: #{sentiment_classifier_forward.8} parent=0 // pred_check_branch
    %430 = sbr.rel (0) target = $region33
  $region32: #{sentiment_classifier_forward.8} parent=0 // pred_region
    _
  $region33: #{sentiment_classifier_forward.8} parent=0 // pred_fallthru
    _
  // Predicated region
  $region34: #{sentiment_classifier_forward.8} parent=0 // pred_check
    _
  $region35: #{sentiment_classifier_forward.8} parent=0 // pred_check_branch
    %432 = sbr.rel (0) target = $region37
  $region36: #{sentiment_classifier_forward.8} parent=0 // pred_region
    _
  $region37: #{sentiment_classifier_forward.8} parent=0 // pred_fallthru
    _

// kernel: sentiment_classifier_forward.7
$region0: #{sentiment_classifier_forward.7}
  #allocation0 [shape = 'u32[]', space=smem, size = 0x4, offset = 0x4, fixed_abs, tag = 'smem constant byte address 0x4 - core index']
  #allocation1 [shape = 'u32[72,128]{1,0:T(1,128)}', space=vmem, size = 0x9000, scoped, tag = 'internal scratch']
  %s0 = inlined_call_operand.vmem [shape: bf16[2,8,128], index: 0, kind: input, shape index: {}]
  %s1 = inlined_call_operand.vmem [shape: f32[2,1,8], index: 1, kind: input, shape index: {}]
  %s2 = inlined_call_operand.vmem [shape: bf16[4,128,32], index: 2, kind: input, shape index: {}]
  %s3 = inlined_call_operand.vmem [shape: bf16[4,128,32], index: 3, kind: input, shape index: {}]
  %s4 = inlined_call_operand.vmem [shape: bf16[4,128,32], index: 4, kind: input, shape index: {}]
  %s5 = inlined_call_operand.vmem [shape: f32[4,1,32], index: 5, kind: input, shape index: {}]
  %s6 = inlined_call_operand.vmem [shape: f32[4,1,32], index: 6, kind: input, shape index: {}]
  %s7 = inlined_call_operand.vmem [shape: f32[4,1,32], index: 7, kind: input, shape index: {}]
  %s8 = inlined_call_operand.vmem [shape: bf16[4,32,128], index: 8, kind: input, shape index: {}]
  %s9 = inlined_call_operand.vmem [shape: f32[1,128], index: 9, kind: input, shape index: {}]
  %s10 = inlined_call_operand.vmem [shape: f32[1,128], index: 10, kind: input, shape index: {}]
  %s11 = inlined_call_operand.vmem [shape: f32[1,128], index: 11, kind: input, shape index: {}]
  %s12 = inlined_call_operand.vmem [shape: bf16[2,8,128], index: 12, kind: output, shape index: {}]
  %s13 = sld [smem:[#allocation0]]
  $region81: #{sentiment_classifier_forward.7} parent=0
    _
  %s15 = ssub.s32 1, %s13
  %s16 = scalar_select 0, %s15, %s13
  loop: start=0, step=1, limit=4
  $region2: #{sentiment_classifier_forward.7} parent=0 // loop_pre_header
    _
  $region3: #{sentiment_classifier_forward.7} parent=0 // loop_header
    %s18 = sphi 0, %s22
    %p19 = scmp.ge.s32.totalorder %s18, 4
    %s28 = sphi 0, %s30
    %s31 = sphi 0, %s28
    %s32 = sphi 0, %s31
    %s48 = sphi 0, %s32
    %s54 = sphi 0, %s56
    %s57 = sphi 0, %s54
    %s58 = sphi 0, %s57
    %s74 = sphi 0, %s58
    %s78 = sphi 0, %s78
    %s80 = sphi 0, %s78
    %s81 = sphi 0, %s80
    %s95 = sphi 0, %s81
    %s99 = sphi 0, %s99
    %s101 = sphi 0, %s99
    %s102 = sphi 0, %s101
    %s116 = sphi 0, %s102
    %s120 = sphi 0, %s120
    %s122 = sphi 0, %s120
    %s123 = sphi 0, %s122
    %s137 = sphi 0, %s123
    %s141 = sphi 0, %s141
    %s143 = sphi 0, %s141
    %s144 = sphi 0, %s143
    %s158 = sphi 0, %s144
    %s162 = sphi 0, %s162
    %s164 = sphi 0, %s162
    %s165 = sphi 0, %s164
    %s179 = sphi 0, %s165
    %s183 = sphi 0, %s183
    %s185 = sphi 0, %s183
    %s186 = sphi 0, %s185
    %s200 = sphi 0, %s186
    %s204 = sphi 0, %s204
    %s206 = sphi 0, %s204
    %s207 = sphi 0, %s206
    %s221 = sphi 0, %s207
    %s225 = sphi 0, %s225
    %s227 = sphi 0, %s225
    %s228 = sphi 0, %s227
    %s242 = sphi 0, %s228
    %s246 = sphi 0, %s246
    %s248 = sphi 0, %s246
    %s249 = sphi 0, %s248
    %s263 = sphi 0, %s249
    %s267 = sphi 0, %s267
    %s269 = sphi 0, %s267
    %s270 = sphi 0, %s269
    %s284 = sphi 0, %s270
    %s290 = sphi 0, %s292
    %s293 = sphi 0, %s290
    %s294 = sphi 0, %s293
    %s310 = sphi 0, %s294
  $region4: #{sentiment_classifier_forward.7} parent=0 // loop_header_branch
    %21 = sbr.rel (%p19) target = $region8
  $region5: #{sentiment_classifier_forward.7} parent=0 // loop_body
    %s23 = ssub.s32 %s18, 1
    %s24 = ssub.s32 %s18, 2
    %s25 = sadd.s32 %s18, 1
    %s26 = ssub.s32 %s18, %s25
    %p27 = scmp.eq.s32.totalorder %s26, 0
    %s29 = sadd.s32 %s28, 1
    %s30 = scalar_select %p27, %s28, %s29
    %p33 = pneg %p27
    %p34 = scmp.eq.s32.totalorder %s18, 1
    %p35 = por %p33, %p34
    %p36 = scmp.ne.s32.totalorder %s28, %s31
    %p37 = scmp.eq.s32.totalorder %s18, 0
    %p38 = por %p36, %p37
    %p39 = scmp.ne.s32.totalorder %s28, %s31
    %p40 = scmp.eq.s32.totalorder %s23, 1
    %p41 = por %p39, %p40
    %p42 = scmp.ne.s32.totalorder %s31, %s32
    %p43 = scmp.eq.s32.totalorder %s23, 0
    %p44 = por %p42, %p43
    %p45 = scmp.ne.s32.totalorder %s31, %s32
    %p46 = scmp.eq.s32.totalorder %s24, 1
    %p47 = por %p45, %p46
    %p49 = scmp.ne.s32.totalorder %s32, %s48
    %p50 = scmp.eq.s32.totalorder %s24, 0
    %p51 = por %p49, %p50
    %s52 = ssub.s32 %s18, %s25
    %p53 = scmp.eq.s32.totalorder %s52, 0
    %s55 = sadd.s32 %s54, 1
    %s56 = scalar_select %p53, %s54, %s55
    %p59 = pneg %p53
    %p60 = scmp.eq.s32.totalorder %s18, 1
    %p61 = por %p59, %p60
    %p62 = scmp.ne.s32.totalorder %s54, %s57
    %p63 = scmp.eq.s32.totalorder %s18, 0
    %p64 = por %p62, %p63
    %p65 = scmp.ne.s32.totalorder %s54, %s57
    %p66 = scmp.eq.s32.totalorder %s23, 1
    %p67 = por %p65, %p66
    %p68 = scmp.ne.s32.totalorder %s57, %s58
    %p69 = scmp.eq.s32.totalorder %s23, 0
    %p70 = por %p68, %p69
    %p71 = scmp.ne.s32.totalorder %s57, %s58
    %p72 = scmp.eq.s32.totalorder %s24, 1
    %p73 = por %p71, %p72
    %p75 = scmp.ne.s32.totalorder %s58, %s74
    %p76 = scmp.eq.s32.totalorder %s24, 0
    %p77 = por %p75, %p76
    %s79 = sadd.s32 %s78, 1
    %p82 = scmp.eq.s32.totalorder %s18, 1
    %p83 = scmp.ne.s32.totalorder %s78, %s80
    %p84 = scmp.eq.s32.totalorder %s18, 0
    %p85 = por %p83, %p84
    %p86 = scmp.ne.s32.totalorder %s78, %s80
    %p87 = scmp.eq.s32.totalorder %s23, 1
    %p88 = por %p86, %p87
    %p89 = scmp.ne.s32.totalorder %s80, %s81
    %p90 = scmp.eq.s32.totalorder %s23, 0
    %p91 = por %p89, %p90
    %p92 = scmp.ne.s32.totalorder %s80, %s81
    %p93 = scmp.eq.s32.totalorder %s24, 1
    %p94 = por %p92, %p93
    %p96 = scmp.ne.s32.totalorder %s81, %s95
    %p97 = scmp.eq.s32.totalorder %s24, 0
    %p98 = por %p96, %p97
    %s100 = sadd.s32 %s99, 1
    %p103 = scmp.eq.s32.totalorder %s18, 1
    %p104 = scmp.ne.s32.totalorder %s99, %s101
    %p105 = scmp.eq.s32.totalorder %s18, 0
    %p106 = por %p104, %p105
    %p107 = scmp.ne.s32.totalorder %s99, %s101
    %p108 = scmp.eq.s32.totalorder %s23, 1
    %p109 = por %p107, %p108
    %p110 = scmp.ne.s32.totalorder %s101, %s102
    %p111 = scmp.eq.s32.totalorder %s23, 0
    %p112 = por %p110, %p111
    %p113 = scmp.ne.s32.totalorder %s101, %s102
    %p114 = scmp.eq.s32.totalorder %s24, 1
    %p115 = por %p113, %p114
    %p117 = scmp.ne.s32.totalorder %s102, %s116
    %p118 = scmp.eq.s32.totalorder %s24, 0
    %p119 = por %p117, %p118
    %s121 = sadd.s32 %s120, 1
    %p124 = scmp.eq.s32.totalorder %s18, 1
    %p125 = scmp.ne.s32.totalorder %s120, %s122
    %p126 = scmp.eq.s32.totalorder %s18, 0
    %p127 = por %p125, %p126
    %p128 = scmp.ne.s32.totalorder %s120, %s122
    %p129 = scmp.eq.s32.totalorder %s23, 1
    %p130 = por %p128, %p129
    %p131 = scmp.ne.s32.totalorder %s122, %s123
    %p132 = scmp.eq.s32.totalorder %s23, 0
    %p133 = por %p131, %p132
    %p134 = scmp.ne.s32.totalorder %s122, %s123
    %p135 = scmp.eq.s32.totalorder %s24, 1
    %p136 = por %p134, %p135
    %p138 = scmp.ne.s32.totalorder %s123, %s137
    %p139 = scmp.eq.s32.totalorder %s24, 0
    %p140 = por %p138, %p139
    %s142 = sadd.s32 %s141, 1
    %p145 = scmp.eq.s32.totalorder %s18, 1
    %p146 = scmp.ne.s32.totalorder %s141, %s143
    %p147 = scmp.eq.s32.totalorder %s18, 0
    %p148 = por %p146, %p147
    %p149 = scmp.ne.s32.totalorder %s141, %s143
    %p150 = scmp.eq.s32.totalorder %s23, 1
    %p151 = por %p149, %p150
    %p152 = scmp.ne.s32.totalorder %s143, %s144
    %p153 = scmp.eq.s32.totalorder %s23, 0
    %p154 = por %p152, %p153
    %p155 = scmp.ne.s32.totalorder %s143, %s144
    %p156 = scmp.eq.s32.totalorder %s24, 1
    %p157 = por %p155, %p156
    %p159 = scmp.ne.s32.totalorder %s144, %s158
    %p160 = scmp.eq.s32.totalorder %s24, 0
    %p161 = por %p159, %p160
    %s163 = sadd.s32 %s162, 1
    %p166 = scmp.eq.s32.totalorder %s18, 1
    %p167 = scmp.ne.s32.totalorder %s162, %s164
    %p168 = scmp.eq.s32.totalorder %s18, 0
    %p169 = por %p167, %p168
    %p170 = scmp.ne.s32.totalorder %s162, %s164
    %p171 = scmp.eq.s32.totalorder %s23, 1
    %p172 = por %p170, %p171
    %p173 = scmp.ne.s32.totalorder %s164, %s165
    %p174 = scmp.eq.s32.totalorder %s23, 0
    %p175 = por %p173, %p174
    %p176 = scmp.ne.s32.totalorder %s164, %s165
    %p177 = scmp.eq.s32.totalorder %s24, 1
    %p178 = por %p176, %p177
    %p180 = scmp.ne.s32.totalorder %s165, %s179
    %p181 = scmp.eq.s32.totalorder %s24, 0
    %p182 = por %p180, %p181
    %s184 = sadd.s32 %s183, 1
    %p187 = scmp.eq.s32.totalorder %s18, 1
    %p188 = scmp.ne.s32.totalorder %s183, %s185
    %p189 = scmp.eq.s32.totalorder %s18, 0
    %p190 = por %p188, %p189
    %p191 = scmp.ne.s32.totalorder %s183, %s185
    %p192 = scmp.eq.s32.totalorder %s23, 1
    %p193 = por %p191, %p192
    %p194 = scmp.ne.s32.totalorder %s185, %s186
    %p195 = scmp.eq.s32.totalorder %s23, 0
    %p196 = por %p194, %p195
    %p197 = scmp.ne.s32.totalorder %s185, %s186
    %p198 = scmp.eq.s32.totalorder %s24, 1
    %p199 = por %p197, %p198
    %p201 = scmp.ne.s32.totalorder %s186, %s200
    %p202 = scmp.eq.s32.totalorder %s24, 0
    %p203 = por %p201, %p202
    %s205 = sadd.s32 %s204, 1
    %p208 = scmp.eq.s32.totalorder %s18, 1
    %p209 = scmp.ne.s32.totalorder %s204, %s206
    %p210 = scmp.eq.s32.totalorder %s18, 0
    %p211 = por %p209, %p210
    %p212 = scmp.ne.s32.totalorder %s204, %s206
    %p213 = scmp.eq.s32.totalorder %s23, 1
    %p214 = por %p212, %p213
    %p215 = scmp.ne.s32.totalorder %s206, %s207
    %p216 = scmp.eq.s32.totalorder %s23, 0
    %p217 = por %p215, %p216
    %p218 = scmp.ne.s32.totalorder %s206, %s207
    %p219 = scmp.eq.s32.totalorder %s24, 1
    %p220 = por %p218, %p219
    %p222 = scmp.ne.s32.totalorder %s207, %s221
    %p223 = scmp.eq.s32.totalorder %s24, 0
    %p224 = por %p222, %p223
    %s226 = sadd.s32 %s225, 1
    %p229 = scmp.eq.s32.totalorder %s18, 1
    %p230 = scmp.ne.s32.totalorder %s225, %s227
    %p231 = scmp.eq.s32.totalorder %s18, 0
    %p232 = por %p230, %p231
    %p233 = scmp.ne.s32.totalorder %s225, %s227
    %p234 = scmp.eq.s32.totalorder %s23, 1
    %p235 = por %p233, %p234
    %p236 = scmp.ne.s32.totalorder %s227, %s228
    %p237 = scmp.eq.s32.totalorder %s23, 0
    %p238 = por %p236, %p237
    %p239 = scmp.ne.s32.totalorder %s227, %s228
    %p240 = scmp.eq.s32.totalorder %s24, 1
    %p241 = por %p239, %p240
    %p243 = scmp.ne.s32.totalorder %s228, %s242
    %p244 = scmp.eq.s32.totalorder %s24, 0
    %p245 = por %p243, %p244
    %s247 = sadd.s32 %s246, 1
    %p250 = scmp.eq.s32.totalorder %s18, 1
    %p251 = scmp.ne.s32.totalorder %s246, %s248
    %p252 = scmp.eq.s32.totalorder %s18, 0
    %p253 = por %p251, %p252
    %p254 = scmp.ne.s32.totalorder %s246, %s248
    %p255 = scmp.eq.s32.totalorder %s23, 1
    %p256 = por %p254, %p255
    %p257 = scmp.ne.s32.totalorder %s248, %s249
    %p258 = scmp.eq.s32.totalorder %s23, 0
    %p259 = por %p257, %p258
    %p260 = scmp.ne.s32.totalorder %s248, %s249
    %p261 = scmp.eq.s32.totalorder %s24, 1
    %p262 = por %p260, %p261
    %p264 = scmp.ne.s32.totalorder %s249, %s263
    %p265 = scmp.eq.s32.totalorder %s24, 0
    %p266 = por %p264, %p265
    %s268 = sadd.s32 %s267, 1
    %p271 = scmp.eq.s32.totalorder %s18, 1
    %p272 = scmp.ne.s32.totalorder %s267, %s269
    %p273 = scmp.eq.s32.totalorder %s18, 0
    %p274 = por %p272, %p273
    %p275 = scmp.ne.s32.totalorder %s267, %s269
    %p276 = scmp.eq.s32.totalorder %s23, 1
    %p277 = por %p275, %p276
    %p278 = scmp.ne.s32.totalorder %s269, %s270
    %p279 = scmp.eq.s32.totalorder %s23, 0
    %p280 = por %p278, %p279
    %p281 = scmp.ne.s32.totalorder %s269, %s270
    %p282 = scmp.eq.s32.totalorder %s24, 1
    %p283 = por %p281, %p282
    %p285 = scmp.ne.s32.totalorder %s270, %s284
    %p286 = scmp.eq.s32.totalorder %s24, 0
    %p287 = por %p285, %p286
    %s288 = ssub.s32 %s18, %s25
    %p289 = scmp.eq.s32.totalorder %s288, 0
    %s291 = sadd.s32 %s290, 1
    %s292 = scalar_select %p289, %s290, %s291
    %p295 = pneg %p289
    %p296 = scmp.eq.s32.totalorder %s18, 1
    %p297 = por %p295, %p296
    %p298 = scmp.ne.s32.totalorder %s290, %s293
    %p299 = scmp.eq.s32.totalorder %s18, 0
    %p300 = por %p298, %p299
    %p301 = scmp.ne.s32.totalorder %s290, %s293
    %p302 = scmp.eq.s32.totalorder %s23, 1
    %p303 = por %p301, %p302
    %p304 = scmp.ne.s32.totalorder %s293, %s294
    %p305 = scmp.eq.s32.totalorder %s23, 0
    %p306 = por %p304, %p305
    %p307 = scmp.ne.s32.totalorder %s293, %s294
    %p308 = scmp.eq.s32.totalorder %s24, 1
    %p309 = por %p307, %p308
    %p311 = scmp.ne.s32.totalorder %s294, %s310
    %p312 = scmp.eq.s32.totalorder %s24, 0
    %p313 = por %p311, %p312
    %p314 = scmp.le.s32.totalorder 1, %s18
    %p315 = scmp.lt.s32.totalorder %s18, 3
    %p316 = pnand %p314, %p315
    %p317 = pneg %p316
    // Predicated region
    $region9: #{sentiment_classifier_forward.7} parent=5 // pred_check
      _
    $region10: #{sentiment_classifier_forward.7} parent=5 // pred_check_branch
      %319 = sbr.rel (%p316) target = $region12
    $region11: #{sentiment_classifier_forward.7} parent=5 // pred_region
      %s320 = ssub.s32 %s18, 1
      // Predicated region
      $region13: #{sentiment_classifier_forward.7} parent=11 // pred_check
        %p321 = pneg %p91
      $region14: #{sentiment_classifier_forward.7} parent=11 // pred_check_branch
        %323 = sbr.rel (%p321) target = $region16
      $region15: #{sentiment_classifier_forward.7} parent=11 // pred_region
        _
      $region16: #{sentiment_classifier_forward.7} parent=11 // pred_fallthru
        _
      // Predicated region
      $region17: #{sentiment_classifier_forward.7} parent=11 // pred_check
        %p324 = pneg %p112
      $region18: #{sentiment_classifier_forward.7} parent=11 // pred_check_branch
        %326 = sbr.rel (%p324) target = $region20
      $region19: #{sentiment_classifier_forward.7} parent=11 // pred_region
        _
      $region20: #{sentiment_classifier_forward.7} parent=11 // pred_fallthru
        _
      // Predicated region
      $region21: #{sentiment_classifier_forward.7} parent=11 // pred_check
        %p327 = pneg %p133
      $region22: #{sentiment_classifier_forward.7} parent=11 // pred_check_branch
        %329 = sbr.rel (%p327) target = $region24
      $region23: #{sentiment_classifier_forward.7} parent=11 // pred_region
        _
      $region24: #{sentiment_classifier_forward.7} parent=11 // pred_fallthru
        _
      // Predicated region
      $region25: #{sentiment_classifier_forward.7} parent=11 // pred_check
        %p330 = pneg %p154
      $region26: #{sentiment_classifier_forward.7} parent=11 // pred_check_branch
        %332 = sbr.rel (%p330) target = $region28
      $region27: #{sentiment_classifier_forward.7} parent=11 // pred_region
        _
      $region28: #{sentiment_classifier_forward.7} parent=11 // pred_fallthru
        _
      // Predicated region
      $region29: #{sentiment_classifier_forward.7} parent=11 // pred_check
        %p333 = pneg %p175
      $region30: #{sentiment_classifier_forward.7} parent=11 // pred_check_branch
        %335 = sbr.rel (%p333) target = $region32
      $region31: #{sentiment_classifier_forward.7} parent=11 // pred_region
        _
      $region32: #{sentiment_classifier_forward.7} parent=11 // pred_fallthru
        _
      // Predicated region
      $region33: #{sentiment_classifier_forward.7} parent=11 // pred_check
        %p336 = pneg %p196
      $region34: #{sentiment_classifier_forward.7} parent=11 // pred_check_branch
        %338 = sbr.rel (%p336) target = $region36
      $region35: #{sentiment_classifier_forward.7} parent=11 // pred_region
        _
      $region36: #{sentiment_classifier_forward.7} parent=11 // pred_fallthru
        _
      // Predicated region
      $region37: #{sentiment_classifier_forward.7} parent=11 // pred_check
        %p339 = pneg %p217
      $region38: #{sentiment_classifier_forward.7} parent=11 // pred_check_branch
        %341 = sbr.rel (%p339) target = $region40
      $region39: #{sentiment_classifier_forward.7} parent=11 // pred_region
        _
      $region40: #{sentiment_classifier_forward.7} parent=11 // pred_fallthru
        _
      // Predicated region
      $region41: #{sentiment_classifier_forward.7} parent=11 // pred_check
        %p342 = pneg %p238
      $region42: #{sentiment_classifier_forward.7} parent=11 // pred_check_branch
        %344 = sbr.rel (%p342) target = $region44
      $region43: #{sentiment_classifier_forward.7} parent=11 // pred_region
        _
      $region44: #{sentiment_classifier_forward.7} parent=11 // pred_fallthru
        _
      // Predicated region
      $region45: #{sentiment_classifier_forward.7} parent=11 // pred_check
        %p345 = pneg %p259
      $region46: #{sentiment_classifier_forward.7} parent=11 // pred_check_branch
        %347 = sbr.rel (%p345) target = $region48
      $region47: #{sentiment_classifier_forward.7} parent=11 // pred_region
        _
      $region48: #{sentiment_classifier_forward.7} parent=11 // pred_fallthru
        _
      // Predicated region
      $region49: #{sentiment_classifier_forward.7} parent=11 // pred_check
        %p348 = pneg %p280
      $region50: #{sentiment_classifier_forward.7} parent=11 // pred_check_branch
        %350 = sbr.rel (%p348) target = $region52
      $region51: #{sentiment_classifier_forward.7} parent=11 // pred_region
        _
      $region52: #{sentiment_classifier_forward.7} parent=11 // pred_fallthru
        _
    $region12: #{sentiment_classifier_forward.7} parent=5 // pred_fallthru
      _
    %p351 = scmp.lt.s32.totalorder %s18, 2
    // Predicated region
    $region53: #{sentiment_classifier_forward.7} parent=5 // pred_check
      %p352 = pneg %p351
    $region54: #{sentiment_classifier_forward.7} parent=5 // pred_check_branch
      %354 = sbr.rel (%p352) target = $region56
    $region55: #{sentiment_classifier_forward.7} parent=5 // pred_region
      // Predicated region
      $region57: #{sentiment_classifier_forward.7} parent=55 // pred_check
        %p355 = pneg %p38
      $region58: #{sentiment_classifier_forward.7} parent=55 // pred_check_branch
        %357 = sbr.rel (%p355) target = $region60
      $region59: #{sentiment_classifier_forward.7} parent=55 // pred_region
        %p358 = scmp.lt.s32.totalorder %s18, 1
        %s359 = scalar_select %p358, %s18, 1
        %s360 = smul.addr %s359, 4
        %s361 = scalar_lea.vmem %s0, %s360
      $region60: #{sentiment_classifier_forward.7} parent=55 // pred_fallthru
        _
      // Predicated region
      $region61: #{sentiment_classifier_forward.7} parent=55 // pred_check
        %p362 = pneg %p64
      $region62: #{sentiment_classifier_forward.7} parent=55 // pred_check_branch
        %364 = sbr.rel (%p362) target = $region64
      $region63: #{sentiment_classifier_forward.7} parent=55 // pred_region
        %p365 = scmp.lt.s32.totalorder %s18, 1
        %s366 = scalar_select %p365, %s18, 1
        %s367 = scalar_lea.vmem %s1, %s366
      $region64: #{sentiment_classifier_forward.7} parent=55 // pred_fallthru
        _
    $region56: #{sentiment_classifier_forward.7} parent=5 // pred_fallthru
      _
    %p368 = scmp.le.s32.totalorder 1, %s18
    %p369 = scmp.lt.s32.totalorder %s18, 3
    %p370 = pnand %p368, %p369
    %p371 = pneg %p370
    // Predicated region
    $region65: #{sentiment_classifier_forward.7} parent=5 // pred_check
      _
    $region66: #{sentiment_classifier_forward.7} parent=5 // pred_check_branch
      %373 = sbr.rel (%p370) target = $region68
    $region67: #{sentiment_classifier_forward.7} parent=5 // pred_region
      %s374 = ssub.s32 %s18, 1
      %p375 = scmp.lt.s32.totalorder %s23, 1
      %s376 = scalar_select %p375, %s23, 1
      %s377 = smul.addr %s376, 4
      %s378 = scalar_lea.vmem %s0, %s377
      %p379 = pneg %p44
      %p380 = pneg %p41
      %p381 = scmp.lt.s32.totalorder %s23, 1
      %s382 = scalar_select %p381, %s23, 1
      %s383 = scalar_lea.vmem %s1, %s382
      %p384 = pneg %p70
      %p385 = pneg %p67
      %p386 = pneg %p91
      %p387 = pneg %p88
      %p388 = pneg %p112
      %p389 = pneg %p109
      %p390 = pneg %p133
      %p391 = pneg %p130
      %p392 = pneg %p154
      %p393 = pneg %p151
      %p394 = pneg %p175
      %p395 = pneg %p172
      %p396 = pneg %p196
      %p397 = pneg %p193
      %p398 = pneg %p217
      %p399 = pneg %p214
      %p400 = pneg %p238
      %p401 = pneg %p235
      %p402 = pneg %p259
      %p403 = pneg %p256
      %p404 = pneg %p280
      %p405 = pneg %p277
      %p406 = pneg %p306
      %p407 = pneg %p303
      %p408 = scmp.lt.s32.totalorder %s23, 1
      %s409 = scalar_select %p408, %s23, 1
      %s410 = smul.addr %s409, 4
      %s411 = scalar_lea.vmem %s12, %s410
      %p412 = scmp.lt.s32.totalorder %s23, 1
      %s413 = scalar_select %p412, %s23, 1
      %s414 = smul.addr %s413, 4
      %s415 = scalar_lea.vmem %s0, %s414
      %p416 = scmp.lt.s32.totalorder %s23, 1
      %s417 = scalar_select %p416, %s23, 1
      %s418 = scalar_lea.vmem %s1, %s417
      %p419 = scmp.lt.s32.totalorder %s23, 1
      %s420 = scalar_select %p419, %s23, 1
      %s421 = smul.addr %s420, 4
      %s422 = scalar_lea.vmem %s12, %s421
      %v424 = vld [vmem:[%s415] sm:$0xf]
      %v425 = vunpack.c.l.bf16 %v424
      %v426 = vld [vmem:[%s418] sm:$0x1]
      %v428 = vperm.slane %v426, 0
      %v430 = vld [vmem:[%s2] sm:$0xf]
      %v431 = vld [vmem:[%s2 + $0x4] sm:$0xf]
      %v432 = vld [vmem:[%s2 + $0x8] sm:$0xf]
      %v433 = vld [vmem:[%s2 + $0xc] sm:$0xf]
      %v434 = vld [vmem:[%s2 + $0x10] sm:$0xf]
      %v435 = vld [vmem:[%s2 + $0x14] sm:$0xf]
      %v436 = vld [vmem:[%s2 + $0x18] sm:$0xf]
      %v437 = vld [vmem:[%s2 + $0x1c] sm:$0xf]
      %v438 = vld [vmem:[%s2 + $0x20] sm:$0xf]
      %v439 = vld [vmem:[%s2 + $0x24] sm:$0xf]
      %v440 = vld [vmem:[%s2 + $0x28] sm:$0xf]
      %v441 = vld [vmem:[%s2 + $0x2c] sm:$0xf]
      %v442 = vld [vmem:[%s2 + $0x30] sm:$0xf]
      %v443 = vld [vmem:[%s2 + $0x34] sm:$0xf]
      %v444 = vld [vmem:[%s2 + $0x38] sm:$0xf]
      %v445 = vld [vmem:[%s2 + $0x3c] sm:$0xf]
      %v446 = vld [vmem:[%s5] sm:$0x1]
      %v448 = vperm.slane %v446, 0
      %v466 = vunpack.c.l.b16 %v430
      %v467 = vunpack.c.l.b16 %v431
      %v468 = vunpack.c.l.b16 %v432
      %v469 = vunpack.c.l.b16 %v433
      %v470 = vunpack.c.l.b16 %v434
      %v471 = vunpack.c.l.b16 %v435
      %v472 = vunpack.c.l.b16 %v436
      %v473 = vunpack.c.l.b16 %v437
      %v474 = vunpack.c.l.b16 %v438
      %v475 = vunpack.c.l.b16 %v439
      %v476 = vunpack.c.l.b16 %v440
      %v477 = vunpack.c.l.b16 %v441
      %v478 = vunpack.c.l.b16 %v442
      %v479 = vunpack.c.l.b16 %v443
      %v480 = vunpack.c.l.b16 %v444
      %v481 = vunpack.c.l.b16 %v445
      %v482 = vpack.c.b16 %v467, %v466
      %v483 = vpack.c.b16 %v469, %v468
      %v484 = vpack.c.b16 %v471, %v470
      %v485 = vpack.c.b16 %v473, %v472
      %v486 = vpack.c.b16 %v475, %v474
      %v487 = vpack.c.b16 %v477, %v476
      %v488 = vpack.c.b16 %v479, %v478
      %v489 = vpack.c.b16 %v481, %v480
      %498 = vmatpush.bf16.msra.mxu0 %v489
      %499 = vmatpush.bf16.msra.mxu0 %v488
      %500 = vmatpush.bf16.msra.mxu0 %v487
      %501 = vmatpush.bf16.msra.mxu0 %v486
      %502 = vmatpush.bf16.msra.mxu0 %v485
      %503 = vmatpush.bf16.msra.mxu0 %v484
      %504 = vmatpush.bf16.msra.mxu0 %v483
      %505 = vmatpush.bf16.msra.mxu0 %v482
      %506 = vmatmul.bf16.gmra.mxu0 %v424
      %v507 = vpop.f32.mrf.mxu0
      %v508 = vadd.f32 %v448, %v507
      %v509 = vpop.f32.mrf.mxu0
      %510 = vdwg.mxu0
      %v511 = vld [vmem:[%s3] sm:$0xf]
      %v512 = vld [vmem:[%s3 + $0x4] sm:$0xf]
      %v513 = vld [vmem:[%s3 + $0x8] sm:$0xf]
      %v514 = vld [vmem:[%s3 + $0xc] sm:$0xf]
      %v515 = vld [vmem:[%s3 + $0x10] sm:$0xf]
      %v516 = vld [vmem:[%s3 + $0x14] sm:$0xf]
      %v517 = vld [vmem:[%s3 + $0x18] sm:$0xf]
      %v518 = vld [vmem:[%s3 + $0x1c] sm:$0xf]
      %v519 = vld [vmem:[%s3 + $0x20] sm:$0xf]
      %v520 = vld [vmem:[%s3 + $0x24] sm:$0xf]
      %v521 = vld [vmem:[%s3 + $0x28] sm:$0xf]
      %v522 = vld [vmem:[%s3 + $0x2c] sm:$0xf]
      %v523 = vld [vmem:[%s3 + $0x30] sm:$0xf]
      %v524 = vld [vmem:[%s3 + $0x34] sm:$0xf]
      %v525 = vld [vmem:[%s3 + $0x38] sm:$0xf]
      %v526 = vld [vmem:[%s3 + $0x3c] sm:$0xf]
      %v527 = vld [vmem:[%s6] sm:$0x1]
      %v529 = vperm.slane %v527, 0
      %v547 = vunpack.c.l.b16 %v511
      %v548 = vunpack.c.l.b16 %v512
      %v549 = vunpack.c.l.b16 %v513
      %v550 = vunpack.c.l.b16 %v514
      %v551 = vunpack.c.l.b16 %v515
      %v552 = vunpack.c.l.b16 %v516
      %v553 = vunpack.c.l.b16 %v517
      %v554 = vunpack.c.l.b16 %v518
      %v555 = vunpack.c.l.b16 %v519
      %v556 = vunpack.c.l.b16 %v520
      %v557 = vunpack.c.l.b16 %v521
      %v558 = vunpack.c.l.b16 %v522
      %v559 = vunpack.c.l.b16 %v523
      %v560 = vunpack.c.l.b16 %v524
      %v561 = vunpack.c.l.b16 %v525
      %v562 = vunpack.c.l.b16 %v526
      %v563 = vpack.c.b16 %v548, %v547
      %v564 = vpack.c.b16 %v550, %v549
      %v565 = vpack.c.b16 %v552, %v551
      %v566 = vpack.c.b16 %v554, %v553
      %v567 = vpack.c.b16 %v556, %v555
      %v568 = vpack.c.b16 %v558, %v557
      %v569 = vpack.c.b16 %v560, %v559
      %v570 = vpack.c.b16 %v562, %v561
      %579 = vmatpush.bf16.msra.mxu0 %v570
      %580 = vmatpush.bf16.msra.mxu0 %v569
      %581 = vmatpush.bf16.msra.mxu0 %v568
      %582 = vmatpush.bf16.msra.mxu0 %v567
      %583 = vmatpush.bf16.msra.mxu0 %v566
      %584 = vmatpush.bf16.msra.mxu0 %v565
      %585 = vmatpush.bf16.msra.mxu0 %v564
      %586 = vmatpush.bf16.msra.mxu0 %v563
      %587 = vmatmul.bf16.gmra.mxu0 %v424
      %v588 = vpop.f32.mrf.mxu0
      %v589 = vadd.f32 %v529, %v588
      %v590 = vpop.f32.mrf.mxu0
      %591 = vdwg.mxu0
      %v592 = vld [vmem:[%s4] sm:$0xf]
      %v593 = vld [vmem:[%s4 + $0x4] sm:$0xf]
      %v594 = vld [vmem:[%s4 + $0x8] sm:$0xf]
      %v595 = vld [vmem:[%s4 + $0xc] sm:$0xf]
      %v596 = vld [vmem:[%s4 + $0x10] sm:$0xf]
      %v597 = vld [vmem:[%s4 + $0x14] sm:$0xf]
      %v598 = vld [vmem:[%s4 + $0x18] sm:$0xf]
      %v599 = vld [vmem:[%s4 + $0x1c] sm:$0xf]
      %v600 = vld [vmem:[%s4 + $0x20] sm:$0xf]
      %v601 = vld [vmem:[%s4 + $0x24] sm:$0xf]
      %v602 = vld [vmem:[%s4 + $0x28] sm:$0xf]
      %v603 = vld [vmem:[%s4 + $0x2c] sm:$0xf]
      %v604 = vld [vmem:[%s4 + $0x30] sm:$0xf]
      %v605 = vld [vmem:[%s4 + $0x34] sm:$0xf]
      %v606 = vld [vmem:[%s4 + $0x38] sm:$0xf]
      %v607 = vld [vmem:[%s4 + $0x3c] sm:$0xf]
      %v608 = vld [vmem:[%s7] sm:$0x1]
      %v610 = vperm.slane %v608, 0
      %v628 = vunpack.c.l.b16 %v592
      %v629 = vunpack.c.l.b16 %v593
      %v630 = vunpack.c.l.b16 %v594
      %v631 = vunpack.c.l.b16 %v595
      %v632 = vunpack.c.l.b16 %v596
      %v633 = vunpack.c.l.b16 %v597
      %v634 = vunpack.c.l.b16 %v598
      %v635 = vunpack.c.l.b16 %v599
      %v636 = vunpack.c.l.b16 %v600
      %v637 = vunpack.c.l.b16 %v601
      %v638 = vunpack.c.l.b16 %v602
      %v639 = vunpack.c.l.b16 %v603
      %v640 = vunpack.c.l.b16 %v604
      %v641 = vunpack.c.l.b16 %v605
      %v642 = vunpack.c.l.b16 %v606
      %v643 = vunpack.c.l.b16 %v607
      %v644 = vpack.c.b16 %v629, %v628
      %v645 = vpack.c.b16 %v631, %v630
      %v646 = vpack.c.b16 %v633, %v632
      %v647 = vpack.c.b16 %v635, %v634
      %v648 = vpack.c.b16 %v637, %v636
      %v649 = vpack.c.b16 %v639, %v638
      %v650 = vpack.c.b16 %v641, %v640
      %v651 = vpack.c.b16 %v643, %v642
      %660 = vmatpush.bf16.msra.mxu0 %v651
      %661 = vmatpush.bf16.msra.mxu0 %v650
      %662 = vmatpush.bf16.msra.mxu0 %v649
      %663 = vmatpush.bf16.msra.mxu0 %v648
      %664 = vmatpush.bf16.msra.mxu0 %v647
      %665 = vmatpush.bf16.msra.mxu0 %v646
      %666 = vmatpush.bf16.msra.mxu0 %v645
      %667 = vmatpush.bf16.msra.mxu0 %v644
      %668 = vmatmul.bf16.gmra.mxu0 %v424
      %v669 = vpop.f32.mrf.mxu0
      %v670 = vadd.f32 %v610, %v669
      %v671 = vpop.f32.mrf.mxu0
      %672 = vdwg.mxu0
      %v673 = vpack.c.bf16 %v508, %v508
      %v674 = vpack.c.bf16 %v589, %v589
      %vm675 = vcmask 261120
      %v677 = vsel %vm675, %v673, 0
      %v680 = vsel %vm675, %v674, 0
      %682 = vmatpush.bf16.xpose.msra.mxu0 0
      %683 = vmatpush.bf16.xpose.msra.mxu0 0
      %684 = vmatpush.bf16.xpose.msra.mxu0 0
      %685 = vmatpush.bf16.xpose.msra.mxu0 0
      %686 = vmatpush.bf16.xpose.msra.mxu0 0
      %687 = vmatpush.bf16.xpose.msra.mxu0 0
      %688 = vmatpush.bf16.xpose.msra.mxu0 0
      %689 = vmatpush.bf16.xpose.msra.mxu0 %v680
      %690 = vmatmul.bf16.gmra.mxu0 %v677
      %v691 = vpop.f32.mrf.mxu0
      %v692 = vadd.f32 %v428, %v691
      %v693 = vpop.f32.mrf.mxu0
      %694 = vdwg.mxu0
      %vm695 = vcmask 64512
      %v696 = vsel %vm695, %v692, -inf
      %697 = vmax.xlane.f32.xlu0 %v696
      %v698 = vpop.xlane.xlu0 %697
      %v699 = vsub.f32 %v692, %v698
      %v700 = vmul.f32 %v699, 1.442695
      %v701 = vpow.pop %v700
      %v702 = vsel %vm695, %v701, 0.0
      %703 = vadd.xlane.f32.xlu0 %v702
      %v704 = vpop.xlane.xlu0 %703
      %v705 = vrcp.pop %v704
      %v706 = vmul.f32 %v701, %v705
      %v707 = vpack.c.bf16 %v706, %v706
      %v708 = vpack.c.bf16 %v670, %v670
      %v710 = vsel %vm695, %v707, 0
      %vm712 = vcmask 1043456
      %v714 = vsel %vm712, %v708, 0
      %716 = vmatpush.bf16.msra.mxu0 0
      %717 = vmatpush.bf16.msra.mxu0 0
      %718 = vmatpush.bf16.msra.mxu0 0
      %719 = vmatpush.bf16.msra.mxu0 0
      %720 = vmatpush.bf16.msra.mxu0 0
      %721 = vmatpush.bf16.msra.mxu0 0
      %722 = vmatpush.bf16.msra.mxu0 0
      %723 = vmatpush.bf16.msra.mxu0 %v714
      %724 = vmatmul.bf16.gmra.mxu0 %v710
      %v725 = vpop.f32.mrf.mxu0
      %v726 = vadd.f32 0.0, %v725
      %v727 = vpop.f32.mrf.mxu0
      %728 = vdwg.mxu0
      %v729 = vpack.c.bf16 %v726, %v726
      %v730 = vld [vmem:[%s8] sm:$0xf]
      %v731 = vld [vmem:[%s8 + $0x4] sm:$0xf]
      %v732 = vld [vmem:[%s8 + $0x8] sm:$0xf]
      %v733 = vld [vmem:[%s8 + $0xc] sm:$0xf]
      %s734 = scalar_lea.vmem %s2, 64
      %v735 = vld [vmem:[%s734] sm:$0xf]
      %v736 = vld [vmem:[%s734 + $0x4] sm:$0xf]
      %v737 = vld [vmem:[%s734 + $0x8] sm:$0xf]
      %v738 = vld [vmem:[%s734 + $0xc] sm:$0xf]
      %v739 = vld [vmem:[%s734 + $0x10] sm:$0xf]
      %v740 = vld [vmem:[%s734 + $0x14] sm:$0xf]
      %v741 = vld [vmem:[%s734 + $0x18] sm:$0xf]
      %v742 = vld [vmem:[%s734 + $0x1c] sm:$0xf]
      %v743 = vld [vmem:[%s734 + $0x20] sm:$0xf]
      %v744 = vld [vmem:[%s734 + $0x24] sm:$0xf]
      %v745 = vld [vmem:[%s734 + $0x28] sm:$0xf]
      %v746 = vld [vmem:[%s734 + $0x2c] sm:$0xf]
      %v747 = vld [vmem:[%s734 + $0x30] sm:$0xf]
      %v748 = vld [vmem:[%s734 + $0x34] sm:$0xf]
      %v749 = vld [vmem:[%s734 + $0x38] sm:$0xf]
      %v750 = vld [vmem:[%s734 + $0x3c] sm:$0xf]
      %s751 = scalar_lea.vmem %s5, 1
      %v752 = vld [vmem:[%s751] sm:$0x1]
      %v754 = vperm.slane %v752, 0
      %v772 = vunpack.c.l.b16 %v735
      %v773 = vunpack.c.l.b16 %v736
      %v774 = vunpack.c.l.b16 %v737
      %v775 = vunpack.c.l.b16 %v738
      %v776 = vunpack.c.l.b16 %v739
      %v777 = vunpack.c.l.b16 %v740
      %v778 = vunpack.c.l.b16 %v741
      %v779 = vunpack.c.l.b16 %v742
      %v780 = vunpack.c.l.b16 %v743
      %v781 = vunpack.c.l.b16 %v744
      %v782 = vunpack.c.l.b16 %v745
      %v783 = vunpack.c.l.b16 %v746
      %v784 = vunpack.c.l.b16 %v747
      %v785 = vunpack.c.l.b16 %v748
      %v786 = vunpack.c.l.b16 %v749
      %v787 = vunpack.c.l.b16 %v750
      %v788 = vpack.c.b16 %v773, %v772
      %v789 = vpack.c.b16 %v775, %v774
      %v790 = vpack.c.b16 %v777, %v776
      %v791 = vpack.c.b16 %v779, %v778
      %v792 = vpack.c.b16 %v781, %v780
      %v793 = vpack.c.b16 %v783, %v782
      %v794 = vpack.c.b16 %v785, %v784
      %v795 = vpack.c.b16 %v787, %v786
      %804 = vmatpush.bf16.msra.mxu0 %v795
      %805 = vmatpush.bf16.msra.mxu0 %v794
      %806 = vmatpush.bf16.msra.mxu0 %v793
      %807 = vmatpush.bf16.msra.mxu0 %v792
      %808 = vmatpush.bf16.msra.mxu0 %v791
      %809 = vmatpush.bf16.msra.mxu0 %v790
      %810 = vmatpush.bf16.msra.mxu0 %v789
      %811 = vmatpush.bf16.msra.mxu0 %v788
      %812 = vmatmul.bf16.gmra.mxu0 %v424
      %v813 = vpop.f32.mrf.mxu0
      %v814 = vadd.f32 %v754, %v813
      %v815 = vpop.f32.mrf.mxu0
      %816 = vdwg.mxu0
      %s817 = scalar_lea.vmem %s3, 64
      %v818 = vld [vmem:[%s817] sm:$0xf]
      %v819 = vld [vmem:[%s817 + $0x4] sm:$0xf]
      %v820 = vld [vmem:[%s817 + $0x8] sm:$0xf]
      %v821 = vld [vmem:[%s817 + $0xc] sm:$0xf]
      %v822 = vld [vmem:[%s817 + $0x10] sm:$0xf]
      %v823 = vld [vmem:[%s817 + $0x14] sm:$0xf]
      %v824 = vld [vmem:[%s817 + $0x18] sm:$0xf]
      %v825 = vld [vmem:[%s817 + $0x1c] sm:$0xf]
      %v826 = vld [vmem:[%s817 + $0x20] sm:$0xf]
      %v827 = vld [vmem:[%s817 + $0x24] sm:$0xf]
      %v828 = vld [vmem:[%s817 + $0x28] sm:$0xf]
      %v829 = vld [vmem:[%s817 + $0x2c] sm:$0xf]
      %v830 = vld [vmem:[%s817 + $0x30] sm:$0xf]
      %v831 = vld [vmem:[%s817 + $0x34] sm:$0xf]
      %v832 = vld [vmem:[%s817 + $0x38] sm:$0xf]
      %v833 = vld [vmem:[%s817 + $0x3c] sm:$0xf]
      %s834 = scalar_lea.vmem %s6, 1
      %v835 = vld [vmem:[%s834] sm:$0x1]
      %v837 = vperm.slane %v835, 0
      %v855 = vunpack.c.l.b16 %v818
      %v856 = vunpack.c.l.b16 %v819
      %v857 = vunpack.c.l.b16 %v820
      %v858 = vunpack.c.l.b16 %v821
      %v859 = vunpack.c.l.b16 %v822
      %v860 = vunpack.c.l.b16 %v823
      %v861 = vunpack.c.l.b16 %v824
      %v862 = vunpack.c.l.b16 %v825
      %v863 = vunpack.c.l.b16 %v826
      %v864 = vunpack.c.l.b16 %v827
      %v865 = vunpack.c.l.b16 %v828
      %v866 = vunpack.c.l.b16 %v829
      %v867 = vunpack.c.l.b16 %v830
      %v868 = vunpack.c.l.b16 %v831
      %v869 = vunpack.c.l.b16 %v832
      %v870 = vunpack.c.l.b16 %v833
      %v871 = vpack.c.b16 %v856, %v855
      %v872 = vpack.c.b16 %v858, %v857
      %v873 = vpack.c.b16 %v860, %v859
      %v874 = vpack.c.b16 %v862, %v861
      %v875 = vpack.c.b16 %v864, %v863
      %v876 = vpack.c.b16 %v866, %v865
      %v877 = vpack.c.b16 %v868, %v867
      %v878 = vpack.c.b16 %v870, %v869
      %887 = vmatpush.bf16.msra.mxu0 %v878
      %888 = vmatpush.bf16.msra.mxu0 %v877
      %889 = vmatpush.bf16.msra.mxu0 %v876
      %890 = vmatpush.bf16.msra.mxu0 %v875
      %891 = vmatpush.bf16.msra.mxu0 %v874
      %892 = vmatpush.bf16.msra.mxu0 %v873
      %893 = vmatpush.bf16.msra.mxu0 %v872
      %894 = vmatpush.bf16.msra.mxu0 %v871
      %895 = vmatmul.bf16.gmra.mxu0 %v424
      %v896 = vpop.f32.mrf.mxu0
      %v897 = vadd.f32 %v837, %v896
      %v898 = vpop.f32.mrf.mxu0
      %899 = vdwg.mxu0
      %s900 = scalar_lea.vmem %s4, 64
      %v901 = vld [vmem:[%s900] sm:$0xf]
      %v902 = vld [vmem:[%s900 + $0x4] sm:$0xf]
      %v903 = vld [vmem:[%s900 + $0x8] sm:$0xf]
      %v904 = vld [vmem:[%s900 + $0xc] sm:$0xf]
      %v905 = vld [vmem:[%s900 + $0x10] sm:$0xf]
      %v906 = vld [vmem:[%s900 + $0x14] sm:$0xf]
      %v907 = vld [vmem:[%s900 + $0x18] sm:$0xf]
      %v908 = vld [vmem:[%s900 + $0x1c] sm:$0xf]
      %v909 = vld [vmem:[%s900 + $0x20] sm:$0xf]
      %v910 = vld [vmem:[%s900 + $0x24] sm:$0xf]
      %v911 = vld [vmem:[%s900 + $0x28] sm:$0xf]
      %v912 = vld [vmem:[%s900 + $0x2c] sm:$0xf]
      %v913 = vld [vmem:[%s900 + $0x30] sm:$0xf]
      %v914 = vld [vmem:[%s900 + $0x34] sm:$0xf]
      %v915 = vld [vmem:[%s900 + $0x38] sm:$0xf]
      %v916 = vld [vmem:[%s900 + $0x3c] sm:$0xf]
      %s917 = scalar_lea.vmem %s7, 1
      %v918 = vld [vmem:[%s917] sm:$0x1]
      %v920 = vperm.slane %v918, 0
      %v938 = vunpack.c.l.b16 %v901
      %v939 = vunpack.c.l.b16 %v902
      %v940 = vunpack.c.l.b16 %v903
      %v941 = vunpack.c.l.b16 %v904
      %v942 = vunpack.c.l.b16 %v905
      %v943 = vunpack.c.l.b16 %v906
      %v944 = vunpack.c.l.b16 %v907
      %v945 = vunpack.c.l.b16 %v908
      %v946 = vunpack.c.l.b16 %v909
      %v947 = vunpack.c.l.b16 %v910
      %v948 = vunpack.c.l.b16 %v911
      %v949 = vunpack.c.l.b16 %v912
      %v950 = vunpack.c.l.b16 %v913
      %v951 = vunpack.c.l.b16 %v914
      %v952 = vunpack.c.l.b16 %v915
      %v953 = vunpack.c.l.b16 %v916
      %v954 = vpack.c.b16 %v939, %v938
      %v955 = vpack.c.b16 %v941, %v940
      %v956 = vpack.c.b16 %v943, %v942
      %v957 = vpack.c.b16 %v945, %v944
      %v958 = vpack.c.b16 %v947, %v946
      %v959 = vpack.c.b16 %v949, %v948
      %v960 = vpack.c.b16 %v951, %v950
      %v961 = vpack.c.b16 %v953, %v952
      %970 = vmatpush.bf16.msra.mxu0 %v961
      %971 = vmatpush.bf16.msra.mxu0 %v960
      %972 = vmatpush.bf16.msra.mxu0 %v959
      %973 = vmatpush.bf16.msra.mxu0 %v958
      %974 = vmatpush.bf16.msra.mxu0 %v957
      %975 = vmatpush.bf16.msra.mxu0 %v956
      %976 = vmatpush.bf16.msra.mxu0 %v955
      %977 = vmatpush.bf16.msra.mxu0 %v954
      %978 = vmatmul.bf16.gmra.mxu0 %v424
      %v979 = vpop.f32.mrf.mxu0
      %v980 = vadd.f32 %v920, %v979
      %v981 = vpop.f32.mrf.mxu0
      %982 = vdwg.mxu0
      %v983 = vpack.c.bf16 %v814, %v814
      %v984 = vpack.c.bf16 %v897, %v897
      %v986 = vsel %vm675, %v983, 0
      %v989 = vsel %vm675, %v984, 0
      %991 = vmatpush.bf16.xpose.msra.mxu0 0
      %992 = vmatpush.bf16.xpose.msra.mxu0 0
      %993 = vmatpush.bf16.xpose.msra.mxu0 0
      %994 = vmatpush.bf16.xpose.msra.mxu0 0
      %995 = vmatpush.bf16.xpose.msra.mxu0 0
      %996 = vmatpush.bf16.xpose.msra.mxu0 0
      %997 = vmatpush.bf16.xpose.msra.mxu0 0
      %998 = vmatpush.bf16.xpose.msra.mxu0 %v989
      %999 = vmatmul.bf16.gmra.mxu0 %v986
      %v1000 = vpop.f32.mrf.mxu0
      %v1001 = vadd.f32 %v428, %v1000
      %v1002 = vpop.f32.mrf.mxu0
      %1003 = vdwg.mxu0
      %v1004 = vsel %vm695, %v1001, -inf
      %1005 = vmax.xlane.f32.xlu0 %v1004
      %v1006 = vpop.xlane.xlu0 %1005
      %v1007 = vsub.f32 %v1001, %v1006
      %v1008 = vmul.f32 %v1007, 1.442695
      %v1009 = vpow.pop %v1008
      %v1010 = vsel %vm695, %v1009, 0.0
      %1011 = vadd.xlane.f32.xlu0 %v1010
      %v1012 = vpop.xlane.xlu0 %1011
      %v1013 = vrcp.pop %v1012
      %v1014 = vmul.f32 %v1009, %v1013
      %v1015 = vpack.c.bf16 %v1014, %v1014
      %v1016 = vpack.c.bf16 %v980, %v980
      %v1018 = vsel %vm695, %v1015, 0
      %v1021 = vsel %vm712, %v1016, 0
      %1023 = vmatpush.bf16.msra.mxu0 0
      %1024 = vmatpush.bf16.msra.mxu0 0
      %1025 = vmatpush.bf16.msra.mxu0 0
      %1026 = vmatpush.bf16.msra.mxu0 0
      %1027 = vmatpush.bf16.msra.mxu0 0
      %1028 = vmatpush.bf16.msra.mxu0 0
      %1029 = vmatpush.bf16.msra.mxu0 0
      %1030 = vmatpush.bf16.msra.mxu0 %v1021
      %1031 = vmatmul.bf16.gmra.mxu0 %v1018
      %v1032 = vpop.f32.mrf.mxu0
      %v1033 = vadd.f32 0.0, %v1032
      %v1034 = vpop.f32.mrf.mxu0
      %1035 = vdwg.mxu0
      %v1036 = vpack.c.bf16 %v1033, %v1033
      %s1037 = scalar_lea.vmem %s8, 16
      %v1038 = vld [vmem:[%s1037] sm:$0xf]
      %v1039 = vld [vmem:[%s1037 + $0x4] sm:$0xf]
      %v1040 = vld [vmem:[%s1037 + $0x8] sm:$0xf]
      %v1041 = vld [vmem:[%s1037 + $0xc] sm:$0xf]
      %v1046 = vunpack.c.l.b16 %v1038
      %v1047 = vunpack.c.l.b16 %v1039
      %v1048 = vunpack.c.l.b16 %v1040
      %v1049 = vunpack.c.l.b16 %v1041
      %v1050 = vpack.c.b16 %v1047, %v1046
      %v1051 = vpack.c.b16 %v1049, %v1048
      %v1055 = vsel %vm675, %v1036, 0
      %1057 = vmatpush.bf16.msra.mxu0 0
      %1058 = vmatpush.bf16.msra.mxu0 0
      %1059 = vmatpush.bf16.msra.mxu0 0
      %1060 = vmatpush.bf16.msra.mxu0 0
      %1061 = vmatpush.bf16.msra.mxu0 0
      %1062 = vmatpush.bf16.msra.mxu0 0
      %1063 = vmatpush.bf16.msra.mxu0 %v1051
      %1064 = vmatpush.bf16.msra.mxu0 %v1050
      %1065 = vmatmul.bf16.gmra.mxu0 %v1055
      %v1066 = vpop.f32.mrf.mxu0
      %v1067 = vadd.f32 0.0, %v1066
      %v1068 = vpop.f32.mrf.mxu0
      %1069 = vdwg.mxu0
      %v1074 = vunpack.c.l.b16 %v730
      %v1075 = vunpack.c.l.b16 %v731
      %v1076 = vunpack.c.l.b16 %v732
      %v1077 = vunpack.c.l.b16 %v733
      %v1078 = vpack.c.b16 %v1075, %v1074
      %v1079 = vpack.c.b16 %v1077, %v1076
      %v1083 = vsel %vm675, %v729, 0
      %1085 = vmatpush.bf16.msra.mxu0 0
      %1086 = vmatpush.bf16.msra.mxu0 0
      %1087 = vmatpush.bf16.msra.mxu0 0
      %1088 = vmatpush.bf16.msra.mxu0 0
      %1089 = vmatpush.bf16.msra.mxu0 0
      %1090 = vmatpush.bf16.msra.mxu0 0
      %1091 = vmatpush.bf16.msra.mxu0 %v1079
      %1092 = vmatpush.bf16.msra.mxu0 %v1078
      %1093 = vmatmul.bf16.gmra.mxu0 %v1083
      %v1094 = vpop.f32.mrf.mxu0
      %v1095 = vadd.f32 %v1067, %v1094
      %v1096 = vpop.f32.mrf.mxu0
      %1097 = vdwg.mxu0
      %s1098 = scalar_lea.vmem %s2, 128
      %v1099 = vld [vmem:[%s1098] sm:$0xf]
      %v1100 = vld [vmem:[%s1098 + $0x4] sm:$0xf]
      %v1101 = vld [vmem:[%s1098 + $0x8] sm:$0xf]
      %v1102 = vld [vmem:[%s1098 + $0xc] sm:$0xf]
      %v1103 = vld [vmem:[%s1098 + $0x10] sm:$0xf]
      %v1104 = vld [vmem:[%s1098 + $0x14] sm:$0xf]
      %v1105 = vld [vmem:[%s1098 + $0x18] sm:$0xf]
      %v1106 = vld [vmem:[%s1098 + $0x1c] sm:$0xf]
      %v1107 = vld [vmem:[%s1098 + $0x20] sm:$0xf]
      %v1108 = vld [vmem:[%s1098 + $0x24] sm:$0xf]
      %v1109 = vld [vmem:[%s1098 + $0x28] sm:$0xf]
      %v1110 = vld [vmem:[%s1098 + $0x2c] sm:$0xf]
      %v1111 = vld [vmem:[%s1098 + $0x30] sm:$0xf]
      %v1112 = vld [vmem:[%s1098 + $0x34] sm:$0xf]
      %v1113 = vld [vmem:[%s1098 + $0x38] sm:$0xf]
      %v1114 = vld [vmem:[%s1098 + $0x3c] sm:$0xf]
      %s1115 = scalar_lea.vmem %s5, 2
      %v1116 = vld [vmem:[%s1115] sm:$0x1]
      %v1118 = vperm.slane %v1116, 0
      %v1136 = vunpack.c.l.b16 %v1099
      %v1137 = vunpack.c.l.b16 %v1100
      %v1138 = vunpack.c.l.b16 %v1101
      %v1139 = vunpack.c.l.b16 %v1102
      %v1140 = vunpack.c.l.b16 %v1103
      %v1141 = vunpack.c.l.b16 %v1104
      %v1142 = vunpack.c.l.b16 %v1105
      %v1143 = vunpack.c.l.b16 %v1106
      %v1144 = vunpack.c.l.b16 %v1107
      %v1145 = vunpack.c.l.b16 %v1108
      %v1146 = vunpack.c.l.b16 %v1109
      %v1147 = vunpack.c.l.b16 %v1110
      %v1148 = vunpack.c.l.b16 %v1111
      %v1149 = vunpack.c.l.b16 %v1112
      %v1150 = vunpack.c.l.b16 %v1113
      %v1151 = vunpack.c.l.b16 %v1114
      %v1152 = vpack.c.b16 %v1137, %v1136
      %v1153 = vpack.c.b16 %v1139, %v1138
      %v1154 = vpack.c.b16 %v1141, %v1140
      %v1155 = vpack.c.b16 %v1143, %v1142
      %v1156 = vpack.c.b16 %v1145, %v1144
      %v1157 = vpack.c.b16 %v1147, %v1146
      %v1158 = vpack.c.b16 %v1149, %v1148
      %v1159 = vpack.c.b16 %v1151, %v1150
      %1168 = vmatpush.bf16.msra.mxu0 %v1159
      %1169 = vmatpush.bf16.msra.mxu0 %v1158
      %1170 = vmatpush.bf16.msra.mxu0 %v1157
      %1171 = vmatpush.bf16.msra.mxu0 %v1156
      %1172 = vmatpush.bf16.msra.mxu0 %v1155
      %1173 = vmatpush.bf16.msra.mxu0 %v1154
      %1174 = vmatpush.bf16.msra.mxu0 %v1153
      %1175 = vmatpush.bf16.msra.mxu0 %v1152
      %1176 = vmatmul.bf16.gmra.mxu0 %v424
      %v1177 = vpop.f32.mrf.mxu0
      %v1178 = vadd.f32 %v1118, %v1177
      %v1179 = vpop.f32.mrf.mxu0
      %1180 = vdwg.mxu0
      %s1181 = scalar_lea.vmem %s3, 128
      %v1182 = vld [vmem:[%s1181] sm:$0xf]
      %v1183 = vld [vmem:[%s1181 + $0x4] sm:$0xf]
      %v1184 = vld [vmem:[%s1181 + $0x8] sm:$0xf]
      %v1185 = vld [vmem:[%s1181 + $0xc] sm:$0xf]
      %v1186 = vld [vmem:[%s1181 + $0x10] sm:$0xf]
      %v1187 = vld [vmem:[%s1181 + $0x14] sm:$0xf]
      %v1188 = vld [vmem:[%s1181 + $0x18] sm:$0xf]
      %v1189 = vld [vmem:[%s1181 + $0x1c] sm:$0xf]
      %v1190 = vld [vmem:[%s1181 + $0x20] sm:$0xf]
      %v1191 = vld [vmem:[%s1181 + $0x24] sm:$0xf]
      %v1192 = vld [vmem:[%s1181 + $0x28] sm:$0xf]
      %v1193 = vld [vmem:[%s1181 + $0x2c] sm:$0xf]
      %v1194 = vld [vmem:[%s1181 + $0x30] sm:$0xf]
      %v1195 = vld [vmem:[%s1181 + $0x34] sm:$0xf]
      %v1196 = vld [vmem:[%s1181 + $0x38] sm:$0xf]
      %v1197 = vld [vmem:[%s1181 + $0x3c] sm:$0xf]
      %s1198 = scalar_lea.vmem %s6, 2
      %v1199 = vld [vmem:[%s1198] sm:$0x1]
      %v1201 = vperm.slane %v1199, 0
      %v1219 = vunpack.c.l.b16 %v1182
      %v1220 = vunpack.c.l.b16 %v1183
      %v1221 = vunpack.c.l.b16 %v1184
      %v1222 = vunpack.c.l.b16 %v1185
      %v1223 = vunpack.c.l.b16 %v1186
      %v1224 = vunpack.c.l.b16 %v1187
      %v1225 = vunpack.c.l.b16 %v1188
      %v1226 = vunpack.c.l.b16 %v1189
      %v1227 = vunpack.c.l.b16 %v1190
      %v1228 = vunpack.c.l.b16 %v1191
      %v1229 = vunpack.c.l.b16 %v1192
      %v1230 = vunpack.c.l.b16 %v1193
      %v1231 = vunpack.c.l.b16 %v1194
      %v1232 = vunpack.c.l.b16 %v1195
      %v1233 = vunpack.c.l.b16 %v1196
      %v1234 = vunpack.c.l.b16 %v1197
      %v1235 = vpack.c.b16 %v1220, %v1219
      %v1236 = vpack.c.b16 %v1222, %v1221
      %v1237 = vpack.c.b16 %v1224, %v1223
      %v1238 = vpack.c.b16 %v1226, %v1225
      %v1239 = vpack.c.b16 %v1228, %v1227
      %v1240 = vpack.c.b16 %v1230, %v1229
      %v1241 = vpack.c.b16 %v1232, %v1231
      %v1242 = vpack.c.b16 %v1234, %v1233
      %1251 = vmatpush.bf16.msra.mxu0 %v1242
      %1252 = vmatpush.bf16.msra.mxu0 %v1241
      %1253 = vmatpush.bf16.msra.mxu0 %v1240
      %1254 = vmatpush.bf16.msra.mxu0 %v1239
      %1255 = vmatpush.bf16.msra.mxu0 %v1238
      %1256 = vmatpush.bf16.msra.mxu0 %v1237
      %1257 = vmatpush.bf16.msra.mxu0 %v1236
      %1258 = vmatpush.bf16.msra.mxu0 %v1235
      %1259 = vmatmul.bf16.gmra.mxu0 %v424
      %v1260 = vpop.f32.mrf.mxu0
      %v1261 = vadd.f32 %v1201, %v1260
      %v1262 = vpop.f32.mrf.mxu0
      %1263 = vdwg.mxu0
      %s1264 = scalar_lea.vmem %s4, 128
      %v1265 = vld [vmem:[%s1264] sm:$0xf]
      %v1266 = vld [vmem:[%s1264 + $0x4] sm:$0xf]
      %v1267 = vld [vmem:[%s1264 + $0x8] sm:$0xf]
      %v1268 = vld [vmem:[%s1264 + $0xc] sm:$0xf]
      %v1269 = vld [vmem:[%s1264 + $0x10] sm:$0xf]
      %v1270 = vld [vmem:[%s1264 + $0x14] sm:$0xf]
      %v1271 = vld [vmem:[%s1264 + $0x18] sm:$0xf]
      %v1272 = vld [vmem:[%s1264 + $0x1c] sm:$0xf]
      %v1273 = vld [vmem:[%s1264 + $0x20] sm:$0xf]
      %v1274 = vld [vmem:[%s1264 + $0x24] sm:$0xf]
      %v1275 = vld [vmem:[%s1264 + $0x28] sm:$0xf]
      %v1276 = vld [vmem:[%s1264 + $0x2c] sm:$0xf]
      %v1277 = vld [vmem:[%s1264 + $0x30] sm:$0xf]
      %v1278 = vld [vmem:[%s1264 + $0x34] sm:$0xf]
      %v1279 = vld [vmem:[%s1264 + $0x38] sm:$0xf]
      %v1280 = vld [vmem:[%s1264 + $0x3c] sm:$0xf]
      %s1281 = scalar_lea.vmem %s7, 2
      %v1282 = vld [vmem:[%s1281] sm:$0x1]
      %v1284 = vperm.slane %v1282, 0
      %v1302 = vunpack.c.l.b16 %v1265
      %v1303 = vunpack.c.l.b16 %v1266
      %v1304 = vunpack.c.l.b16 %v1267
      %v1305 = vunpack.c.l.b16 %v1268
      %v1306 = vunpack.c.l.b16 %v1269
      %v1307 = vunpack.c.l.b16 %v1270
      %v1308 = vunpack.c.l.b16 %v1271
      %v1309 = vunpack.c.l.b16 %v1272
      %v1310 = vunpack.c.l.b16 %v1273
      %v1311 = vunpack.c.l.b16 %v1274
      %v1312 = vunpack.c.l.b16 %v1275
      %v1313 = vunpack.c.l.b16 %v1276
      %v1314 = vunpack.c.l.b16 %v1277
      %v1315 = vunpack.c.l.b16 %v1278
      %v1316 = vunpack.c.l.b16 %v1279
      %v1317 = vunpack.c.l.b16 %v1280
      %v1318 = vpack.c.b16 %v1303, %v1302
      %v1319 = vpack.c.b16 %v1305, %v1304
      %v1320 = vpack.c.b16 %v1307, %v1306
      %v1321 = vpack.c.b16 %v1309, %v1308
      %v1322 = vpack.c.b16 %v1311, %v1310
      %v1323 = vpack.c.b16 %v1313, %v1312
      %v1324 = vpack.c.b16 %v1315, %v1314
      %v1325 = vpack.c.b16 %v1317, %v1316
      %1334 = vmatpush.bf16.msra.mxu0 %v1325
      %1335 = vmatpush.bf16.msra.mxu0 %v1324
      %1336 = vmatpush.bf16.msra.mxu0 %v1323
      %1337 = vmatpush.bf16.msra.mxu0 %v1322
      %1338 = vmatpush.bf16.msra.mxu0 %v1321
      %1339 = vmatpush.bf16.msra.mxu0 %v1320
      %1340 = vmatpush.bf16.msra.mxu0 %v1319
      %1341 = vmatpush.bf16.msra.mxu0 %v1318
      %1342 = vmatmul.bf16.gmra.mxu0 %v424
      %v1343 = vpop.f32.mrf.mxu0
      %v1344 = vadd.f32 %v1284, %v1343
      %v1345 = vpop.f32.mrf.mxu0
      %1346 = vdwg.mxu0
      %v1347 = vpack.c.bf16 %v1178, %v1178
      %v1348 = vpack.c.bf16 %v1261, %v1261
      %v1350 = vsel %vm675, %v1347, 0
      %v1353 = vsel %vm675, %v1348, 0
      %1355 = vmatpush.bf16.xpose.msra.mxu0 0
      %1356 = vmatpush.bf16.xpose.msra.mxu0 0
      %1357 = vmatpush.bf16.xpose.msra.mxu0 0
      %1358 = vmatpush.bf16.xpose.msra.mxu0 0
      %1359 = vmatpush.bf16.xpose.msra.mxu0 0
      %1360 = vmatpush.bf16.xpose.msra.mxu0 0
      %1361 = vmatpush.bf16.xpose.msra.mxu0 0
      %1362 = vmatpush.bf16.xpose.msra.mxu0 %v1353
      %1363 = vmatmul.bf16.gmra.mxu0 %v1350
      %v1364 = vpop.f32.mrf.mxu0
      %v1365 = vadd.f32 %v428, %v1364
      %v1366 = vpop.f32.mrf.mxu0
      %1367 = vdwg.mxu0
      %v1368 = vsel %vm695, %v1365, -inf
      %1369 = vmax.xlane.f32.xlu0 %v1368
      %v1370 = vpop.xlane.xlu0 %1369
      %v1371 = vsub.f32 %v1365, %v1370
      %v1372 = vmul.f32 %v1371, 1.442695
      %v1373 = vpow.pop %v1372
      %v1374 = vsel %vm695, %v1373, 0.0
      %1375 = vadd.xlane.f32.xlu0 %v1374
      %v1376 = vpop.xlane.xlu0 %1375
      %v1377 = vrcp.pop %v1376
      %v1378 = vmul.f32 %v1373, %v1377
      %v1379 = vpack.c.bf16 %v1378, %v1378
      %v1380 = vpack.c.bf16 %v1344, %v1344
      %v1382 = vsel %vm695, %v1379, 0
      %v1385 = vsel %vm712, %v1380, 0
      %1387 = vmatpush.bf16.msra.mxu0 0
      %1388 = vmatpush.bf16.msra.mxu0 0
      %1389 = vmatpush.bf16.msra.mxu0 0
      %1390 = vmatpush.bf16.msra.mxu0 0
      %1391 = vmatpush.bf16.msra.mxu0 0
      %1392 = vmatpush.bf16.msra.mxu0 0
      %1393 = vmatpush.bf16.msra.mxu0 0
      %1394 = vmatpush.bf16.msra.mxu0 %v1385
      %1395 = vmatmul.bf16.gmra.mxu0 %v1382
      %v1396 = vpop.f32.mrf.mxu0
      %v1397 = vadd.f32 0.0, %v1396
      %v1398 = vpop.f32.mrf.mxu0
      %1399 = vdwg.mxu0
      %v1400 = vpack.c.bf16 %v1397, %v1397
      %s1401 = scalar_lea.vmem %s8, 32
      %v1402 = vld [vmem:[%s1401] sm:$0xf]
      %v1403 = vld [vmem:[%s1401 + $0x4] sm:$0xf]
      %v1404 = vld [vmem:[%s1401 + $0x8] sm:$0xf]
      %v1405 = vld [vmem:[%s1401 + $0xc] sm:$0xf]
      %v1410 = vunpack.c.l.b16 %v1402
      %v1411 = vunpack.c.l.b16 %v1403
      %v1412 = vunpack.c.l.b16 %v1404
      %v1413 = vunpack.c.l.b16 %v1405
      %v1414 = vpack.c.b16 %v1411, %v1410
      %v1415 = vpack.c.b16 %v1413, %v1412
      %v1419 = vsel %vm675, %v1400, 0
      %1421 = vmatpush.bf16.msra.mxu0 0
      %1422 = vmatpush.bf16.msra.mxu0 0
      %1423 = vmatpush.bf16.msra.mxu0 0
      %1424 = vmatpush.bf16.msra.mxu0 0
      %1425 = vmatpush.bf16.msra.mxu0 0
      %1426 = vmatpush.bf16.msra.mxu0 0
      %1427 = vmatpush.bf16.msra.mxu0 %v1415
      %1428 = vmatpush.bf16.msra.mxu0 %v1414
      %1429 = vmatmul.bf16.gmra.mxu0 %v1419
      %v1430 = vpop.f32.mrf.mxu0
      %v1431 = vadd.f32 0.0, %v1430
      %v1432 = vpop.f32.mrf.mxu0
      %1433 = vdwg.mxu0
      %v1434 = vadd.f32 %v1095, %v1431
      %s1435 = scalar_lea.vmem %s2, 192
      %v1436 = vld [vmem:[%s1435] sm:$0xf]
      %v1437 = vld [vmem:[%s1435 + $0x4] sm:$0xf]
      %v1438 = vld [vmem:[%s1435 + $0x8] sm:$0xf]
      %v1439 = vld [vmem:[%s1435 + $0xc] sm:$0xf]
      %v1440 = vld [vmem:[%s1435 + $0x10] sm:$0xf]
      %v1441 = vld [vmem:[%s1435 + $0x14] sm:$0xf]
      %v1442 = vld [vmem:[%s1435 + $0x18] sm:$0xf]
      %v1443 = vld [vmem:[%s1435 + $0x1c] sm:$0xf]
      %v1444 = vld [vmem:[%s1435 + $0x20] sm:$0xf]
      %v1445 = vld [vmem:[%s1435 + $0x24] sm:$0xf]
      %v1446 = vld [vmem:[%s1435 + $0x28] sm:$0xf]
      %v1447 = vld [vmem:[%s1435 + $0x2c] sm:$0xf]
      %v1448 = vld [vmem:[%s1435 + $0x30] sm:$0xf]
      %v1449 = vld [vmem:[%s1435 + $0x34] sm:$0xf]
      %v1450 = vld [vmem:[%s1435 + $0x38] sm:$0xf]
      %v1451 = vld [vmem:[%s1435 + $0x3c] sm:$0xf]
      %s1452 = scalar_lea.vmem %s5, 3
      %v1453 = vld [vmem:[%s1452] sm:$0x1]
      %v1455 = vperm.slane %v1453, 0
      %v1473 = vunpack.c.l.b16 %v1436
      %v1474 = vunpack.c.l.b16 %v1437
      %v1475 = vunpack.c.l.b16 %v1438
      %v1476 = vunpack.c.l.b16 %v1439
      %v1477 = vunpack.c.l.b16 %v1440
      %v1478 = vunpack.c.l.b16 %v1441
      %v1479 = vunpack.c.l.b16 %v1442
      %v1480 = vunpack.c.l.b16 %v1443
      %v1481 = vunpack.c.l.b16 %v1444
      %v1482 = vunpack.c.l.b16 %v1445
      %v1483 = vunpack.c.l.b16 %v1446
      %v1484 = vunpack.c.l.b16 %v1447
      %v1485 = vunpack.c.l.b16 %v1448
      %v1486 = vunpack.c.l.b16 %v1449
      %v1487 = vunpack.c.l.b16 %v1450
      %v1488 = vunpack.c.l.b16 %v1451
      %v1489 = vpack.c.b16 %v1474, %v1473
      %v1490 = vpack.c.b16 %v1476, %v1475
      %v1491 = vpack.c.b16 %v1478, %v1477
      %v1492 = vpack.c.b16 %v1480, %v1479
      %v1493 = vpack.c.b16 %v1482, %v1481
      %v1494 = vpack.c.b16 %v1484, %v1483
      %v1495 = vpack.c.b16 %v1486, %v1485
      %v1496 = vpack.c.b16 %v1488, %v1487
      %1505 = vmatpush.bf16.msra.mxu0 %v1496
      %1506 = vmatpush.bf16.msra.mxu0 %v1495
      %1507 = vmatpush.bf16.msra.mxu0 %v1494
      %1508 = vmatpush.bf16.msra.mxu0 %v1493
      %1509 = vmatpush.bf16.msra.mxu0 %v1492
      %1510 = vmatpush.bf16.msra.mxu0 %v1491
      %1511 = vmatpush.bf16.msra.mxu0 %v1490
      %1512 = vmatpush.bf16.msra.mxu0 %v1489
      %1513 = vmatmul.bf16.gmra.mxu0 %v424
      %v1514 = vpop.f32.mrf.mxu0
      %v1515 = vadd.f32 %v1455, %v1514
      %v1516 = vpop.f32.mrf.mxu0
      %1517 = vdwg.mxu0
      %s1518 = scalar_lea.vmem %s3, 192
      %v1519 = vld [vmem:[%s1518] sm:$0xf]
      %v1520 = vld [vmem:[%s1518 + $0x4] sm:$0xf]
      %v1521 = vld [vmem:[%s1518 + $0x8] sm:$0xf]
      %v1522 = vld [vmem:[%s1518 + $0xc] sm:$0xf]
      %v1523 = vld [vmem:[%s1518 + $0x10] sm:$0xf]
      %v1524 = vld [vmem:[%s1518 + $0x14] sm:$0xf]
      %v1525 = vld [vmem:[%s1518 + $0x18] sm:$0xf]
      %v1526 = vld [vmem:[%s1518 + $0x1c] sm:$0xf]
      %v1527 = vld [vmem:[%s1518 + $0x20] sm:$0xf]
      %v1528 = vld [vmem:[%s1518 + $0x24] sm:$0xf]
      %v1529 = vld [vmem:[%s1518 + $0x28] sm:$0xf]
      %v1530 = vld [vmem:[%s1518 + $0x2c] sm:$0xf]
      %v1531 = vld [vmem:[%s1518 + $0x30] sm:$0xf]
      %v1532 = vld [vmem:[%s1518 + $0x34] sm:$0xf]
      %v1533 = vld [vmem:[%s1518 + $0x38] sm:$0xf]
      %v1534 = vld [vmem:[%s1518 + $0x3c] sm:$0xf]
      %s1535 = scalar_lea.vmem %s6, 3
      %v1536 = vld [vmem:[%s1535] sm:$0x1]
      %v1538 = vperm.slane %v1536, 0
      %v1556 = vunpack.c.l.b16 %v1519
      %v1557 = vunpack.c.l.b16 %v1520
      %v1558 = vunpack.c.l.b16 %v1521
      %v1559 = vunpack.c.l.b16 %v1522
      %v1560 = vunpack.c.l.b16 %v1523
      %v1561 = vunpack.c.l.b16 %v1524
      %v1562 = vunpack.c.l.b16 %v1525
      %v1563 = vunpack.c.l.b16 %v1526
      %v1564 = vunpack.c.l.b16 %v1527
      %v1565 = vunpack.c.l.b16 %v1528
      %v1566 = vunpack.c.l.b16 %v1529
      %v1567 = vunpack.c.l.b16 %v1530
      %v1568 = vunpack.c.l.b16 %v1531
      %v1569 = vunpack.c.l.b16 %v1532
      %v1570 = vunpack.c.l.b16 %v1533
      %v1571 = vunpack.c.l.b16 %v1534
      %v1572 = vpack.c.b16 %v1557, %v1556
      %v1573 = vpack.c.b16 %v1559, %v1558
      %v1574 = vpack.c.b16 %v1561, %v1560
      %v1575 = vpack.c.b16 %v1563, %v1562
      %v1576 = vpack.c.b16 %v1565, %v1564
      %v1577 = vpack.c.b16 %v1567, %v1566
      %v1578 = vpack.c.b16 %v1569, %v1568
      %v1579 = vpack.c.b16 %v1571, %v1570
      %1588 = vmatpush.bf16.msra.mxu0 %v1579
      %1589 = vmatpush.bf16.msra.mxu0 %v1578
      %1590 = vmatpush.bf16.msra.mxu0 %v1577
      %1591 = vmatpush.bf16.msra.mxu0 %v1576
      %1592 = vmatpush.bf16.msra.mxu0 %v1575
      %1593 = vmatpush.bf16.msra.mxu0 %v1574
      %1594 = vmatpush.bf16.msra.mxu0 %v1573
      %1595 = vmatpush.bf16.msra.mxu0 %v1572
      %1596 = vmatmul.bf16.gmra.mxu0 %v424
      %v1597 = vpop.f32.mrf.mxu0
      %v1598 = vadd.f32 %v1538, %v1597
      %v1599 = vpop.f32.mrf.mxu0
      %1600 = vdwg.mxu0
      %s1601 = scalar_lea.vmem %s4, 192
      %v1602 = vld [vmem:[%s1601] sm:$0xf]
      %v1603 = vld [vmem:[%s1601 + $0x4] sm:$0xf]
      %v1604 = vld [vmem:[%s1601 + $0x8] sm:$0xf]
      %v1605 = vld [vmem:[%s1601 + $0xc] sm:$0xf]
      %v1606 = vld [vmem:[%s1601 + $0x10] sm:$0xf]
      %v1607 = vld [vmem:[%s1601 + $0x14] sm:$0xf]
      %v1608 = vld [vmem:[%s1601 + $0x18] sm:$0xf]
      %v1609 = vld [vmem:[%s1601 + $0x1c] sm:$0xf]
      %v1610 = vld [vmem:[%s1601 + $0x20] sm:$0xf]
      %v1611 = vld [vmem:[%s1601 + $0x24] sm:$0xf]
      %v1612 = vld [vmem:[%s1601 + $0x28] sm:$0xf]
      %v1613 = vld [vmem:[%s1601 + $0x2c] sm:$0xf]
      %v1614 = vld [vmem:[%s1601 + $0x30] sm:$0xf]
      %v1615 = vld [vmem:[%s1601 + $0x34] sm:$0xf]
      %v1616 = vld [vmem:[%s1601 + $0x38] sm:$0xf]
      %v1617 = vld [vmem:[%s1601 + $0x3c] sm:$0xf]
      %s1618 = scalar_lea.vmem %s7, 3
      %v1619 = vld [vmem:[%s1618] sm:$0x1]
      %v1621 = vperm.slane %v1619, 0
      %v1639 = vunpack.c.l.b16 %v1602
      %v1640 = vunpack.c.l.b16 %v1603
      %v1641 = vunpack.c.l.b16 %v1604
      %v1642 = vunpack.c.l.b16 %v1605
      %v1643 = vunpack.c.l.b16 %v1606
      %v1644 = vunpack.c.l.b16 %v1607
      %v1645 = vunpack.c.l.b16 %v1608
      %v1646 = vunpack.c.l.b16 %v1609
      %v1647 = vunpack.c.l.b16 %v1610
      %v1648 = vunpack.c.l.b16 %v1611
      %v1649 = vunpack.c.l.b16 %v1612
      %v1650 = vunpack.c.l.b16 %v1613
      %v1651 = vunpack.c.l.b16 %v1614
      %v1652 = vunpack.c.l.b16 %v1615
      %v1653 = vunpack.c.l.b16 %v1616
      %v1654 = vunpack.c.l.b16 %v1617
      %v1655 = vpack.c.b16 %v1640, %v1639
      %v1656 = vpack.c.b16 %v1642, %v1641
      %v1657 = vpack.c.b16 %v1644, %v1643
      %v1658 = vpack.c.b16 %v1646, %v1645
      %v1659 = vpack.c.b16 %v1648, %v1647
      %v1660 = vpack.c.b16 %v1650, %v1649
      %v1661 = vpack.c.b16 %v1652, %v1651
      %v1662 = vpack.c.b16 %v1654, %v1653
      %1671 = vmatpush.bf16.msra.mxu0 %v1662
      %1672 = vmatpush.bf16.msra.mxu0 %v1661
      %1673 = vmatpush.bf16.msra.mxu0 %v1660
      %1674 = vmatpush.bf16.msra.mxu0 %v1659
      %1675 = vmatpush.bf16.msra.mxu0 %v1658
      %1676 = vmatpush.bf16.msra.mxu0 %v1657
      %1677 = vmatpush.bf16.msra.mxu0 %v1656
      %1678 = vmatpush.bf16.msra.mxu0 %v1655
      %1679 = vmatmul.bf16.gmra.mxu0 %v424
      %v1680 = vpop.f32.mrf.mxu0
      %v1681 = vadd.f32 %v1621, %v1680
      %v1682 = vpop.f32.mrf.mxu0
      %1683 = vdwg.mxu0
      %v1684 = vpack.c.bf16 %v1515, %v1515
      %v1685 = vpack.c.bf16 %v1598, %v1598
      %v1687 = vsel %vm675, %v1684, 0
      %v1690 = vsel %vm675, %v1685, 0
      %1692 = vmatpush.bf16.xpose.msra.mxu0 0
      %1693 = vmatpush.bf16.xpose.msra.mxu0 0
      %1694 = vmatpush.bf16.xpose.msra.mxu0 0
      %1695 = vmatpush.bf16.xpose.msra.mxu0 0
      %1696 = vmatpush.bf16.xpose.msra.mxu0 0
      %1697 = vmatpush.bf16.xpose.msra.mxu0 0
      %1698 = vmatpush.bf16.xpose.msra.mxu0 0
      %1699 = vmatpush.bf16.xpose.msra.mxu0 %v1690
      %1700 = vmatmul.bf16.gmra.mxu0 %v1687
      %v1701 = vpop.f32.mrf.mxu0
      %v1702 = vadd.f32 %v428, %v1701
      %v1703 = vpop.f32.mrf.mxu0
      %1704 = vdwg.mxu0
      %v1705 = vsel %vm695, %v1702, -inf
      %1706 = vmax.xlane.f32.xlu0 %v1705
      %v1707 = vpop.xlane.xlu0 %1706
      %v1708 = vsub.f32 %v1702, %v1707
      %v1709 = vmul.f32 %v1708, 1.442695
      %v1710 = vpow.pop %v1709
      %v1711 = vsel %vm695, %v1710, 0.0
      %1712 = vadd.xlane.f32.xlu0 %v1711
      %v1713 = vpop.xlane.xlu0 %1712
      %v1714 = vrcp.pop %v1713
      %v1715 = vmul.f32 %v1710, %v1714
      %v1716 = vpack.c.bf16 %v1715, %v1715
      %v1717 = vpack.c.bf16 %v1681, %v1681
      %v1719 = vsel %vm695, %v1716, 0
      %v1722 = vsel %vm712, %v1717, 0
      %1724 = vmatpush.bf16.msra.mxu0 0
      %1725 = vmatpush.bf16.msra.mxu0 0
      %1726 = vmatpush.bf16.msra.mxu0 0
      %1727 = vmatpush.bf16.msra.mxu0 0
      %1728 = vmatpush.bf16.msra.mxu0 0
      %1729 = vmatpush.bf16.msra.mxu0 0
      %1730 = vmatpush.bf16.msra.mxu0 0
      %1731 = vmatpush.bf16.msra.mxu0 %v1722
      %1732 = vmatmul.bf16.gmra.mxu0 %v1719
      %v1733 = vpop.f32.mrf.mxu0
      %v1734 = vadd.f32 0.0, %v1733
      %v1735 = vpop.f32.mrf.mxu0
      %1736 = vdwg.mxu0
      %v1737 = vpack.c.bf16 %v1734, %v1734
      %s1738 = scalar_lea.vmem %s8, 48
      %v1739 = vld [vmem:[%s1738] sm:$0xf]
      %v1740 = vld [vmem:[%s1738 + $0x4] sm:$0xf]
      %v1741 = vld [vmem:[%s1738 + $0x8] sm:$0xf]
      %v1742 = vld [vmem:[%s1738 + $0xc] sm:$0xf]
      %v1747 = vunpack.c.l.b16 %v1739
      %v1748 = vunpack.c.l.b16 %v1740
      %v1749 = vunpack.c.l.b16 %v1741
      %v1750 = vunpack.c.l.b16 %v1742
      %v1751 = vpack.c.b16 %v1748, %v1747
      %v1752 = vpack.c.b16 %v1750, %v1749
      %v1756 = vsel %vm675, %v1737, 0
      %1758 = vmatpush.bf16.msra.mxu0 0
      %1759 = vmatpush.bf16.msra.mxu0 0
      %1760 = vmatpush.bf16.msra.mxu0 0
      %1761 = vmatpush.bf16.msra.mxu0 0
      %1762 = vmatpush.bf16.msra.mxu0 0
      %1763 = vmatpush.bf16.msra.mxu0 0
      %1764 = vmatpush.bf16.msra.mxu0 %v1752
      %1765 = vmatpush.bf16.msra.mxu0 %v1751
      %1766 = vmatmul.bf16.gmra.mxu0 %v1756
      %v1767 = vpop.f32.mrf.mxu0
      %v1768 = vadd.f32 0.0, %v1767
      %v1769 = vpop.f32.mrf.mxu0
      %1770 = vdwg.mxu0
      %v1771 = vadd.f32 %v1434, %v1768
      %v1772 = vld [vmem:[%s9] sm:$0x1]
      %v1774 = vperm.slane %v1772, 0
      %v1776 = vadd.f32 %v1771, %v1774
      %v1777 = vadd.f32 %v1776, %v425
      %1778 = vadd.xlane.f32.xlu0 %v1777
      %v1779 = vpop.xlane.xlu0 %1778
      %v1780 = vrcp.pop 128.0
      %v1781 = vmul.f32 128.0, %v1780
      %v1782 = vsub.f32 1.0, %v1781
      %v1783 = vmul.f32 %v1780, %v1782
      %v1784 = vadd.f32 %v1780, %v1783
      %vm1785 = vweird.f32 %v1780
      %v1786 = vsel %vm1785, %v1780, %v1784
      %v1787 = vmul.f32 %v1779, %v1786
      %v1788 = vsub.f32 %v1777, %v1787
      %v1789 = vmul.f32 %v1788, %v1788
      %1790 = vadd.xlane.f32.xlu0 %v1789
      %v1791 = vpop.xlane.xlu0 %1790
      %v1792 = vmul.f32 %v1791, %v1786
      %v1793 = vadd.f32 %v1792, 1e-12
      %v1794 = vrsqrt.pop %v1793
      %v1795 = vmul.f32 %v1794, %v1793
      %v1796 = vmul.f32 %v1795, %v1794
      %v1797 = vmul.f32 0.5, %v1796
      %v1798 = vsub.f32 1.5, %v1797
      %v1799 = vmul.f32 %v1794, %v1798
      %vm1800 = vweird.f32 %v1793
      %vm1801 = vweird.f32 %v1794
      %vm1802 = vmor %vm1800, %vm1801
      %v1803 = vsel %vm1802, %v1794, %v1799
      %v1804 = vmul.f32 %v1788, %v1803
      %v1805 = vld [vmem:[%s10] sm:$0x1]
      %v1807 = vperm.slane %v1805, 0
      %v1809 = vmul.f32 %v1804, %v1807
      %v1810 = vld [vmem:[%s11] sm:$0x1]
      %v1812 = vperm.slane %v1810, 0
      %v1814 = vadd.f32 %v1809, %v1812
      %v1815 = vpack.c.bf16 %v1814, %v1814
      %1816 = vst [vmem:[%s422] sm:$0xf] %v1815
      %p1817 = scmp.lt.s32.totalorder %s23, 1
      %s1818 = scalar_select %p1817, %s23, 1
      %s1819 = smul.addr %s1818, 4
      %s1820 = scalar_lea.vmem %s12, %s1819
      // Predicated region
      $region69: #{sentiment_classifier_forward.7} parent=67 // pred_check
        %p1821 = pneg %p303
      $region70: #{sentiment_classifier_forward.7} parent=67 // pred_check_branch
        %1823 = sbr.rel (%p1821) target = $region72
      $region71: #{sentiment_classifier_forward.7} parent=67 // pred_region
        _
      $region72: #{sentiment_classifier_forward.7} parent=67 // pred_fallthru
        _
    $region68: #{sentiment_classifier_forward.7} parent=5 // pred_fallthru
      _
    %p1824 = scmp.le.s32.totalorder 2, %s18
    // Predicated region
    $region73: #{sentiment_classifier_forward.7} parent=5 // pred_check
      %p1825 = pneg %p1824
    $region74: #{sentiment_classifier_forward.7} parent=5 // pred_check_branch
      %1827 = sbr.rel (%p1825) target = $region76
    $region75: #{sentiment_classifier_forward.7} parent=5 // pred_region
      %s1828 = ssub.s32 %s18, 2
      // Predicated region
      $region77: #{sentiment_classifier_forward.7} parent=75 // pred_check
        %p1829 = pneg %p309
      $region78: #{sentiment_classifier_forward.7} parent=75 // pred_check_branch
        %1831 = sbr.rel (%p1829) target = $region80
      $region79: #{sentiment_classifier_forward.7} parent=75 // pred_region
        %p1832 = scmp.lt.s32.totalorder %s24, 1
        %s1833 = scalar_select %p1832, %s24, 1
        %s1834 = smul.addr %s1833, 4
        %s1835 = scalar_lea.vmem %s12, %s1834
      $region80: #{sentiment_classifier_forward.7} parent=75 // pred_fallthru
        _
    $region76: #{sentiment_classifier_forward.7} parent=5 // pred_fallthru
      _
  $region6: #{sentiment_classifier_forward.7} parent=0 // loop_footer
    %s22 = sadd.s32 1, %s18
  $region7: #{sentiment_classifier_forward.7} parent=0 // loop_footer_branch
    %17 = sbr.rel target = $region3
  $region8: #{sentiment_classifier_forward.7} parent=0 // loop_exit
    _

</llo_original>
